<compile_context>
chip_gen: v6e
topology: v6e:2x2x1
jax: 0.10.0
libtpu: 0.0.40
codegen_flags: <defaults>
</compile_context>

<pallas_src>
import functools

import jax
import jax.numpy as jnp
from jax.experimental import pallas as pl
from jax.experimental.pallas import tpu as pltpu

EPS = 1e-5


def _round_up(a, b):
    return (a + b - 1) // b * b


def _choose_tm(m, c_inp, kcp):
    """Row tile: multiple of 8 sublanes, <= 1024 rows, ~<= 4 MiB of (x + z)
    tile bytes per buffer so double buffering fits the default scoped VMEM."""
    budget_bytes = 4 * 1024 * 1024
    tm = budget_bytes // (4 * (c_inp + kcp))
    tm = max(8, (tm // 8) * 8)
    return int(min(tm, 1024, _round_up(m, 8)))


def _stats_kernel(x_ref, w_ref, s1_ref, s2_ref):
    """Pass 1: per-column sum and sum-of-squares of z = x @ W, accumulated
    across row tiles into resident (1, KCp) output blocks."""

    @pl.when(pl.program_id(0) == 0)
    def _init():
        s1_ref[...] = jnp.zeros_like(s1_ref)
        s2_ref[...] = jnp.zeros_like(s2_ref)

    z = jnp.dot(x_ref[...], w_ref[...], preferred_element_type=jnp.float32)
    # Column sums ride on the (otherwise idle) MXU: ones(1, TM) @ z, instead
    # of a cross-sublane XLU reduction over the tile.
    ones = jnp.ones((1, z.shape[0]), jnp.float32)
    s1_ref[...] += jnp.dot(ones, z, preferred_element_type=jnp.float32)
    s2_ref[...] += jnp.dot(ones, z * z, preferred_element_type=jnp.float32)


def _apply_kernel(x_ref, w_ref, scale_ref, shift_ref, o_ref, *, activation):
    """Pass 2: z = x @ W, out = act(z * scale + shift), lane-dense store."""
    z = jnp.dot(x_ref[...], w_ref[...], preferred_element_type=jnp.float32)
    y = z * scale_ref[...] + shift_ref[...]
    if activation == "relu":
        y = jnp.maximum(y, 0.0)
    else:  # sigmoid
        y = jax.nn.sigmoid(y)
    o_ref[...] = y.astype(o_ref.dtype)


@functools.partial(jax.jit, static_argnames=("stride", "activation"))
def decoder_module(x, weight, bias, gamma, beta, *, stride, activation="relu"):
    """x: (N, C_in, H, W) float32 NCHW -> (N, C_out, H*stride, W*stride)."""
    assert activation in ("relu", "sigmoid")
    N, C_in, H, W = x.shape
    s = stride
    C_out = weight.shape[1]
    K = s * s
    KC = K * C_out
    M = N * H * W

    KCp = max(128, _round_up(KC, 128))        # lane-dense output columns
    C_inp = _round_up(C_in, 8)                # sublane-aligned contraction dim

    # --- glue: NCHW -> flat patch-matmul layout (X is the small side) -------
    x_flat = jnp.transpose(x, (0, 2, 3, 1)).reshape(M, C_in)
    # weight (C_in, C_out, kh, kw) -> columns ordered (kh, kw, c_out), 0-padded
    w_mat = jnp.transpose(weight, (0, 2, 3, 1)).reshape(C_in, KC)
    w_mat = jnp.pad(w_mat, ((0, C_inp - C_in), (0, KCp - KC)))

    TM = _choose_tm(M, C_inp, KCp)
    M_pad = _round_up(M, TM)
    # zero rows/cols contribute nothing to the column sums / sums-of-squares
    x_flat = jnp.pad(x_flat, ((0, M_pad - M), (0, C_inp - C_in)))
    n_tiles = M_pad // TM

    # --- pass 1: streaming batch statistics (sequential accumulator) --------
    s1, s2 = pl.pallas_call(
        _stats_kernel,
        out_shape=(jax.ShapeDtypeStruct((1, KCp), jnp.float32),
                   jax.ShapeDtypeStruct((1, KCp), jnp.float32)),
        grid=(n_tiles,),
        in_specs=[pl.BlockSpec((TM, C_inp), lambda i: (i, 0)),
                  pl.BlockSpec((C_inp, KCp), lambda i: (0, 0))],
        out_specs=(pl.BlockSpec((1, KCp), lambda i: (0, 0)),
                   pl.BlockSpec((1, KCp), lambda i: (0, 0))),
        compiler_params=pltpu.CompilerParams(
            dimension_semantics=("arbitrary",)),
    )(x_flat, w_mat)

    # --- tiny epilogue (XLA): column stats -> per-channel BN scale / shift --
    count = float(M * K)                      # N * H_out * W_out per channel
    s1_c = s1[0, :KC].reshape(K, C_out).sum(axis=0)    # sum of z per channel
    s2_c = s2[0, :KC].reshape(K, C_out).sum(axis=0)    # sum of z^2 per channel
    mean_z = s1_c / count
    var_c = jnp.maximum(s2_c / count - mean_z * mean_z, 0.0)  # biased variance
    inv_c = jax.lax.rsqrt(var_c + EPS)
    scale_c = gamma * inv_c
    # The ConvTranspose2d bias shifts the per-channel mean only, so it cancels
    # exactly in training-mode BatchNorm:  (z + b - (mean_z + b)) == z - mean_z
    del bias
    shift_c = beta - mean_z * scale_c
    scale_cols = jnp.pad(jnp.tile(scale_c, K), (0, KCp - KC)).reshape(1, KCp)
    shift_cols = jnp.pad(jnp.tile(shift_c, K), (0, KCp - KC)).reshape(1, KCp)

    # --- pass 2: fused conv-transpose matmul + BN affine + activation -------
    y = pl.pallas_call(
        functools.partial(_apply_kernel, activation=activation),
        out_shape=jax.ShapeDtypeStruct((M_pad, KCp), jnp.float32),
        grid=(n_tiles,),
        in_specs=[pl.BlockSpec((TM, C_inp), lambda i: (i, 0)),
                  pl.BlockSpec((C_inp, KCp), lambda i: (0, 0)),
                  pl.BlockSpec((1, KCp), lambda i: (0, 0)),
                  pl.BlockSpec((1, KCp), lambda i: (0, 0))],
        out_specs=pl.BlockSpec((TM, KCp), lambda i: (i, 0)),
        compiler_params=pltpu.CompilerParams(
            dimension_semantics=("parallel",)),   # megacore-sharded on v7x
    )(x_flat, w_mat, scale_cols, shift_cols)

    # --- glue: flat layout -> NCHW pixel-shuffle output ----------------------
    # TODO(synk): the channel-minor -> channel-major pixel-shuffle relayout is
    # left to XLA (one extra HBM round-trip of the output); writing NCHW tiles
    # directly from the kernel would require an in-kernel relayout.
    y = y[:M, :KC]
    out = y.reshape(N, H, W, s, s, C_out)
    out = jnp.transpose(out, (0, 5, 1, 3, 2, 4))      # (N, C, H, kh, W, kw)
    out = out.reshape(N, C_out, H * s, W * s)
    return out


def _reference(x, weight, bias, gamma, beta, stride, activation="relu"):
    """Pure-JAX reference mirroring PyTorch semantics (training-mode BN)."""
    N, C_in, H, W = x.shape
    s = stride
    C_out = weight.shape[1]
    y = jnp.einsum("nihw,icab->nchawb", x, weight)    # (N, C, H, s, W, s)
    y = y.reshape(N, C_out, H * s, W * s) + bias[None, :, None, None]
    mean = jnp.mean(y, axis=(0, 2, 3), keepdims=True)
    var = jnp.mean((y - mean) ** 2, axis=(0, 2, 3), keepdims=True)
    y = (y - mean) * jax.lax.rsqrt(var + EPS)
    y = y * gamma[None, :, None, None] + beta[None, :, None, None]
    return jnp.maximum(y, 0.0) if activation == "relu" else jax.nn.sigmoid(y)


if __name__ == "__main__":
    # input_channels=4, output_channels=8, stride=2; H=W=30 gives M=1800,
    # which exercises multiple row tiles AND the zero-padded last tile.
    N, C_in, C_out, H, W, S = 2, 4, 8, 30, 30, 2

    key = jax.random.PRNGKey(0)
    kx, kw, kb, kg, kbe = jax.random.split(key, 5)
    x = jax.random.normal(kx, (N, C_in, H, W), dtype=jnp.float32)
    # ConvTranspose2d weight layout: (in_channels, out_channels, kH, kW)
    weight = jax.random.normal(kw, (C_in, C_out, S, S), dtype=jnp.float32) * 0.1
    bias = jax.random.normal(kb, (C_out,), dtype=jnp.float32) * 0.1
    gamma = 1.0 + 0.1 * jax.random.normal(kg, (C_out,), dtype=jnp.float32)
    beta = 0.1 * jax.random.normal(kbe, (C_out,), dtype=jnp.float32)

    ok = True
    for act in ("relu", "sigmoid"):
        out = decoder_module(x, weight, bias, gamma, beta, stride=S,
                             activation=act)
        out = jax.block_until_ready(out)
        ref = _reference(x, weight, bias, gamma, beta, S, activation=act)
        ok &= out.shape == (N, C_out, H * S, W * S)
        ok &= bool(jnp.allclose(out, ref, atol=1e-3, rtol=1e-3))

    assert ok, "mismatch vs reference"
    print("KERNEL_OK")
</pallas_src>

<mosaic_0001>
module attributes {stable_mosaic.version = 11 : i64} {
  func.func @_stats_kernel(%arg0: i32, %arg1: memref<1024x8xf32, #tpu.memory_space<vmem>>, %arg2: memref<8x128xf32, #tpu.memory_space<vmem>>, %arg3: memref<1x128xf32, #tpu.memory_space<vmem>>, %arg4: memref<1x128xf32, #tpu.memory_space<vmem>>) attributes {dimension_semantics = [#tpu.dimension_semantics<arbitrary>], iteration_bounds = array<i64: 2>, scalar_prefetch = 0 : i64, scratch_operands = 0 : i64, tpu.core_type = #tpu.core_type<tc>, window_params = [{transform_indices = @transform_0, window_bounds = array<i64: 1024, 8>}, {pipeline_mode = #tpu.pipeline_mode<synchronous>, transform_indices = @transform_1, window_bounds = array<i64: 8, 128>}, {pipeline_mode = #tpu.pipeline_mode<synchronous>, transform_indices = @transform_2, window_bounds = array<i64: 1, 128>}, {pipeline_mode = #tpu.pipeline_mode<synchronous>, transform_indices = @transform_3, window_bounds = array<i64: 1, 128>}]} {
    %c0_i32 = arith.constant 0 : i32
    %0 = arith.cmpi eq, %arg0, %c0_i32 : i32
    %1 = arith.extui %0 : i1 to i32
    %c0_i32_0 = arith.constant 0 : i32
    %2 = arith.cmpi ne, %1, %c0_i32_0 : i32
    scf.if %2 {
      %cst_15 = arith.constant 0.000000e+00 : f32
      %16 = vector.broadcast %cst_15 : f32 to vector<1x128xf32>
      %c0_16 = arith.constant 0 : index
      %c0_17 = arith.constant 0 : index
      %17 = vector.load %arg3[%c0_16, %c0_17] : memref<1x128xf32, #tpu.memory_space<vmem>>, vector<1x128xf32>
      tpu.vector_store %arg3[%c0_16, %c0_17], %16 {strides = array<i32>} : memref<1x128xf32, #tpu.memory_space<vmem>>, vector<1x128xf32>,
      %cst_18 = arith.constant 0.000000e+00 : f32
      %18 = vector.broadcast %cst_18 : f32 to vector<1x128xf32>
      %c0_19 = arith.constant 0 : index
      %c0_20 = arith.constant 0 : index
      %19 = vector.load %arg4[%c0_19, %c0_20] : memref<1x128xf32, #tpu.memory_space<vmem>>, vector<1x128xf32>
      tpu.vector_store %arg4[%c0_19, %c0_20], %18 {strides = array<i32>} : memref<1x128xf32, #tpu.memory_space<vmem>>, vector<1x128xf32>,
    } else {
    }
    %c0 = arith.constant 0 : index
    %c0_1 = arith.constant 0 : index
    %3 = vector.load %arg1[%c0, %c0_1] : memref<1024x8xf32, #tpu.memory_space<vmem>>, vector<1024x8xf32>
    %c0_2 = arith.constant 0 : index
    %c0_3 = arith.constant 0 : index
    %4 = vector.load %arg2[%c0_2, %c0_3] : memref<8x128xf32, #tpu.memory_space<vmem>>, vector<8x128xf32>
    %cst = arith.constant dense<0.000000e+00> : vector<1024x128xf32>
    %5 = tpu.matmul %3, %4, %cst {dimension_numbers = #tpu.dot_dimension_numbers<[1], [0], [0], [1], [0, 0, 1, 1], [], []>} : vector<1024x8xf32>, vector<8x128xf32>, vector<1024x128xf32> -> vector<1024x128xf32>
    %cst_4 = arith.constant 1.000000e+00 : f32
    %6 = vector.broadcast %cst_4 : f32 to vector<1x1024xf32>
    %c0_5 = arith.constant 0 : index
    %c0_6 = arith.constant 0 : index
    %7 = vector.load %arg3[%c0_5, %c0_6] : memref<1x128xf32, #tpu.memory_space<vmem>>, vector<1x128xf32>
    %cst_7 = arith.constant dense<0.000000e+00> : vector<1x128xf32>
    %8 = tpu.matmul %6, %5, %cst_7 {dimension_numbers = #tpu.dot_dimension_numbers<[1], [0], [0], [1], [0, 0, 1, 1], [], []>} : vector<1x1024xf32>, vector<1024x128xf32>, vector<1x128xf32> -> vector<1x128xf32>
    %9 = arith.addf %7, %8 : vector<1x128xf32>
    %c0_8 = arith.constant 0 : index
    %c0_9 = arith.constant 0 : index
    %10 = vector.load %arg3[%c0_8, %c0_9] : memref<1x128xf32, #tpu.memory_space<vmem>>, vector<1x128xf32>
    tpu.vector_store %arg3[%c0_8, %c0_9], %9 {strides = array<i32>} : memref<1x128xf32, #tpu.memory_space<vmem>>, vector<1x128xf32>,
    %c0_10 = arith.constant 0 : index
    %c0_11 = arith.constant 0 : index
    %11 = vector.load %arg4[%c0_10, %c0_11] : memref<1x128xf32, #tpu.memory_space<vmem>>, vector<1x128xf32>
    %12 = arith.mulf %5, %5 : vector<1024x128xf32>
    %cst_12 = arith.constant dense<0.000000e+00> : vector<1x128xf32>
    %13 = tpu.matmul %6, %12, %cst_12 {dimension_numbers = #tpu.dot_dimension_numbers<[1], [0], [0], [1], [0, 0, 1, 1], [], []>} : vector<1x1024xf32>, vector<1024x128xf32>, vector<1x128xf32> -> vector<1x128xf32>
    %14 = arith.addf %11, %13 : vector<1x128xf32>
    %c0_13 = arith.constant 0 : index
    %c0_14 = arith.constant 0 : index
    %15 = vector.load %arg4[%c0_13, %c0_14] : memref<1x128xf32, #tpu.memory_space<vmem>>, vector<1x128xf32>
    tpu.vector_store %arg4[%c0_13, %c0_14], %14 {strides = array<i32>} : memref<1x128xf32, #tpu.memory_space<vmem>>, vector<1x128xf32>,
    return
  }
  func.func @transform_0(%arg0: i32) -> (i32, i32) {
    %c0_i32 = arith.constant 0 : i32
    %c0_i32_0 = arith.constant 0 : i32
    return %arg0, %c0_i32 : i32, i32
  }
  func.func @transform_1(%arg0: i32) -> (i32, i32) {
    %c0_i32 = arith.constant 0 : i32
    %c0_i32_0 = arith.constant 0 : i32
    %c0_i32_1 = arith.constant 0 : i32
    return %c0_i32, %c0_i32_0 : i32, i32
  }
  func.func @transform_2(%arg0: i32) -> (i32, i32) {
    %c0_i32 = arith.constant 0 : i32
    %c0_i32_0 = arith.constant 0 : i32
    %c0_i32_1 = arith.constant 0 : i32
    return %c0_i32, %c0_i32_0 : i32, i32
  }
  func.func @transform_3(%arg0: i32) -> (i32, i32) {
    %c0_i32 = arith.constant 0 : i32
    %c0_i32_0 = arith.constant 0 : i32
    %c0_i32_1 = arith.constant 0 : i32
    return %c0_i32, %c0_i32_0 : i32, i32
  }
}

module attributes {stable_mosaic.version = 11 : i64} {
  func.func @_apply_kernel(%arg0: i32, %arg1: memref<1024x8xf32, #tpu.memory_space<vmem>>, %arg2: memref<8x128xf32, #tpu.memory_space<vmem>>, %arg3: memref<1x128xf32, #tpu.memory_space<vmem>>, %arg4: memref<1x128xf32, #tpu.memory_space<vmem>>, %arg5: memref<1024x128xf32, #tpu.memory_space<vmem>>) attributes {dimension_semantics = [#tpu.dimension_semantics<parallel>], iteration_bounds = array<i64: 2>, scalar_prefetch = 0 : i64, scratch_operands = 0 : i64, tpu.core_type = #tpu.core_type<tc>, window_params = [{transform_indices = @transform_0, window_bounds = array<i64: 1024, 8>}, {pipeline_mode = #tpu.pipeline_mode<synchronous>, transform_indices = @transform_1, window_bounds = array<i64: 8, 128>}, {pipeline_mode = #tpu.pipeline_mode<synchronous>, transform_indices = @transform_2, window_bounds = array<i64: 1, 128>}, {pipeline_mode = #tpu.pipeline_mode<synchronous>, transform_indices = @transform_3, window_bounds = array<i64: 1, 128>}, {transform_indices = @transform_4, window_bounds = array<i64: 1024, 128>}]} {
    %c0 = arith.constant 0 : index
    %c0_0 = arith.constant 0 : index
    %0 = vector.load %arg1[%c0, %c0_0] : memref<1024x8xf32, #tpu.memory_space<vmem>>, vector<1024x8xf32>
    %c0_1 = arith.constant 0 : index
    %c0_2 = arith.constant 0 : index
    %1 = vector.load %arg2[%c0_1, %c0_2] : memref<8x128xf32, #tpu.memory_space<vmem>>, vector<8x128xf32>
    %cst = arith.constant dense<0.000000e+00> : vector<1024x128xf32>
    %2 = tpu.matmul %0, %1, %cst {dimension_numbers = #tpu.dot_dimension_numbers<[1], [0], [0], [1], [0, 0, 1, 1], [], []>} : vector<1024x8xf32>, vector<8x128xf32>, vector<1024x128xf32> -> vector<1024x128xf32>
    %c0_3 = arith.constant 0 : index
    %c0_4 = arith.constant 0 : index
    %3 = vector.load %arg3[%c0_3, %c0_4] : memref<1x128xf32, #tpu.memory_space<vmem>>, vector<1x128xf32>
    %4 = vector.broadcast %3 : vector<1x128xf32> to vector<1024x128xf32>
    %5 = arith.mulf %2, %4 : vector<1024x128xf32>
    %c0_5 = arith.constant 0 : index
    %c0_6 = arith.constant 0 : index
    %6 = vector.load %arg4[%c0_5, %c0_6] : memref<1x128xf32, #tpu.memory_space<vmem>>, vector<1x128xf32>
    %7 = vector.broadcast %6 : vector<1x128xf32> to vector<1024x128xf32>
    %8 = arith.addf %5, %7 : vector<1024x128xf32>
    %cst_7 = arith.constant 0.000000e+00 : f32
    %9 = vector.broadcast %cst_7 : f32 to vector<1024x128xf32>
    %10 = arith.maximumf %8, %9 : vector<1024x128xf32>
    %c0_8 = arith.constant 0 : index
    %c0_9 = arith.constant 0 : index
    %11 = vector.load %arg5[%c0_8, %c0_9] : memref<1024x128xf32, #tpu.memory_space<vmem>>, vector<1024x128xf32>
    tpu.vector_store %arg5[%c0_8, %c0_9], %10 {strides = array<i32>} : memref<1024x128xf32, #tpu.memory_space<vmem>>, vector<1024x128xf32>,
    return
  }
  func.func @transform_0(%arg0: i32) -> (i32, i32) {
    %c0_i32 = arith.constant 0 : i32
    %c0_i32_0 = arith.constant 0 : i32
    return %arg0, %c0_i32 : i32, i32
  }
  func.func @transform_1(%arg0: i32) -> (i32, i32) {
    %c0_i32 = arith.constant 0 : i32
    %c0_i32_0 = arith.constant 0 : i32
    %c0_i32_1 = arith.constant 0 : i32
    return %c0_i32, %c0_i32_0 : i32, i32
  }
  func.func @transform_2(%arg0: i32) -> (i32, i32) {
    %c0_i32 = arith.constant 0 : i32
    %c0_i32_0 = arith.constant 0 : i32
    %c0_i32_1 = arith.constant 0 : i32
    return %c0_i32, %c0_i32_0 : i32, i32
  }
  func.func @transform_3(%arg0: i32) -> (i32, i32) {
    %c0_i32 = arith.constant 0 : i32
    %c0_i32_0 = arith.constant 0 : i32
    %c0_i32_1 = arith.constant 0 : i32
    return %c0_i32, %c0_i32_0 : i32, i32
  }
  func.func @transform_4(%arg0: i32) -> (i32, i32) {
    %c0_i32 = arith.constant 0 : i32
    %c0_i32_0 = arith.constant 0 : i32
    return %arg0, %c0_i32 : i32, i32
  }
}

</mosaic_0001>

<llo_original>
// kernel: squeeze.3
$region0: #{squeeze.3}
  %s0 = inlined_call_operand.vmem [shape: f32[32], index: 0, kind: input, shape index: {}]
  %s1 = inlined_call_operand.vmem [shape: f32[4,8], index: 1, kind: output, shape index: {}]
  $region1: #{squeeze.3} parent=0
    #allocation0 [shape = 'u8[4096]{0}', space=vmem, size = 0x1000, scoped, tag = 'scoped mem for output reshape']
    #allocation1 [shape = 'u8[4096]{0}', space=vmem, size = 0x1000, scoped, tag = 'scoped mem for input reshape']
    %s3 = sshll.u32 1, 1
    %s4 = ssub.s32 %s3, 1
    %v5 = vld [vmem:[%s0] sm:%s4]
    %6 = vst [vmem:[#allocation1] sm:%s4] %v5
    %v7 = vld [vmem:[#allocation1] sm:$0x1]
    %vm8 = vcmask 64512
    %9 = vst.msk [vmem:[#allocation0] sm:$0x1] %vm8, %v7
    %v10 = vld [vmem:[#allocation1] sm:$0x1]
    %11 = vrot.lane.b32.xlu0 %v10, 120
    %v12 = vpop.permute.xlu0 %11
    %vm13 = vcmask 64512
    %s14 = scalar_lea.vmem [#allocation0], 1
    %15 = vst.msk [vmem:[%s14] sm:$0x1] %vm13, %v12
    %v16 = vld [vmem:[#allocation1] sm:$0x1]
    %17 = vrot.lane.b32.xlu0 %v16, 112
    %v18 = vpop.permute.xlu0 %17
    %vm19 = vcmask 64512
    %s20 = scalar_lea.vmem [#allocation0], 2
    %21 = vst.msk [vmem:[%s20] sm:$0x1] %vm19, %v18
    %v22 = vld [vmem:[#allocation1] sm:$0x1]
    %23 = vrot.lane.b32.xlu0 %v22, 104
    %v24 = vpop.permute.xlu0 %23
    %vm25 = vcmask 64512
    %s26 = scalar_lea.vmem [#allocation0], 3
    %27 = vst.msk [vmem:[%s26] sm:$0x1] %vm25, %v24
    %s29 = sshll.u32 1, 4
    %s30 = ssub.s32 %s29, 1
    %v32 = vld [vmem:[#allocation0] sm:%s30]
    %s33 = sshll.u32 1, 4
    %s34 = ssub.s32 %s33, 1
    %35 = vst [vmem:[%s1] sm:%s34] %v32

// kernel: tile.18
$region0: #{tile.18}
  #allocation0 [shape = 's32[1]{0}', space=sflag, size = 0x4, scoped, tag = 'scoped memory for tile.18']
  %s0 = inlined_call_operand.vmem [shape: f32[8], index: 0, kind: input, shape index: {}]
  %s1 = inlined_call_operand.vmem [shape: f32[4,8], index: 1, kind: output, shape index: {}]
  // Predicated region
  $region2: #{tile.18} parent=0 // pred_check
    _
  $region3: #{tile.18} parent=0 // pred_check_branch
    %3 = sbr.rel (0) target = $region5
  $region4: #{tile.18} parent=0 // pred_region
    _
  $region5: #{tile.18} parent=0 // pred_fallthru
    _
  %v4 = vld [vmem:[%s0] ss:$0 sm:$0xff]
  %5 = vst [vmem:[%s1] sm:$0xf] %v4

// kernel: tile.19
$region0: #{tile.19}
  %s0 = inlined_call_operand.vmem [shape: f32[4,8], index: 0, kind: input, shape index: {}]
  %s1 = inlined_call_operand.vmem [shape: f32[32], index: 1, kind: output, shape index: {}]
  $region1: #{tile.19} parent=0
    #allocation0 [shape = 'u8[4096]{0}', space=vmem, size = 0x1000, scoped, tag = 'scoped mem for output reshape']
    #allocation1 [shape = 'u8[4096]{0}', space=vmem, size = 0x1000, scoped, tag = 'scoped mem for input reshape']
    %s3 = sshll.u32 1, 4
    %s4 = ssub.s32 %s3, 1
    %v5 = vld [vmem:[%s0] sm:%s4]
    %6 = vst [vmem:[#allocation1] sm:%s4] %v5
    %v7 = vld [vmem:[#allocation1] sm:$0x1]
    %vm8 = vcmask 64512
    %9 = vst.msk [vmem:[#allocation0] sm:$0x1] %vm8, %v7
    %s10 = scalar_lea.vmem [#allocation1], 3
    %v11 = vld [vmem:[%s10] sm:$0x1]
    %12 = vrot.lane.b32.xlu0 %v11, 24
    %v13 = vpop.permute.xlu0 %12
    %vm14 = vcmask 261312
    %15 = vst.msk [vmem:[#allocation0] sm:$0x1] %vm14, %v13
    %s16 = scalar_lea.vmem [#allocation1], 2
    %v17 = vld [vmem:[%s16] sm:$0x1]
    %18 = vrot.lane.b32.xlu0 %v17, 16
    %v19 = vpop.permute.xlu0 %18
    %vm20 = vcmask 195712
    %21 = vst.msk [vmem:[#allocation0] sm:$0x1] %vm20, %v19
    %s22 = scalar_lea.vmem [#allocation1], 1
    %v23 = vld [vmem:[%s22] sm:$0x1]
    %24 = vrot.lane.b32.xlu0 %v23, 8
    %v25 = vpop.permute.xlu0 %24
    %vm26 = vcmask 130112
    %27 = vst.msk [vmem:[#allocation0] sm:$0x1] %vm26, %v25
    %s29 = sshll.u32 1, 1
    %s30 = ssub.s32 %s29, 1
    %v32 = vld [vmem:[#allocation0] sm:%s30]
    %s33 = sshll.u32 1, 1
    %s34 = ssub.s32 %s33, 1
    %35 = vst [vmem:[%s1] sm:%s34] %v32

// kernel: decoder_module.2
$region0: #{decoder_module.2}
  #allocation0 [shape = 'u32[]', space=smem, size = 0x4, offset = 0x4, fixed_abs, tag = 'smem constant byte address 0x4 - core index']
  #allocation1 [shape = 'u32[144,128]{1,0:T(1,128)}', space=vmem, size = 0x12000, scoped, tag = 'internal scratch']
  %s0 = inlined_call_operand.vmem [shape: f32[2048,8], index: 0, kind: input, shape index: {}]
  %s1 = inlined_call_operand.vmem [shape: f32[8,128], index: 1, kind: input, shape index: {}]
  %s2 = inlined_call_operand.vmem [shape: f32[1,128], index: 2, kind: output, shape index: {0}]
  %s3 = inlined_call_operand.vmem [shape: f32[1,128], index: 3, kind: output, shape index: {1}]
  %4 = xla_tuple %s2, %s3
  %s5 = sld [smem:[#allocation0]]
  $region53: #{decoder_module.2} parent=0
    _
  %s7 = ssub.s32 1, %s5
  %s8 = scalar_select 0, %s7, %s5
  loop: start=0, step=1, limit=4
  $region2: #{decoder_module.2} parent=0 // loop_pre_header
    _
  $region3: #{decoder_module.2} parent=0 // loop_header
    %s10 = sphi 0, %s14
    %p11 = scmp.ge.s32.totalorder %s10, 4
    %s20 = sphi 0, %s22
    %s23 = sphi 0, %s20
    %s24 = sphi 0, %s23
    %s40 = sphi 0, %s24
    %s44 = sphi 0, %s44
    %s46 = sphi 0, %s44
    %s47 = sphi 0, %s46
    %s61 = sphi 0, %s47
    %s65 = sphi 0, %s65
    %s67 = sphi 0, %s65
    %s68 = sphi 0, %s67
    %s82 = sphi 0, %s68
    %s86 = sphi 0, %s86
    %s88 = sphi 0, %s86
    %s89 = sphi 0, %s88
    %s103 = sphi 0, %s89
  $region4: #{decoder_module.2} parent=0 // loop_header_branch
    %13 = sbr.rel (%p11) target = $region8
  $region5: #{decoder_module.2} parent=0 // loop_body
    %s15 = ssub.s32 %s10, 1
    %s16 = ssub.s32 %s10, 2
    %s17 = sadd.s32 %s10, 1
    %s18 = ssub.s32 %s10, %s17
    %p19 = scmp.eq.s32.totalorder %s18, 0
    %s21 = sadd.s32 %s20, 1
    %s22 = scalar_select %p19, %s20, %s21
    %p25 = pneg %p19
    %p26 = scmp.eq.s32.totalorder %s10, 1
    %p27 = por %p25, %p26
    %p28 = scmp.ne.s32.totalorder %s20, %s23
    %p29 = scmp.eq.s32.totalorder %s10, 0
    %p30 = por %p28, %p29
    %p31 = scmp.ne.s32.totalorder %s20, %s23
    %p32 = scmp.eq.s32.totalorder %s15, 1
    %p33 = por %p31, %p32
    %p34 = scmp.ne.s32.totalorder %s23, %s24
    %p35 = scmp.eq.s32.totalorder %s15, 0
    %p36 = por %p34, %p35
    %p37 = scmp.ne.s32.totalorder %s23, %s24
    %p38 = scmp.eq.s32.totalorder %s16, 1
    %p39 = por %p37, %p38
    %p41 = scmp.ne.s32.totalorder %s24, %s40
    %p42 = scmp.eq.s32.totalorder %s16, 0
    %p43 = por %p41, %p42
    %s45 = sadd.s32 %s44, 1
    %p48 = scmp.eq.s32.totalorder %s10, 1
    %p49 = scmp.ne.s32.totalorder %s44, %s46
    %p50 = scmp.eq.s32.totalorder %s10, 0
    %p51 = por %p49, %p50
    %p52 = scmp.ne.s32.totalorder %s44, %s46
    %p53 = scmp.eq.s32.totalorder %s15, 1
    %p54 = por %p52, %p53
    %p55 = scmp.ne.s32.totalorder %s46, %s47
    %p56 = scmp.eq.s32.totalorder %s15, 0
    %p57 = por %p55, %p56
    %p58 = scmp.ne.s32.totalorder %s46, %s47
    %p59 = scmp.eq.s32.totalorder %s16, 1
    %p60 = por %p58, %p59
    %p62 = scmp.ne.s32.totalorder %s47, %s61
    %p63 = scmp.eq.s32.totalorder %s16, 0
    %p64 = por %p62, %p63
    %s66 = sadd.s32 %s65, 1
    %p69 = scmp.eq.s32.totalorder %s10, 1
    %p70 = scmp.ne.s32.totalorder %s65, %s67
    %p71 = scmp.eq.s32.totalorder %s10, 0
    %p72 = por %p70, %p71
    %p73 = scmp.ne.s32.totalorder %s65, %s67
    %p74 = scmp.eq.s32.totalorder %s15, 1
    %p75 = por %p73, %p74
    %p76 = scmp.ne.s32.totalorder %s67, %s68
    %p77 = scmp.eq.s32.totalorder %s15, 0
    %p78 = por %p76, %p77
    %p79 = scmp.ne.s32.totalorder %s67, %s68
    %p80 = scmp.eq.s32.totalorder %s16, 1
    %p81 = por %p79, %p80
    %p83 = scmp.ne.s32.totalorder %s68, %s82
    %p84 = scmp.eq.s32.totalorder %s16, 0
    %p85 = por %p83, %p84
    %s87 = sadd.s32 %s86, 1
    %p90 = scmp.eq.s32.totalorder %s10, 1
    %p91 = scmp.ne.s32.totalorder %s86, %s88
    %p92 = scmp.eq.s32.totalorder %s10, 0
    %p93 = por %p91, %p92
    %p94 = scmp.ne.s32.totalorder %s86, %s88
    %p95 = scmp.eq.s32.totalorder %s15, 1
    %p96 = por %p94, %p95
    %p97 = scmp.ne.s32.totalorder %s88, %s89
    %p98 = scmp.eq.s32.totalorder %s15, 0
    %p99 = por %p97, %p98
    %p100 = scmp.ne.s32.totalorder %s88, %s89
    %p101 = scmp.eq.s32.totalorder %s16, 1
    %p102 = por %p100, %p101
    %p104 = scmp.ne.s32.totalorder %s89, %s103
    %p105 = scmp.eq.s32.totalorder %s16, 0
    %p106 = por %p104, %p105
    %p107 = scmp.le.s32.totalorder 1, %s10
    %p108 = scmp.lt.s32.totalorder %s10, 3
    %p109 = pnand %p107, %p108
    %p110 = pneg %p109
    // Predicated region
    $region9: #{decoder_module.2} parent=5 // pred_check
      _
    $region10: #{decoder_module.2} parent=5 // pred_check_branch
      %112 = sbr.rel (%p109) target = $region12
    $region11: #{decoder_module.2} parent=5 // pred_region
      %s113 = ssub.s32 %s10, 1
      // Predicated region
      $region13: #{decoder_module.2} parent=11 // pred_check
        %p114 = pneg %p57
      $region14: #{decoder_module.2} parent=11 // pred_check_branch
        %116 = sbr.rel (%p114) target = $region16
      $region15: #{decoder_module.2} parent=11 // pred_region
        _
      $region16: #{decoder_module.2} parent=11 // pred_fallthru
        _
    $region12: #{decoder_module.2} parent=5 // pred_fallthru
      _
    %p117 = scmp.lt.s32.totalorder %s10, 2
    // Predicated region
    $region17: #{decoder_module.2} parent=5 // pred_check
      %p118 = pneg %p117
    $region18: #{decoder_module.2} parent=5 // pred_check_branch
      %120 = sbr.rel (%p118) target = $region20
    $region19: #{decoder_module.2} parent=5 // pred_region
      // Predicated region
      $region21: #{decoder_module.2} parent=19 // pred_check
        %p121 = pneg %p30
      $region22: #{decoder_module.2} parent=19 // pred_check_branch
        %123 = sbr.rel (%p121) target = $region24
      $region23: #{decoder_module.2} parent=19 // pred_region
        %s124 = smul.u32 128, %s10
        %p125 = scmp.lt.s32.totalorder %s124, 255
        %s126 = scalar_select %p125, %s124, 255
        %s127 = smul.addr %s126, 8
        %s128 = scalar_lea.vmem %s0, %s127
        %s129 = smul.u32 128, %s10
      $region24: #{decoder_module.2} parent=19 // pred_fallthru
        _
    $region20: #{decoder_module.2} parent=5 // pred_fallthru
      _
    %p130 = scmp.le.s32.totalorder 1, %s10
    %p131 = scmp.lt.s32.totalorder %s10, 3
    %p132 = pnand %p130, %p131
    %p133 = pneg %p132
    // Predicated region
    $region25: #{decoder_module.2} parent=5 // pred_check
      _
    $region26: #{decoder_module.2} parent=5 // pred_check_branch
      %135 = sbr.rel (%p132) target = $region28
    $region27: #{decoder_module.2} parent=5 // pred_region
      %s136 = ssub.s32 %s10, 1
      %s137 = smul.u32 128, %s15
      %p138 = scmp.lt.s32.totalorder %s137, 255
      %s139 = scalar_select %p138, %s137, 255
      %s140 = smul.addr %s139, 8
      %s141 = scalar_lea.vmem %s0, %s140
      %p142 = pneg %p36
      %p143 = pneg %p33
      %p144 = pneg %p57
      %p145 = pneg %p54
      %p146 = pneg %p78
      %p147 = pneg %p75
      %p148 = pneg %p99
      %p149 = pneg %p96
      %s150 = smul.u32 128, %s15
      %p151 = scmp.lt.s32.totalorder %s150, 255
      %s152 = scalar_select %p151, %s150, 255
      %s153 = smul.addr %s152, 8
      %s154 = scalar_lea.vmem %s0, %s153
      %s155 = smul.u32 128, %s15
      %p156 = scmp.eq.s32.totalorder %s15, 0
      // Predicated region
      $region29: #{decoder_module.2} parent=27 // pred_check
        %p157 = pneg %p156
      $region30: #{decoder_module.2} parent=27 // pred_check_branch
        %159 = sbr.rel (%p157) target = $region32
      $region31: #{decoder_module.2} parent=27 // pred_region
        %160 = vst [vmem:[%s2] sm:$0x1] 0.0
        %161 = vst [vmem:[%s3] sm:$0x1] 0.0
      $region32: #{decoder_module.2} parent=27 // pred_fallthru
        _
      %v162 = vld [vmem:[%s154] sm:$0xff]
      %v163 = vld [vmem:[%s154 + $0x8] sm:$0xff]
      %v164 = vld [vmem:[%s154 + $0x10] sm:$0xff]
      %v165 = vld [vmem:[%s154 + $0x18] sm:$0xff]
      %v166 = vld [vmem:[%s154 + $0x20] sm:$0xff]
      %v167 = vld [vmem:[%s154 + $0x28] sm:$0xff]
      %v168 = vld [vmem:[%s154 + $0x30] sm:$0xff]
      %v169 = vld [vmem:[%s154 + $0x38] sm:$0xff]
      %v170 = vld [vmem:[%s154 + $0x40] sm:$0xff]
      %v171 = vld [vmem:[%s154 + $0x48] sm:$0xff]
      %v172 = vld [vmem:[%s154 + $0x50] sm:$0xff]
      %v173 = vld [vmem:[%s154 + $0x58] sm:$0xff]
      %v174 = vld [vmem:[%s154 + $0x60] sm:$0xff]
      %v175 = vld [vmem:[%s154 + $0x68] sm:$0xff]
      %v176 = vld [vmem:[%s154 + $0x70] sm:$0xff]
      %v177 = vld [vmem:[%s154 + $0x78] sm:$0xff]
      %v178 = vld [vmem:[%s154 + $0x80] sm:$0xff]
      %v179 = vld [vmem:[%s154 + $0x88] sm:$0xff]
      %v180 = vld [vmem:[%s154 + $0x90] sm:$0xff]
      %v181 = vld [vmem:[%s154 + $0x98] sm:$0xff]
      %v182 = vld [vmem:[%s154 + $0xa0] sm:$0xff]
      %v183 = vld [vmem:[%s154 + $0xa8] sm:$0xff]
      %v184 = vld [vmem:[%s154 + $0xb0] sm:$0xff]
      %v185 = vld [vmem:[%s154 + $0xb8] sm:$0xff]
      %v186 = vld [vmem:[%s154 + $0xc0] sm:$0xff]
      %v187 = vld [vmem:[%s154 + $0xc8] sm:$0xff]
      %v188 = vld [vmem:[%s154 + $0xd0] sm:$0xff]
      %v189 = vld [vmem:[%s154 + $0xd8] sm:$0xff]
      %v190 = vld [vmem:[%s154 + $0xe0] sm:$0xff]
      %v191 = vld [vmem:[%s154 + $0xe8] sm:$0xff]
      %v192 = vld [vmem:[%s154 + $0xf0] sm:$0xff]
      %v193 = vld [vmem:[%s154 + $0xf8] sm:$0xff]
      %v194 = vld [vmem:[%s154 + $0x100] sm:$0xff]
      %v195 = vld [vmem:[%s154 + $0x108] sm:$0xff]
      %v196 = vld [vmem:[%s154 + $0x110] sm:$0xff]
      %v197 = vld [vmem:[%s154 + $0x118] sm:$0xff]
      %v198 = vld [vmem:[%s154 + $0x120] sm:$0xff]
      %v199 = vld [vmem:[%s154 + $0x128] sm:$0xff]
      %v200 = vld [vmem:[%s154 + $0x130] sm:$0xff]
      %v201 = vld [vmem:[%s154 + $0x138] sm:$0xff]
      %v202 = vld [vmem:[%s154 + $0x140] sm:$0xff]
      %v203 = vld [vmem:[%s154 + $0x148] sm:$0xff]
      %v204 = vld [vmem:[%s154 + $0x150] sm:$0xff]
      %v205 = vld [vmem:[%s154 + $0x158] sm:$0xff]
      %v206 = vld [vmem:[%s154 + $0x160] sm:$0xff]
      %v207 = vld [vmem:[%s154 + $0x168] sm:$0xff]
      %v208 = vld [vmem:[%s154 + $0x170] sm:$0xff]
      %v209 = vld [vmem:[%s154 + $0x178] sm:$0xff]
      %v210 = vld [vmem:[%s154 + $0x180] sm:$0xff]
      %v211 = vld [vmem:[%s154 + $0x188] sm:$0xff]
      %v212 = vld [vmem:[%s154 + $0x190] sm:$0xff]
      %v213 = vld [vmem:[%s154 + $0x198] sm:$0xff]
      %v214 = vld [vmem:[%s154 + $0x1a0] sm:$0xff]
      %v215 = vld [vmem:[%s154 + $0x1a8] sm:$0xff]
      %v216 = vld [vmem:[%s154 + $0x1b0] sm:$0xff]
      %v217 = vld [vmem:[%s154 + $0x1b8] sm:$0xff]
      %v218 = vld [vmem:[%s154 + $0x1c0] sm:$0xff]
      %v219 = vld [vmem:[%s154 + $0x1c8] sm:$0xff]
      %v220 = vld [vmem:[%s154 + $0x1d0] sm:$0xff]
      %v221 = vld [vmem:[%s154 + $0x1d8] sm:$0xff]
      %v222 = vld [vmem:[%s154 + $0x1e0] sm:$0xff]
      %v223 = vld [vmem:[%s154 + $0x1e8] sm:$0xff]
      %v224 = vld [vmem:[%s154 + $0x1f0] sm:$0xff]
      %v225 = vld [vmem:[%s154 + $0x1f8] sm:$0xff]
      %v226 = vld [vmem:[%s154 + $0x200] sm:$0xff]
      %v227 = vld [vmem:[%s154 + $0x208] sm:$0xff]
      %v228 = vld [vmem:[%s154 + $0x210] sm:$0xff]
      %v229 = vld [vmem:[%s154 + $0x218] sm:$0xff]
      %v230 = vld [vmem:[%s154 + $0x220] sm:$0xff]
      %v231 = vld [vmem:[%s154 + $0x228] sm:$0xff]
      %v232 = vld [vmem:[%s154 + $0x230] sm:$0xff]
      %v233 = vld [vmem:[%s154 + $0x238] sm:$0xff]
      %v234 = vld [vmem:[%s154 + $0x240] sm:$0xff]
      %v235 = vld [vmem:[%s154 + $0x248] sm:$0xff]
      %v236 = vld [vmem:[%s154 + $0x250] sm:$0xff]
      %v237 = vld [vmem:[%s154 + $0x258] sm:$0xff]
      %v238 = vld [vmem:[%s154 + $0x260] sm:$0xff]
      %v239 = vld [vmem:[%s154 + $0x268] sm:$0xff]
      %v240 = vld [vmem:[%s154 + $0x270] sm:$0xff]
      %v241 = vld [vmem:[%s154 + $0x278] sm:$0xff]
      %v242 = vld [vmem:[%s154 + $0x280] sm:$0xff]
      %v243 = vld [vmem:[%s154 + $0x288] sm:$0xff]
      %v244 = vld [vmem:[%s154 + $0x290] sm:$0xff]
      %v245 = vld [vmem:[%s154 + $0x298] sm:$0xff]
      %v246 = vld [vmem:[%s154 + $0x2a0] sm:$0xff]
      %v247 = vld [vmem:[%s154 + $0x2a8] sm:$0xff]
      %v248 = vld [vmem:[%s154 + $0x2b0] sm:$0xff]
      %v249 = vld [vmem:[%s154 + $0x2b8] sm:$0xff]
      %v250 = vld [vmem:[%s154 + $0x2c0] sm:$0xff]
      %v251 = vld [vmem:[%s154 + $0x2c8] sm:$0xff]
      %v252 = vld [vmem:[%s154 + $0x2d0] sm:$0xff]
      %v253 = vld [vmem:[%s154 + $0x2d8] sm:$0xff]
      %v254 = vld [vmem:[%s154 + $0x2e0] sm:$0xff]
      %v255 = vld [vmem:[%s154 + $0x2e8] sm:$0xff]
      %v256 = vld [vmem:[%s154 + $0x2f0] sm:$0xff]
      %v257 = vld [vmem:[%s154 + $0x2f8] sm:$0xff]
      %v258 = vld [vmem:[%s154 + $0x300] sm:$0xff]
      %v259 = vld [vmem:[%s154 + $0x308] sm:$0xff]
      %v260 = vld [vmem:[%s154 + $0x310] sm:$0xff]
      %v261 = vld [vmem:[%s154 + $0x318] sm:$0xff]
      %v262 = vld [vmem:[%s154 + $0x320] sm:$0xff]
      %v263 = vld [vmem:[%s154 + $0x328] sm:$0xff]
      %v264 = vld [vmem:[%s154 + $0x330] sm:$0xff]
      %v265 = vld [vmem:[%s154 + $0x338] sm:$0xff]
      %v266 = vld [vmem:[%s154 + $0x340] sm:$0xff]
      %v267 = vld [vmem:[%s154 + $0x348] sm:$0xff]
      %v268 = vld [vmem:[%s154 + $0x350] sm:$0xff]
      %v269 = vld [vmem:[%s154 + $0x358] sm:$0xff]
      %v270 = vld [vmem:[%s154 + $0x360] sm:$0xff]
      %v271 = vld [vmem:[%s154 + $0x368] sm:$0xff]
      %v272 = vld [vmem:[%s154 + $0x370] sm:$0xff]
      %v273 = vld [vmem:[%s154 + $0x378] sm:$0xff]
      %v274 = vld [vmem:[%s154 + $0x380] sm:$0xff]
      %v275 = vld [vmem:[%s154 + $0x388] sm:$0xff]
      %v276 = vld [vmem:[%s154 + $0x390] sm:$0xff]
      %v277 = vld [vmem:[%s154 + $0x398] sm:$0xff]
      %v278 = vld [vmem:[%s154 + $0x3a0] sm:$0xff]
      %v279 = vld [vmem:[%s154 + $0x3a8] sm:$0xff]
      %v280 = vld [vmem:[%s154 + $0x3b0] sm:$0xff]
      %v281 = vld [vmem:[%s154 + $0x3b8] sm:$0xff]
      %v282 = vld [vmem:[%s154 + $0x3c0] sm:$0xff]
      %v283 = vld [vmem:[%s154 + $0x3c8] sm:$0xff]
      %v284 = vld [vmem:[%s154 + $0x3d0] sm:$0xff]
      %v285 = vld [vmem:[%s154 + $0x3d8] sm:$0xff]
      %v286 = vld [vmem:[%s154 + $0x3e0] sm:$0xff]
      %v287 = vld [vmem:[%s154 + $0x3e8] sm:$0xff]
      %v288 = vld [vmem:[%s154 + $0x3f0] sm:$0xff]
      %v289 = vld [vmem:[%s154 + $0x3f8] sm:$0xff]
      %v290 = vld [vmem:[%s1] sm:$0xff]
      %vm291 = vcmask 64512
      %v293 = vsel %vm291, %v162, 0
      %v296 = vsel %vm291, %v163, 0
      %v299 = vsel %vm291, %v164, 0
      %v302 = vsel %vm291, %v165, 0
      %v305 = vsel %vm291, %v166, 0
      %v308 = vsel %vm291, %v167, 0
      %v311 = vsel %vm291, %v168, 0
      %v314 = vsel %vm291, %v169, 0
      %v317 = vsel %vm291, %v170, 0
      %v320 = vsel %vm291, %v171, 0
      %v323 = vsel %vm291, %v172, 0
      %v326 = vsel %vm291, %v173, 0
      %v329 = vsel %vm291, %v174, 0
      %v332 = vsel %vm291, %v175, 0
      %v335 = vsel %vm291, %v176, 0
      %v338 = vsel %vm291, %v177, 0
      %v341 = vsel %vm291, %v178, 0
      %v344 = vsel %vm291, %v179, 0
      %v347 = vsel %vm291, %v180, 0
      %v350 = vsel %vm291, %v181, 0
      %v353 = vsel %vm291, %v182, 0
      %v356 = vsel %vm291, %v183, 0
      %v359 = vsel %vm291, %v184, 0
      %v362 = vsel %vm291, %v185, 0
      %v365 = vsel %vm291, %v186, 0
      %v368 = vsel %vm291, %v187, 0
      %v371 = vsel %vm291, %v188, 0
      %v374 = vsel %vm291, %v189, 0
      %v377 = vsel %vm291, %v190, 0
      %v380 = vsel %vm291, %v191, 0
      %v383 = vsel %vm291, %v192, 0
      %v386 = vsel %vm291, %v193, 0
      %v389 = vsel %vm291, %v194, 0
      %v392 = vsel %vm291, %v195, 0
      %v395 = vsel %vm291, %v196, 0
      %v398 = vsel %vm291, %v197, 0
      %v401 = vsel %vm291, %v198, 0
      %v404 = vsel %vm291, %v199, 0
      %v407 = vsel %vm291, %v200, 0
      %v410 = vsel %vm291, %v201, 0
      %v413 = vsel %vm291, %v202, 0
      %v416 = vsel %vm291, %v203, 0
      %v419 = vsel %vm291, %v204, 0
      %v422 = vsel %vm291, %v205, 0
      %v425 = vsel %vm291, %v206, 0
      %v428 = vsel %vm291, %v207, 0
      %v431 = vsel %vm291, %v208, 0
      %v434 = vsel %vm291, %v209, 0
      %v437 = vsel %vm291, %v210, 0
      %v440 = vsel %vm291, %v211, 0
      %v443 = vsel %vm291, %v212, 0
      %v446 = vsel %vm291, %v213, 0
      %v449 = vsel %vm291, %v214, 0
      %v452 = vsel %vm291, %v215, 0
      %v455 = vsel %vm291, %v216, 0
      %v458 = vsel %vm291, %v217, 0
      %v461 = vsel %vm291, %v218, 0
      %v464 = vsel %vm291, %v219, 0
      %v467 = vsel %vm291, %v220, 0
      %v470 = vsel %vm291, %v221, 0
      %v473 = vsel %vm291, %v222, 0
      %v476 = vsel %vm291, %v223, 0
      %v479 = vsel %vm291, %v224, 0
      %v482 = vsel %vm291, %v225, 0
      %v485 = vsel %vm291, %v226, 0
      %v488 = vsel %vm291, %v227, 0
      %v491 = vsel %vm291, %v228, 0
      %v494 = vsel %vm291, %v229, 0
      %v497 = vsel %vm291, %v230, 0
      %v500 = vsel %vm291, %v231, 0
      %v503 = vsel %vm291, %v232, 0
      %v506 = vsel %vm291, %v233, 0
      %v509 = vsel %vm291, %v234, 0
      %v512 = vsel %vm291, %v235, 0
      %v515 = vsel %vm291, %v236, 0
      %v518 = vsel %vm291, %v237, 0
      %v521 = vsel %vm291, %v238, 0
      %v524 = vsel %vm291, %v239, 0
      %v527 = vsel %vm291, %v240, 0
      %v530 = vsel %vm291, %v241, 0
      %v533 = vsel %vm291, %v242, 0
      %v536 = vsel %vm291, %v243, 0
      %v539 = vsel %vm291, %v244, 0
      %v542 = vsel %vm291, %v245, 0
      %v545 = vsel %vm291, %v246, 0
      %v548 = vsel %vm291, %v247, 0
      %v551 = vsel %vm291, %v248, 0
      %v554 = vsel %vm291, %v249, 0
      %v557 = vsel %vm291, %v250, 0
      %v560 = vsel %vm291, %v251, 0
      %v563 = vsel %vm291, %v252, 0
      %v566 = vsel %vm291, %v253, 0
      %v569 = vsel %vm291, %v254, 0
      %v572 = vsel %vm291, %v255, 0
      %v575 = vsel %vm291, %v256, 0
      %v578 = vsel %vm291, %v257, 0
      %v581 = vsel %vm291, %v258, 0
      %v584 = vsel %vm291, %v259, 0
      %v587 = vsel %vm291, %v260, 0
      %v590 = vsel %vm291, %v261, 0
      %v593 = vsel %vm291, %v262, 0
      %v596 = vsel %vm291, %v263, 0
      %v599 = vsel %vm291, %v264, 0
      %v602 = vsel %vm291, %v265, 0
      %v605 = vsel %vm291, %v266, 0
      %v608 = vsel %vm291, %v267, 0
      %v611 = vsel %vm291, %v268, 0
      %v614 = vsel %vm291, %v269, 0
      %v617 = vsel %vm291, %v270, 0
      %v620 = vsel %vm291, %v271, 0
      %v623 = vsel %vm291, %v272, 0
      %v626 = vsel %vm291, %v273, 0
      %v629 = vsel %vm291, %v274, 0
      %v632 = vsel %vm291, %v275, 0
      %v635 = vsel %vm291, %v276, 0
      %v638 = vsel %vm291, %v277, 0
      %v641 = vsel %vm291, %v278, 0
      %v644 = vsel %vm291, %v279, 0
      %v647 = vsel %vm291, %v280, 0
      %v650 = vsel %vm291, %v281, 0
      %v653 = vsel %vm291, %v282, 0
      %v656 = vsel %vm291, %v283, 0
      %v659 = vsel %vm291, %v284, 0
      %v662 = vsel %vm291, %v285, 0
      %v665 = vsel %vm291, %v286, 0
      %v668 = vsel %vm291, %v287, 0
      %v671 = vsel %vm291, %v288, 0
      %v674 = vsel %vm291, %v289, 0
      %676 = vmatprep.subr.mxu0 0.0
      %677 = vmatpush1.msra.mxu0 0.0
      %678 = vmatprep.subr.mxu0 0.0
      %679 = vmatpush1.msra.mxu0 0.0
      %680 = vmatprep.subr.mxu0 0.0
      %681 = vmatpush1.msra.mxu0 0.0
      %682 = vmatprep.subr.mxu0 0.0
      %683 = vmatpush1.msra.mxu0 0.0
      %684 = vmatprep.subr.mxu0 0.0
      %685 = vmatpush1.msra.mxu0 0.0
      %686 = vmatprep.subr.mxu0 0.0
      %687 = vmatpush1.msra.mxu0 0.0
      %688 = vmatprep.subr.mxu0 0.0
      %689 = vmatpush1.msra.mxu0 0.0
      %690 = vmatprep.subr.mxu0 0.0
      %691 = vmatpush1.msra.mxu0 0.0
      %692 = vmatprep.subr.mxu0 0.0
      %693 = vmatpush1.msra.mxu0 0.0
      %694 = vmatprep.subr.mxu0 0.0
      %695 = vmatpush1.msra.mxu0 0.0
      %696 = vmatprep.subr.mxu0 0.0
      %697 = vmatpush1.msra.mxu0 0.0
      %698 = vmatprep.subr.mxu0 0.0
      %699 = vmatpush1.msra.mxu0 0.0
      %700 = vmatprep.subr.mxu0 0.0
      %701 = vmatpush1.msra.mxu0 0.0
      %702 = vmatprep.subr.mxu0 0.0
      %703 = vmatpush1.msra.mxu0 0.0
      %704 = vmatprep.subr.mxu0 0.0
      %705 = vmatpush1.msra.mxu0 0.0
      %706 = vmatprep.subr.mxu0 0.0
      %707 = vmatpush1.msra.mxu0 %v290
      %708 = vmatprep.subr.mxu0 0.0
      %709 = vmatpush2.msra.mxu0 0.0
      %710 = vmatprep.subr.mxu0 0.0
      %711 = vmatpush2.msra.mxu0 0.0
      %712 = vmatprep.subr.mxu0 0.0
      %713 = vmatpush2.msra.mxu0 0.0
      %714 = vmatprep.subr.mxu0 0.0
      %715 = vmatpush2.msra.mxu0 0.0
      %716 = vmatprep.subr.mxu0 0.0
      %717 = vmatpush2.msra.mxu0 0.0
      %718 = vmatprep.subr.mxu0 0.0
      %719 = vmatpush2.msra.mxu0 0.0
      %720 = vmatprep.subr.mxu0 0.0
      %721 = vmatpush2.msra.mxu0 0.0
      %722 = vmatprep.subr.mxu0 0.0
      %723 = vmatpush2.msra.mxu0 0.0
      %724 = vmatprep.subr.mxu0 0.0
      %725 = vmatpush2.msra.mxu0 0.0
      %726 = vmatprep.subr.mxu0 0.0
      %727 = vmatpush2.msra.mxu0 0.0
      %728 = vmatprep.subr.mxu0 0.0
      %729 = vmatpush2.msra.mxu0 0.0
      %730 = vmatprep.subr.mxu0 0.0
      %731 = vmatpush2.msra.mxu0 0.0
      %732 = vmatprep.subr.mxu0 0.0
      %733 = vmatpush2.msra.mxu0 0.0
      %734 = vmatprep.subr.mxu0 0.0
      %735 = vmatpush2.msra.mxu0 0.0
      %736 = vmatprep.subr.mxu0 0.0
      %737 = vmatpush2.msra.mxu0 0.0
      %738 = vmatprep.subr.mxu0 0.0
      %739 = vmatpush2.msra.mxu0 0.0
      %740 = vmatprep.mubr.f32.mxu0 0.0
      %741 = vmatmul.mubr.f32.gmra.mxu0 %v293
      %v742 = vpop.f32.mrf.mxu0
      %v743 = vadd.f32 0.0, %v742
      %v744 = vpop.f32.mrf.mxu0
      %745 = vmatprep.mubr.f32.mxu0 0.0
      %746 = vmatmul.mubr.f32.gmra.mxu0 %v296
      %v747 = vpop.f32.mrf.mxu0
      %v748 = vadd.f32 0.0, %v747
      %v749 = vpop.f32.mrf.mxu0
      %750 = vmatprep.mubr.f32.mxu0 0.0
      %751 = vmatmul.mubr.f32.gmra.mxu0 %v299
      %v752 = vpop.f32.mrf.mxu0
      %v753 = vadd.f32 0.0, %v752
      %v754 = vpop.f32.mrf.mxu0
      %755 = vmatprep.mubr.f32.mxu0 0.0
      %756 = vmatmul.mubr.f32.gmra.mxu0 %v302
      %v757 = vpop.f32.mrf.mxu0
      %v758 = vadd.f32 0.0, %v757
      %v759 = vpop.f32.mrf.mxu0
      %760 = vmatprep.mubr.f32.mxu0 0.0
      %761 = vmatmul.mubr.f32.gmra.mxu0 %v305
      %v762 = vpop.f32.mrf.mxu0
      %v763 = vadd.f32 0.0, %v762
      %v764 = vpop.f32.mrf.mxu0
      %765 = vmatprep.mubr.f32.mxu0 0.0
      %766 = vmatmul.mubr.f32.gmra.mxu0 %v308
      %v767 = vpop.f32.mrf.mxu0
      %v768 = vadd.f32 0.0, %v767
      %v769 = vpop.f32.mrf.mxu0
      %770 = vmatprep.mubr.f32.mxu0 0.0
      %771 = vmatmul.mubr.f32.gmra.mxu0 %v311
      %v772 = vpop.f32.mrf.mxu0
      %v773 = vadd.f32 0.0, %v772
      %v774 = vpop.f32.mrf.mxu0
      %775 = vmatprep.mubr.f32.mxu0 0.0
      %776 = vmatmul.mubr.f32.gmra.mxu0 %v314
      %v777 = vpop.f32.mrf.mxu0
      %v778 = vadd.f32 0.0, %v777
      %v779 = vpop.f32.mrf.mxu0
      %780 = vmatprep.mubr.f32.mxu0 0.0
      %781 = vmatmul.mubr.f32.gmra.mxu0 %v317
      %v782 = vpop.f32.mrf.mxu0
      %v783 = vadd.f32 0.0, %v782
      %v784 = vpop.f32.mrf.mxu0
      %785 = vmatprep.mubr.f32.mxu0 0.0
      %786 = vmatmul.mubr.f32.gmra.mxu0 %v320
      %v787 = vpop.f32.mrf.mxu0
      %v788 = vadd.f32 0.0, %v787
      %v789 = vpop.f32.mrf.mxu0
      %790 = vmatprep.mubr.f32.mxu0 0.0
      %791 = vmatmul.mubr.f32.gmra.mxu0 %v323
      %v792 = vpop.f32.mrf.mxu0
      %v793 = vadd.f32 0.0, %v792
      %v794 = vpop.f32.mrf.mxu0
      %795 = vmatprep.mubr.f32.mxu0 0.0
      %796 = vmatmul.mubr.f32.gmra.mxu0 %v326
      %v797 = vpop.f32.mrf.mxu0
      %v798 = vadd.f32 0.0, %v797
      %v799 = vpop.f32.mrf.mxu0
      %800 = vmatprep.mubr.f32.mxu0 0.0
      %801 = vmatmul.mubr.f32.gmra.mxu0 %v329
      %v802 = vpop.f32.mrf.mxu0
      %v803 = vadd.f32 0.0, %v802
      %v804 = vpop.f32.mrf.mxu0
      %805 = vmatprep.mubr.f32.mxu0 0.0
      %806 = vmatmul.mubr.f32.gmra.mxu0 %v332
      %v807 = vpop.f32.mrf.mxu0
      %v808 = vadd.f32 0.0, %v807
      %v809 = vpop.f32.mrf.mxu0
      %810 = vmatprep.mubr.f32.mxu0 0.0
      %811 = vmatmul.mubr.f32.gmra.mxu0 %v335
      %v812 = vpop.f32.mrf.mxu0
      %v813 = vadd.f32 0.0, %v812
      %v814 = vpop.f32.mrf.mxu0
      %815 = vmatprep.mubr.f32.mxu0 0.0
      %816 = vmatmul.mubr.f32.gmra.mxu0 %v338
      %v817 = vpop.f32.mrf.mxu0
      %v818 = vadd.f32 0.0, %v817
      %v819 = vpop.f32.mrf.mxu0
      %820 = vmatprep.mubr.f32.mxu0 0.0
      %821 = vmatmul.mubr.f32.gmra.mxu0 %v341
      %v822 = vpop.f32.mrf.mxu0
      %v823 = vadd.f32 0.0, %v822
      %v824 = vpop.f32.mrf.mxu0
      %825 = vmatprep.mubr.f32.mxu0 0.0
      %826 = vmatmul.mubr.f32.gmra.mxu0 %v344
      %v827 = vpop.f32.mrf.mxu0
      %v828 = vadd.f32 0.0, %v827
      %v829 = vpop.f32.mrf.mxu0
      %830 = vmatprep.mubr.f32.mxu0 0.0
      %831 = vmatmul.mubr.f32.gmra.mxu0 %v347
      %v832 = vpop.f32.mrf.mxu0
      %v833 = vadd.f32 0.0, %v832
      %v834 = vpop.f32.mrf.mxu0
      %835 = vmatprep.mubr.f32.mxu0 0.0
      %836 = vmatmul.mubr.f32.gmra.mxu0 %v350
      %v837 = vpop.f32.mrf.mxu0
      %v838 = vadd.f32 0.0, %v837
      %v839 = vpop.f32.mrf.mxu0
      %840 = vmatprep.mubr.f32.mxu0 0.0
      %841 = vmatmul.mubr.f32.gmra.mxu0 %v353
      %v842 = vpop.f32.mrf.mxu0
      %v843 = vadd.f32 0.0, %v842
      %v844 = vpop.f32.mrf.mxu0
      %845 = vmatprep.mubr.f32.mxu0 0.0
      %846 = vmatmul.mubr.f32.gmra.mxu0 %v356
      %v847 = vpop.f32.mrf.mxu0
      %v848 = vadd.f32 0.0, %v847
      %v849 = vpop.f32.mrf.mxu0
      %850 = vmatprep.mubr.f32.mxu0 0.0
      %851 = vmatmul.mubr.f32.gmra.mxu0 %v359
      %v852 = vpop.f32.mrf.mxu0
      %v853 = vadd.f32 0.0, %v852
      %v854 = vpop.f32.mrf.mxu0
      %855 = vmatprep.mubr.f32.mxu0 0.0
      %856 = vmatmul.mubr.f32.gmra.mxu0 %v362
      %v857 = vpop.f32.mrf.mxu0
      %v858 = vadd.f32 0.0, %v857
      %v859 = vpop.f32.mrf.mxu0
      %860 = vmatprep.mubr.f32.mxu0 0.0
      %861 = vmatmul.mubr.f32.gmra.mxu0 %v365
      %v862 = vpop.f32.mrf.mxu0
      %v863 = vadd.f32 0.0, %v862
      %v864 = vpop.f32.mrf.mxu0
      %865 = vmatprep.mubr.f32.mxu0 0.0
      %866 = vmatmul.mubr.f32.gmra.mxu0 %v368
      %v867 = vpop.f32.mrf.mxu0
      %v868 = vadd.f32 0.0, %v867
      %v869 = vpop.f32.mrf.mxu0
      %870 = vmatprep.mubr.f32.mxu0 0.0
      %871 = vmatmul.mubr.f32.gmra.mxu0 %v371
      %v872 = vpop.f32.mrf.mxu0
      %v873 = vadd.f32 0.0, %v872
      %v874 = vpop.f32.mrf.mxu0
      %875 = vmatprep.mubr.f32.mxu0 0.0
      %876 = vmatmul.mubr.f32.gmra.mxu0 %v374
      %v877 = vpop.f32.mrf.mxu0
      %v878 = vadd.f32 0.0, %v877
      %v879 = vpop.f32.mrf.mxu0
      %880 = vmatprep.mubr.f32.mxu0 0.0
      %881 = vmatmul.mubr.f32.gmra.mxu0 %v377
      %v882 = vpop.f32.mrf.mxu0
      %v883 = vadd.f32 0.0, %v882
      %v884 = vpop.f32.mrf.mxu0
      %885 = vmatprep.mubr.f32.mxu0 0.0
      %886 = vmatmul.mubr.f32.gmra.mxu0 %v380
      %v887 = vpop.f32.mrf.mxu0
      %v888 = vadd.f32 0.0, %v887
      %v889 = vpop.f32.mrf.mxu0
      %890 = vmatprep.mubr.f32.mxu0 0.0
      %891 = vmatmul.mubr.f32.gmra.mxu0 %v383
      %v892 = vpop.f32.mrf.mxu0
      %v893 = vadd.f32 0.0, %v892
      %v894 = vpop.f32.mrf.mxu0
      %895 = vmatprep.mubr.f32.mxu0 0.0
      %896 = vmatmul.mubr.f32.gmra.mxu0 %v386
      %v897 = vpop.f32.mrf.mxu0
      %v898 = vadd.f32 0.0, %v897
      %v899 = vpop.f32.mrf.mxu0
      %900 = vmatprep.mubr.f32.mxu0 0.0
      %901 = vmatmul.mubr.f32.gmra.mxu0 %v389
      %v902 = vpop.f32.mrf.mxu0
      %v903 = vadd.f32 0.0, %v902
      %v904 = vpop.f32.mrf.mxu0
      %905 = vmatprep.mubr.f32.mxu0 0.0
      %906 = vmatmul.mubr.f32.gmra.mxu0 %v392
      %v907 = vpop.f32.mrf.mxu0
      %v908 = vadd.f32 0.0, %v907
      %v909 = vpop.f32.mrf.mxu0
      %910 = vmatprep.mubr.f32.mxu0 0.0
      %911 = vmatmul.mubr.f32.gmra.mxu0 %v395
      %v912 = vpop.f32.mrf.mxu0
      %v913 = vadd.f32 0.0, %v912
      %v914 = vpop.f32.mrf.mxu0
      %915 = vmatprep.mubr.f32.mxu0 0.0
      %916 = vmatmul.mubr.f32.gmra.mxu0 %v398
      %v917 = vpop.f32.mrf.mxu0
      %v918 = vadd.f32 0.0, %v917
      %v919 = vpop.f32.mrf.mxu0
      %920 = vmatprep.mubr.f32.mxu0 0.0
      %921 = vmatmul.mubr.f32.gmra.mxu0 %v401
      %v922 = vpop.f32.mrf.mxu0
      %v923 = vadd.f32 0.0, %v922
      %v924 = vpop.f32.mrf.mxu0
      %925 = vmatprep.mubr.f32.mxu0 0.0
      %926 = vmatmul.mubr.f32.gmra.mxu0 %v404
      %v927 = vpop.f32.mrf.mxu0
      %v928 = vadd.f32 0.0, %v927
      %v929 = vpop.f32.mrf.mxu0
      %930 = vmatprep.mubr.f32.mxu0 0.0
      %931 = vmatmul.mubr.f32.gmra.mxu0 %v407
      %v932 = vpop.f32.mrf.mxu0
      %v933 = vadd.f32 0.0, %v932
      %v934 = vpop.f32.mrf.mxu0
      %935 = vmatprep.mubr.f32.mxu0 0.0
      %936 = vmatmul.mubr.f32.gmra.mxu0 %v410
      %v937 = vpop.f32.mrf.mxu0
      %v938 = vadd.f32 0.0, %v937
      %v939 = vpop.f32.mrf.mxu0
      %940 = vmatprep.mubr.f32.mxu0 0.0
      %941 = vmatmul.mubr.f32.gmra.mxu0 %v413
      %v942 = vpop.f32.mrf.mxu0
      %v943 = vadd.f32 0.0, %v942
      %v944 = vpop.f32.mrf.mxu0
      %945 = vmatprep.mubr.f32.mxu0 0.0
      %946 = vmatmul.mubr.f32.gmra.mxu0 %v416
      %v947 = vpop.f32.mrf.mxu0
      %v948 = vadd.f32 0.0, %v947
      %v949 = vpop.f32.mrf.mxu0
      %950 = vmatprep.mubr.f32.mxu0 0.0
      %951 = vmatmul.mubr.f32.gmra.mxu0 %v419
      %v952 = vpop.f32.mrf.mxu0
      %v953 = vadd.f32 0.0, %v952
      %v954 = vpop.f32.mrf.mxu0
      %955 = vmatprep.mubr.f32.mxu0 0.0
      %956 = vmatmul.mubr.f32.gmra.mxu0 %v422
      %v957 = vpop.f32.mrf.mxu0
      %v958 = vadd.f32 0.0, %v957
      %v959 = vpop.f32.mrf.mxu0
      %960 = vmatprep.mubr.f32.mxu0 0.0
      %961 = vmatmul.mubr.f32.gmra.mxu0 %v425
      %v962 = vpop.f32.mrf.mxu0
      %v963 = vadd.f32 0.0, %v962
      %v964 = vpop.f32.mrf.mxu0
      %965 = vmatprep.mubr.f32.mxu0 0.0
      %966 = vmatmul.mubr.f32.gmra.mxu0 %v428
      %v967 = vpop.f32.mrf.mxu0
      %v968 = vadd.f32 0.0, %v967
      %v969 = vpop.f32.mrf.mxu0
      %970 = vmatprep.mubr.f32.mxu0 0.0
      %971 = vmatmul.mubr.f32.gmra.mxu0 %v431
      %v972 = vpop.f32.mrf.mxu0
      %v973 = vadd.f32 0.0, %v972
      %v974 = vpop.f32.mrf.mxu0
      %975 = vmatprep.mubr.f32.mxu0 0.0
      %976 = vmatmul.mubr.f32.gmra.mxu0 %v434
      %v977 = vpop.f32.mrf.mxu0
      %v978 = vadd.f32 0.0, %v977
      %v979 = vpop.f32.mrf.mxu0
      %980 = vmatprep.mubr.f32.mxu0 0.0
      %981 = vmatmul.mubr.f32.gmra.mxu0 %v437
      %v982 = vpop.f32.mrf.mxu0
      %v983 = vadd.f32 0.0, %v982
      %v984 = vpop.f32.mrf.mxu0
      %985 = vmatprep.mubr.f32.mxu0 0.0
      %986 = vmatmul.mubr.f32.gmra.mxu0 %v440
      %v987 = vpop.f32.mrf.mxu0
      %v988 = vadd.f32 0.0, %v987
      %v989 = vpop.f32.mrf.mxu0
      %990 = vmatprep.mubr.f32.mxu0 0.0
      %991 = vmatmul.mubr.f32.gmra.mxu0 %v443
      %v992 = vpop.f32.mrf.mxu0
      %v993 = vadd.f32 0.0, %v992
      %v994 = vpop.f32.mrf.mxu0
      %995 = vmatprep.mubr.f32.mxu0 0.0
      %996 = vmatmul.mubr.f32.gmra.mxu0 %v446
      %v997 = vpop.f32.mrf.mxu0
      %v998 = vadd.f32 0.0, %v997
      %v999 = vpop.f32.mrf.mxu0
      %1000 = vmatprep.mubr.f32.mxu0 0.0
      %1001 = vmatmul.mubr.f32.gmra.mxu0 %v449
      %v1002 = vpop.f32.mrf.mxu0
      %v1003 = vadd.f32 0.0, %v1002
      %v1004 = vpop.f32.mrf.mxu0
      %1005 = vmatprep.mubr.f32.mxu0 0.0
      %1006 = vmatmul.mubr.f32.gmra.mxu0 %v452
      %v1007 = vpop.f32.mrf.mxu0
      %v1008 = vadd.f32 0.0, %v1007
      %v1009 = vpop.f32.mrf.mxu0
      %1010 = vmatprep.mubr.f32.mxu0 0.0
      %1011 = vmatmul.mubr.f32.gmra.mxu0 %v455
      %v1012 = vpop.f32.mrf.mxu0
      %v1013 = vadd.f32 0.0, %v1012
      %v1014 = vpop.f32.mrf.mxu0
      %1015 = vmatprep.mubr.f32.mxu0 0.0
      %1016 = vmatmul.mubr.f32.gmra.mxu0 %v458
      %v1017 = vpop.f32.mrf.mxu0
      %v1018 = vadd.f32 0.0, %v1017
      %v1019 = vpop.f32.mrf.mxu0
      %1020 = vmatprep.mubr.f32.mxu0 0.0
      %1021 = vmatmul.mubr.f32.gmra.mxu0 %v461
      %v1022 = vpop.f32.mrf.mxu0
      %v1023 = vadd.f32 0.0, %v1022
      %v1024 = vpop.f32.mrf.mxu0
      %1025 = vmatprep.mubr.f32.mxu0 0.0
      %1026 = vmatmul.mubr.f32.gmra.mxu0 %v464
      %v1027 = vpop.f32.mrf.mxu0
      %v1028 = vadd.f32 0.0, %v1027
      %v1029 = vpop.f32.mrf.mxu0
      %1030 = vmatprep.mubr.f32.mxu0 0.0
      %1031 = vmatmul.mubr.f32.gmra.mxu0 %v467
      %v1032 = vpop.f32.mrf.mxu0
      %v1033 = vadd.f32 0.0, %v1032
      %v1034 = vpop.f32.mrf.mxu0
      %1035 = vmatprep.mubr.f32.mxu0 0.0
      %1036 = vmatmul.mubr.f32.gmra.mxu0 %v470
      %v1037 = vpop.f32.mrf.mxu0
      %v1038 = vadd.f32 0.0, %v1037
      %v1039 = vpop.f32.mrf.mxu0
      %1040 = vmatprep.mubr.f32.mxu0 0.0
      %1041 = vmatmul.mubr.f32.gmra.mxu0 %v473
      %v1042 = vpop.f32.mrf.mxu0
      %v1043 = vadd.f32 0.0, %v1042
      %v1044 = vpop.f32.mrf.mxu0
      %1045 = vmatprep.mubr.f32.mxu0 0.0
      %1046 = vmatmul.mubr.f32.gmra.mxu0 %v476
      %v1047 = vpop.f32.mrf.mxu0
      %v1048 = vadd.f32 0.0, %v1047
      %v1049 = vpop.f32.mrf.mxu0
      %1050 = vmatprep.mubr.f32.mxu0 0.0
      %1051 = vmatmul.mubr.f32.gmra.mxu0 %v479
      %v1052 = vpop.f32.mrf.mxu0
      %v1053 = vadd.f32 0.0, %v1052
      %v1054 = vpop.f32.mrf.mxu0
      %1055 = vmatprep.mubr.f32.mxu0 0.0
      %1056 = vmatmul.mubr.f32.gmra.mxu0 %v482
      %v1057 = vpop.f32.mrf.mxu0
      %v1058 = vadd.f32 0.0, %v1057
      %v1059 = vpop.f32.mrf.mxu0
      %1060 = vmatprep.mubr.f32.mxu0 0.0
      %1061 = vmatmul.mubr.f32.gmra.mxu0 %v485
      %v1062 = vpop.f32.mrf.mxu0
      %v1063 = vadd.f32 0.0, %v1062
      %v1064 = vpop.f32.mrf.mxu0
      %1065 = vmatprep.mubr.f32.mxu0 0.0
      %1066 = vmatmul.mubr.f32.gmra.mxu0 %v488
      %v1067 = vpop.f32.mrf.mxu0
      %v1068 = vadd.f32 0.0, %v1067
      %v1069 = vpop.f32.mrf.mxu0
      %1070 = vmatprep.mubr.f32.mxu0 0.0
      %1071 = vmatmul.mubr.f32.gmra.mxu0 %v491
      %v1072 = vpop.f32.mrf.mxu0
      %v1073 = vadd.f32 0.0, %v1072
      %v1074 = vpop.f32.mrf.mxu0
      %1075 = vmatprep.mubr.f32.mxu0 0.0
      %1076 = vmatmul.mubr.f32.gmra.mxu0 %v494
      %v1077 = vpop.f32.mrf.mxu0
      %v1078 = vadd.f32 0.0, %v1077
      %v1079 = vpop.f32.mrf.mxu0
      %1080 = vmatprep.mubr.f32.mxu0 0.0
      %1081 = vmatmul.mubr.f32.gmra.mxu0 %v497
      %v1082 = vpop.f32.mrf.mxu0
      %v1083 = vadd.f32 0.0, %v1082
      %v1084 = vpop.f32.mrf.mxu0
      %1085 = vmatprep.mubr.f32.mxu0 0.0
      %1086 = vmatmul.mubr.f32.gmra.mxu0 %v500
      %v1087 = vpop.f32.mrf.mxu0
      %v1088 = vadd.f32 0.0, %v1087
      %v1089 = vpop.f32.mrf.mxu0
      %1090 = vmatprep.mubr.f32.mxu0 0.0
      %1091 = vmatmul.mubr.f32.gmra.mxu0 %v503
      %v1092 = vpop.f32.mrf.mxu0
      %v1093 = vadd.f32 0.0, %v1092
      %v1094 = vpop.f32.mrf.mxu0
      %1095 = vmatprep.mubr.f32.mxu0 0.0
      %1096 = vmatmul.mubr.f32.gmra.mxu0 %v506
      %v1097 = vpop.f32.mrf.mxu0
      %v1098 = vadd.f32 0.0, %v1097
      %v1099 = vpop.f32.mrf.mxu0
      %1100 = vmatprep.mubr.f32.mxu0 0.0
      %1101 = vmatmul.mubr.f32.gmra.mxu0 %v509
      %v1102 = vpop.f32.mrf.mxu0
      %v1103 = vadd.f32 0.0, %v1102
      %v1104 = vpop.f32.mrf.mxu0
      %1105 = vmatprep.mubr.f32.mxu0 0.0
      %1106 = vmatmul.mubr.f32.gmra.mxu0 %v512
      %v1107 = vpop.f32.mrf.mxu0
      %v1108 = vadd.f32 0.0, %v1107
      %v1109 = vpop.f32.mrf.mxu0
      %1110 = vmatprep.mubr.f32.mxu0 0.0
      %1111 = vmatmul.mubr.f32.gmra.mxu0 %v515
      %v1112 = vpop.f32.mrf.mxu0
      %v1113 = vadd.f32 0.0, %v1112
      %v1114 = vpop.f32.mrf.mxu0
      %1115 = vmatprep.mubr.f32.mxu0 0.0
      %1116 = vmatmul.mubr.f32.gmra.mxu0 %v518
      %v1117 = vpop.f32.mrf.mxu0
      %v1118 = vadd.f32 0.0, %v1117
      %v1119 = vpop.f32.mrf.mxu0
      %1120 = vmatprep.mubr.f32.mxu0 0.0
      %1121 = vmatmul.mubr.f32.gmra.mxu0 %v521
      %v1122 = vpop.f32.mrf.mxu0
      %v1123 = vadd.f32 0.0, %v1122
      %v1124 = vpop.f32.mrf.mxu0
      %1125 = vmatprep.mubr.f32.mxu0 0.0
      %1126 = vmatmul.mubr.f32.gmra.mxu0 %v524
      %v1127 = vpop.f32.mrf.mxu0
      %v1128 = vadd.f32 0.0, %v1127
      %v1129 = vpop.f32.mrf.mxu0
      %1130 = vmatprep.mubr.f32.mxu0 0.0
      %1131 = vmatmul.mubr.f32.gmra.mxu0 %v527
      %v1132 = vpop.f32.mrf.mxu0
      %v1133 = vadd.f32 0.0, %v1132
      %v1134 = vpop.f32.mrf.mxu0
      %1135 = vmatprep.mubr.f32.mxu0 0.0
      %1136 = vmatmul.mubr.f32.gmra.mxu0 %v530
      %v1137 = vpop.f32.mrf.mxu0
      %v1138 = vadd.f32 0.0, %v1137
      %v1139 = vpop.f32.mrf.mxu0
      %1140 = vmatprep.mubr.f32.mxu0 0.0
      %1141 = vmatmul.mubr.f32.gmra.mxu0 %v533
      %v1142 = vpop.f32.mrf.mxu0
      %v1143 = vadd.f32 0.0, %v1142
      %v1144 = vpop.f32.mrf.mxu0
      %1145 = vmatprep.mubr.f32.mxu0 0.0
      %1146 = vmatmul.mubr.f32.gmra.mxu0 %v536
      %v1147 = vpop.f32.mrf.mxu0
      %v1148 = vadd.f32 0.0, %v1147
      %v1149 = vpop.f32.mrf.mxu0
      %1150 = vmatprep.mubr.f32.mxu0 0.0
      %1151 = vmatmul.mubr.f32.gmra.mxu0 %v539
      %v1152 = vpop.f32.mrf.mxu0
      %v1153 = vadd.f32 0.0, %v1152
      %v1154 = vpop.f32.mrf.mxu0
      %1155 = vmatprep.mubr.f32.mxu0 0.0
      %1156 = vmatmul.mubr.f32.gmra.mxu0 %v542
      %v1157 = vpop.f32.mrf.mxu0
      %v1158 = vadd.f32 0.0, %v1157
      %v1159 = vpop.f32.mrf.mxu0
      %1160 = vmatprep.mubr.f32.mxu0 0.0
      %1161 = vmatmul.mubr.f32.gmra.mxu0 %v545
      %v1162 = vpop.f32.mrf.mxu0
      %v1163 = vadd.f32 0.0, %v1162
      %v1164 = vpop.f32.mrf.mxu0
      %1165 = vmatprep.mubr.f32.mxu0 0.0
      %1166 = vmatmul.mubr.f32.gmra.mxu0 %v548
      %v1167 = vpop.f32.mrf.mxu0
      %v1168 = vadd.f32 0.0, %v1167
      %v1169 = vpop.f32.mrf.mxu0
      %1170 = vmatprep.mubr.f32.mxu0 0.0
      %1171 = vmatmul.mubr.f32.gmra.mxu0 %v551
      %v1172 = vpop.f32.mrf.mxu0
      %v1173 = vadd.f32 0.0, %v1172
      %v1174 = vpop.f32.mrf.mxu0
      %1175 = vmatprep.mubr.f32.mxu0 0.0
      %1176 = vmatmul.mubr.f32.gmra.mxu0 %v554
      %v1177 = vpop.f32.mrf.mxu0
      %v1178 = vadd.f32 0.0, %v1177
      %v1179 = vpop.f32.mrf.mxu0
      %1180 = vmatprep.mubr.f32.mxu0 0.0
      %1181 = vmatmul.mubr.f32.gmra.mxu0 %v557
      %v1182 = vpop.f32.mrf.mxu0
      %v1183 = vadd.f32 0.0, %v1182
      %v1184 = vpop.f32.mrf.mxu0
      %1185 = vmatprep.mubr.f32.mxu0 0.0
      %1186 = vmatmul.mubr.f32.gmra.mxu0 %v560
      %v1187 = vpop.f32.mrf.mxu0
      %v1188 = vadd.f32 0.0, %v1187
      %v1189 = vpop.f32.mrf.mxu0
      %1190 = vmatprep.mubr.f32.mxu0 0.0
      %1191 = vmatmul.mubr.f32.gmra.mxu0 %v563
      %v1192 = vpop.f32.mrf.mxu0
      %v1193 = vadd.f32 0.0, %v1192
      %v1194 = vpop.f32.mrf.mxu0
      %1195 = vmatprep.mubr.f32.mxu0 0.0
      %1196 = vmatmul.mubr.f32.gmra.mxu0 %v566
      %v1197 = vpop.f32.mrf.mxu0
      %v1198 = vadd.f32 0.0, %v1197
      %v1199 = vpop.f32.mrf.mxu0
      %1200 = vmatprep.mubr.f32.mxu0 0.0
      %1201 = vmatmul.mubr.f32.gmra.mxu0 %v569
      %v1202 = vpop.f32.mrf.mxu0
      %v1203 = vadd.f32 0.0, %v1202
      %v1204 = vpop.f32.mrf.mxu0
      %1205 = vmatprep.mubr.f32.mxu0 0.0
      %1206 = vmatmul.mubr.f32.gmra.mxu0 %v572
      %v1207 = vpop.f32.mrf.mxu0
      %v1208 = vadd.f32 0.0, %v1207
      %v1209 = vpop.f32.mrf.mxu0
      %1210 = vmatprep.mubr.f32.mxu0 0.0
      %1211 = vmatmul.mubr.f32.gmra.mxu0 %v575
      %v1212 = vpop.f32.mrf.mxu0
      %v1213 = vadd.f32 0.0, %v1212
      %v1214 = vpop.f32.mrf.mxu0
      %1215 = vmatprep.mubr.f32.mxu0 0.0
      %1216 = vmatmul.mubr.f32.gmra.mxu0 %v578
      %v1217 = vpop.f32.mrf.mxu0
      %v1218 = vadd.f32 0.0, %v1217
      %v1219 = vpop.f32.mrf.mxu0
      %1220 = vmatprep.mubr.f32.mxu0 0.0
      %1221 = vmatmul.mubr.f32.gmra.mxu0 %v581
      %v1222 = vpop.f32.mrf.mxu0
      %v1223 = vadd.f32 0.0, %v1222
      %v1224 = vpop.f32.mrf.mxu0
      %1225 = vmatprep.mubr.f32.mxu0 0.0
      %1226 = vmatmul.mubr.f32.gmra.mxu0 %v584
      %v1227 = vpop.f32.mrf.mxu0
      %v1228 = vadd.f32 0.0, %v1227
      %v1229 = vpop.f32.mrf.mxu0
      %1230 = vmatprep.mubr.f32.mxu0 0.0
      %1231 = vmatmul.mubr.f32.gmra.mxu0 %v587
      %v1232 = vpop.f32.mrf.mxu0
      %v1233 = vadd.f32 0.0, %v1232
      %v1234 = vpop.f32.mrf.mxu0
      %1235 = vmatprep.mubr.f32.mxu0 0.0
      %1236 = vmatmul.mubr.f32.gmra.mxu0 %v590
      %v1237 = vpop.f32.mrf.mxu0
      %v1238 = vadd.f32 0.0, %v1237
      %v1239 = vpop.f32.mrf.mxu0
      %1240 = vmatprep.mubr.f32.mxu0 0.0
      %1241 = vmatmul.mubr.f32.gmra.mxu0 %v593
      %v1242 = vpop.f32.mrf.mxu0
      %v1243 = vadd.f32 0.0, %v1242
      %v1244 = vpop.f32.mrf.mxu0
      %1245 = vmatprep.mubr.f32.mxu0 0.0
      %1246 = vmatmul.mubr.f32.gmra.mxu0 %v596
      %v1247 = vpop.f32.mrf.mxu0
      %v1248 = vadd.f32 0.0, %v1247
      %v1249 = vpop.f32.mrf.mxu0
      %1250 = vmatprep.mubr.f32.mxu0 0.0
      %1251 = vmatmul.mubr.f32.gmra.mxu0 %v599
      %v1252 = vpop.f32.mrf.mxu0
      %v1253 = vadd.f32 0.0, %v1252
      %v1254 = vpop.f32.mrf.mxu0
      %1255 = vmatprep.mubr.f32.mxu0 0.0
      %1256 = vmatmul.mubr.f32.gmra.mxu0 %v602
      %v1257 = vpop.f32.mrf.mxu0
      %v1258 = vadd.f32 0.0, %v1257
      %v1259 = vpop.f32.mrf.mxu0
      %1260 = vmatprep.mubr.f32.mxu0 0.0
      %1261 = vmatmul.mubr.f32.gmra.mxu0 %v605
      %v1262 = vpop.f32.mrf.mxu0
      %v1263 = vadd.f32 0.0, %v1262
      %v1264 = vpop.f32.mrf.mxu0
      %1265 = vmatprep.mubr.f32.mxu0 0.0
      %1266 = vmatmul.mubr.f32.gmra.mxu0 %v608
      %v1267 = vpop.f32.mrf.mxu0
      %v1268 = vadd.f32 0.0, %v1267
      %v1269 = vpop.f32.mrf.mxu0
      %1270 = vmatprep.mubr.f32.mxu0 0.0
      %1271 = vmatmul.mubr.f32.gmra.mxu0 %v611
      %v1272 = vpop.f32.mrf.mxu0
      %v1273 = vadd.f32 0.0, %v1272
      %v1274 = vpop.f32.mrf.mxu0
      %1275 = vmatprep.mubr.f32.mxu0 0.0
      %1276 = vmatmul.mubr.f32.gmra.mxu0 %v614
      %v1277 = vpop.f32.mrf.mxu0
      %v1278 = vadd.f32 0.0, %v1277
      %v1279 = vpop.f32.mrf.mxu0
      %1280 = vmatprep.mubr.f32.mxu0 0.0
      %1281 = vmatmul.mubr.f32.gmra.mxu0 %v617
      %v1282 = vpop.f32.mrf.mxu0
      %v1283 = vadd.f32 0.0, %v1282
      %v1284 = vpop.f32.mrf.mxu0
      %1285 = vmatprep.mubr.f32.mxu0 0.0
      %1286 = vmatmul.mubr.f32.gmra.mxu0 %v620
      %v1287 = vpop.f32.mrf.mxu0
      %v1288 = vadd.f32 0.0, %v1287
      %v1289 = vpop.f32.mrf.mxu0
      %1290 = vmatprep.mubr.f32.mxu0 0.0
      %1291 = vmatmul.mubr.f32.gmra.mxu0 %v623
      %v1292 = vpop.f32.mrf.mxu0
      %v1293 = vadd.f32 0.0, %v1292
      %v1294 = vpop.f32.mrf.mxu0
      %1295 = vmatprep.mubr.f32.mxu0 0.0
      %1296 = vmatmul.mubr.f32.gmra.mxu0 %v626
      %v1297 = vpop.f32.mrf.mxu0
      %v1298 = vadd.f32 0.0, %v1297
      %v1299 = vpop.f32.mrf.mxu0
      %1300 = vmatprep.mubr.f32.mxu0 0.0
      %1301 = vmatmul.mubr.f32.gmra.mxu0 %v629
      %v1302 = vpop.f32.mrf.mxu0
      %v1303 = vadd.f32 0.0, %v1302
      %v1304 = vpop.f32.mrf.mxu0
      %1305 = vmatprep.mubr.f32.mxu0 0.0
      %1306 = vmatmul.mubr.f32.gmra.mxu0 %v632
      %v1307 = vpop.f32.mrf.mxu0
      %v1308 = vadd.f32 0.0, %v1307
      %v1309 = vpop.f32.mrf.mxu0
      %1310 = vmatprep.mubr.f32.mxu0 0.0
      %1311 = vmatmul.mubr.f32.gmra.mxu0 %v635
      %v1312 = vpop.f32.mrf.mxu0
      %v1313 = vadd.f32 0.0, %v1312
      %v1314 = vpop.f32.mrf.mxu0
      %1315 = vmatprep.mubr.f32.mxu0 0.0
      %1316 = vmatmul.mubr.f32.gmra.mxu0 %v638
      %v1317 = vpop.f32.mrf.mxu0
      %v1318 = vadd.f32 0.0, %v1317
      %v1319 = vpop.f32.mrf.mxu0
      %1320 = vmatprep.mubr.f32.mxu0 0.0
      %1321 = vmatmul.mubr.f32.gmra.mxu0 %v641
      %v1322 = vpop.f32.mrf.mxu0
      %v1323 = vadd.f32 0.0, %v1322
      %v1324 = vpop.f32.mrf.mxu0
      %1325 = vmatprep.mubr.f32.mxu0 0.0
      %1326 = vmatmul.mubr.f32.gmra.mxu0 %v644
      %v1327 = vpop.f32.mrf.mxu0
      %v1328 = vadd.f32 0.0, %v1327
      %v1329 = vpop.f32.mrf.mxu0
      %1330 = vmatprep.mubr.f32.mxu0 0.0
      %1331 = vmatmul.mubr.f32.gmra.mxu0 %v647
      %v1332 = vpop.f32.mrf.mxu0
      %v1333 = vadd.f32 0.0, %v1332
      %v1334 = vpop.f32.mrf.mxu0
      %1335 = vmatprep.mubr.f32.mxu0 0.0
      %1336 = vmatmul.mubr.f32.gmra.mxu0 %v650
      %v1337 = vpop.f32.mrf.mxu0
      %v1338 = vadd.f32 0.0, %v1337
      %v1339 = vpop.f32.mrf.mxu0
      %1340 = vmatprep.mubr.f32.mxu0 0.0
      %1341 = vmatmul.mubr.f32.gmra.mxu0 %v653
      %v1342 = vpop.f32.mrf.mxu0
      %v1343 = vadd.f32 0.0, %v1342
      %v1344 = vpop.f32.mrf.mxu0
      %1345 = vmatprep.mubr.f32.mxu0 0.0
      %1346 = vmatmul.mubr.f32.gmra.mxu0 %v656
      %v1347 = vpop.f32.mrf.mxu0
      %v1348 = vadd.f32 0.0, %v1347
      %v1349 = vpop.f32.mrf.mxu0
      %1350 = vmatprep.mubr.f32.mxu0 0.0
      %1351 = vmatmul.mubr.f32.gmra.mxu0 %v659
      %v1352 = vpop.f32.mrf.mxu0
      %v1353 = vadd.f32 0.0, %v1352
      %v1354 = vpop.f32.mrf.mxu0
      %1355 = vmatprep.mubr.f32.mxu0 0.0
      %1356 = vmatmul.mubr.f32.gmra.mxu0 %v662
      %v1357 = vpop.f32.mrf.mxu0
      %v1358 = vadd.f32 0.0, %v1357
      %v1359 = vpop.f32.mrf.mxu0
      %1360 = vmatprep.mubr.f32.mxu0 0.0
      %1361 = vmatmul.mubr.f32.gmra.mxu0 %v665
      %v1362 = vpop.f32.mrf.mxu0
      %v1363 = vadd.f32 0.0, %v1362
      %v1364 = vpop.f32.mrf.mxu0
      %1365 = vmatprep.mubr.f32.mxu0 0.0
      %1366 = vmatmul.mubr.f32.gmra.mxu0 %v668
      %v1367 = vpop.f32.mrf.mxu0
      %v1368 = vadd.f32 0.0, %v1367
      %v1369 = vpop.f32.mrf.mxu0
      %1370 = vmatprep.mubr.f32.mxu0 0.0
      %1371 = vmatmul.mubr.f32.gmra.mxu0 %v671
      %v1372 = vpop.f32.mrf.mxu0
      %v1373 = vadd.f32 0.0, %v1372
      %v1374 = vpop.f32.mrf.mxu0
      %1375 = vmatprep.mubr.f32.mxu0 0.0
      %1376 = vmatmul.mubr.f32.gmra.mxu0 %v674
      %v1377 = vpop.f32.mrf.mxu0
      %v1378 = vadd.f32 0.0, %v1377
      %v1379 = vpop.f32.mrf.mxu0
      %1380 = vdwg.mxu0
      %v1381 = vld [vmem:[%s2] sm:$0x1]
      %1382 = vmatprep.subr.mxu0 0.0
      %1383 = vmatpush1.msra.mxu0 %v818
      %1384 = vmatprep.subr.mxu0 0.0
      %1385 = vmatpush1.msra.mxu0 %v813
      %1386 = vmatprep.subr.mxu0 0.0
      %1387 = vmatpush1.msra.mxu0 %v808
      %1388 = vmatprep.subr.mxu0 0.0
      %1389 = vmatpush1.msra.mxu0 %v803
      %1390 = vmatprep.subr.mxu0 0.0
      %1391 = vmatpush1.msra.mxu0 %v798
      %1392 = vmatprep.subr.mxu0 0.0
      %1393 = vmatpush1.msra.mxu0 %v793
      %1394 = vmatprep.subr.mxu0 0.0
      %1395 = vmatpush1.msra.mxu0 %v788
      %1396 = vmatprep.subr.mxu0 0.0
      %1397 = vmatpush1.msra.mxu0 %v783
      %1398 = vmatprep.subr.mxu0 0.0
      %1399 = vmatpush1.msra.mxu0 %v778
      %1400 = vmatprep.subr.mxu0 0.0
      %1401 = vmatpush1.msra.mxu0 %v773
      %1402 = vmatprep.subr.mxu0 0.0
      %1403 = vmatpush1.msra.mxu0 %v768
      %1404 = vmatprep.subr.mxu0 0.0
      %1405 = vmatpush1.msra.mxu0 %v763
      %1406 = vmatprep.subr.mxu0 0.0
      %1407 = vmatpush1.msra.mxu0 %v758
      %1408 = vmatprep.subr.mxu0 0.0
      %1409 = vmatpush1.msra.mxu0 %v753
      %1410 = vmatprep.subr.mxu0 0.0
      %1411 = vmatpush1.msra.mxu0 %v748
      %1412 = vmatprep.subr.mxu0 0.0
      %1413 = vmatpush1.msra.mxu0 %v743
      %1414 = vmatprep.subr.mxu0 0.0
      %1415 = vmatpush2.msra.mxu0 %v898
      %1416 = vmatprep.subr.mxu0 0.0
      %1417 = vmatpush2.msra.mxu0 %v893
      %1418 = vmatprep.subr.mxu0 0.0
      %1419 = vmatpush2.msra.mxu0 %v888
      %1420 = vmatprep.subr.mxu0 0.0
      %1421 = vmatpush2.msra.mxu0 %v883
      %1422 = vmatprep.subr.mxu0 0.0
      %1423 = vmatpush2.msra.mxu0 %v878
      %1424 = vmatprep.subr.mxu0 0.0
      %1425 = vmatpush2.msra.mxu0 %v873
      %1426 = vmatprep.subr.mxu0 0.0
      %1427 = vmatpush2.msra.mxu0 %v868
      %1428 = vmatprep.subr.mxu0 0.0
      %1429 = vmatpush2.msra.mxu0 %v863
      %1430 = vmatprep.subr.mxu0 0.0
      %1431 = vmatpush2.msra.mxu0 %v858
      %1432 = vmatprep.subr.mxu0 0.0
      %1433 = vmatpush2.msra.mxu0 %v853
      %1434 = vmatprep.subr.mxu0 0.0
      %1435 = vmatpush2.msra.mxu0 %v848
      %1436 = vmatprep.subr.mxu0 0.0
      %1437 = vmatpush2.msra.mxu0 %v843
      %1438 = vmatprep.subr.mxu0 0.0
      %1439 = vmatpush2.msra.mxu0 %v838
      %1440 = vmatprep.subr.mxu0 0.0
      %1441 = vmatpush2.msra.mxu0 %v833
      %1442 = vmatprep.subr.mxu0 0.0
      %1443 = vmatpush2.msra.mxu0 %v828
      %1444 = vmatprep.subr.mxu0 0.0
      %1445 = vmatpush2.msra.mxu0 %v823
      %1446 = vmatprep.mubr.f32.mxu0 1.0
      %1447 = vmatmul.mubr.f32.gmra.mxu0 1.0
      %v1448 = vpop.f32.mrf.mxu0
      %v1449 = vadd.f32 0.0, %v1448
      %v1450 = vpop.f32.mrf.mxu0
      %1451 = vdwg.mxu0
      %1452 = vmatprep.subr.mxu0 0.0
      %1453 = vmatpush1.msra.mxu0 %v978
      %1454 = vmatprep.subr.mxu0 0.0
      %1455 = vmatpush1.msra.mxu0 %v973
      %1456 = vmatprep.subr.mxu0 0.0
      %1457 = vmatpush1.msra.mxu0 %v968
      %1458 = vmatprep.subr.mxu0 0.0
      %1459 = vmatpush1.msra.mxu0 %v963
      %1460 = vmatprep.subr.mxu0 0.0
      %1461 = vmatpush1.msra.mxu0 %v958
      %1462 = vmatprep.subr.mxu0 0.0
      %1463 = vmatpush1.msra.mxu0 %v953
      %1464 = vmatprep.subr.mxu0 0.0
      %1465 = vmatpush1.msra.mxu0 %v948
      %1466 = vmatprep.subr.mxu0 0.0
      %1467 = vmatpush1.msra.mxu0 %v943
      %1468 = vmatprep.subr.mxu0 0.0
      %1469 = vmatpush1.msra.mxu0 %v938
      %1470 = vmatprep.subr.mxu0 0.0
      %1471 = vmatpush1.msra.mxu0 %v933
      %1472 = vmatprep.subr.mxu0 0.0
      %1473 = vmatpush1.msra.mxu0 %v928
      %1474 = vmatprep.subr.mxu0 0.0
      %1475 = vmatpush1.msra.mxu0 %v923
      %1476 = vmatprep.subr.mxu0 0.0
      %1477 = vmatpush1.msra.mxu0 %v918
      %1478 = vmatprep.subr.mxu0 0.0
      %1479 = vmatpush1.msra.mxu0 %v913
      %1480 = vmatprep.subr.mxu0 0.0
      %1481 = vmatpush1.msra.mxu0 %v908
      %1482 = vmatprep.subr.mxu0 0.0
      %1483 = vmatpush1.msra.mxu0 %v903
      %1484 = vmatprep.subr.mxu0 0.0
      %1485 = vmatpush2.msra.mxu0 %v1058
      %1486 = vmatprep.subr.mxu0 0.0
      %1487 = vmatpush2.msra.mxu0 %v1053
      %1488 = vmatprep.subr.mxu0 0.0
      %1489 = vmatpush2.msra.mxu0 %v1048
      %1490 = vmatprep.subr.mxu0 0.0
      %1491 = vmatpush2.msra.mxu0 %v1043
      %1492 = vmatprep.subr.mxu0 0.0
      %1493 = vmatpush2.msra.mxu0 %v1038
      %1494 = vmatprep.subr.mxu0 0.0
      %1495 = vmatpush2.msra.mxu0 %v1033
      %1496 = vmatprep.subr.mxu0 0.0
      %1497 = vmatpush2.msra.mxu0 %v1028
      %1498 = vmatprep.subr.mxu0 0.0
      %1499 = vmatpush2.msra.mxu0 %v1023
      %1500 = vmatprep.subr.mxu0 0.0
      %1501 = vmatpush2.msra.mxu0 %v1018
      %1502 = vmatprep.subr.mxu0 0.0
      %1503 = vmatpush2.msra.mxu0 %v1013
      %1504 = vmatprep.subr.mxu0 0.0
      %1505 = vmatpush2.msra.mxu0 %v1008
      %1506 = vmatprep.subr.mxu0 0.0
      %1507 = vmatpush2.msra.mxu0 %v1003
      %1508 = vmatprep.subr.mxu0 0.0
      %1509 = vmatpush2.msra.mxu0 %v998
      %1510 = vmatprep.subr.mxu0 0.0
      %1511 = vmatpush2.msra.mxu0 %v993
      %1512 = vmatprep.subr.mxu0 0.0
      %1513 = vmatpush2.msra.mxu0 %v988
      %1514 = vmatprep.subr.mxu0 0.0
      %1515 = vmatpush2.msra.mxu0 %v983
      %1516 = vmatprep.mubr.f32.mxu0 1.0
      %1517 = vmatmul.mubr.f32.gmra.mxu0 1.0
      %v1518 = vpop.f32.mrf.mxu0
      %v1519 = vadd.f32 %v1449, %v1518
      %v1520 = vpop.f32.mrf.mxu0
      %1521 = vdwg.mxu0
      %1522 = vmatprep.subr.mxu0 0.0
      %1523 = vmatpush1.msra.mxu0 %v1138
      %1524 = vmatprep.subr.mxu0 0.0
      %1525 = vmatpush1.msra.mxu0 %v1133
      %1526 = vmatprep.subr.mxu0 0.0
      %1527 = vmatpush1.msra.mxu0 %v1128
      %1528 = vmatprep.subr.mxu0 0.0
      %1529 = vmatpush1.msra.mxu0 %v1123
      %1530 = vmatprep.subr.mxu0 0.0
      %1531 = vmatpush1.msra.mxu0 %v1118
      %1532 = vmatprep.subr.mxu0 0.0
      %1533 = vmatpush1.msra.mxu0 %v1113
      %1534 = vmatprep.subr.mxu0 0.0
      %1535 = vmatpush1.msra.mxu0 %v1108
      %1536 = vmatprep.subr.mxu0 0.0
      %1537 = vmatpush1.msra.mxu0 %v1103
      %1538 = vmatprep.subr.mxu0 0.0
      %1539 = vmatpush1.msra.mxu0 %v1098
      %1540 = vmatprep.subr.mxu0 0.0
      %1541 = vmatpush1.msra.mxu0 %v1093
      %1542 = vmatprep.subr.mxu0 0.0
      %1543 = vmatpush1.msra.mxu0 %v1088
      %1544 = vmatprep.subr.mxu0 0.0
      %1545 = vmatpush1.msra.mxu0 %v1083
      %1546 = vmatprep.subr.mxu0 0.0
      %1547 = vmatpush1.msra.mxu0 %v1078
      %1548 = vmatprep.subr.mxu0 0.0
      %1549 = vmatpush1.msra.mxu0 %v1073
      %1550 = vmatprep.subr.mxu0 0.0
      %1551 = vmatpush1.msra.mxu0 %v1068
      %1552 = vmatprep.subr.mxu0 0.0
      %1553 = vmatpush1.msra.mxu0 %v1063
      %1554 = vmatprep.subr.mxu0 0.0
      %1555 = vmatpush2.msra.mxu0 %v1218
      %1556 = vmatprep.subr.mxu0 0.0
      %1557 = vmatpush2.msra.mxu0 %v1213
      %1558 = vmatprep.subr.mxu0 0.0
      %1559 = vmatpush2.msra.mxu0 %v1208
      %1560 = vmatprep.subr.mxu0 0.0
      %1561 = vmatpush2.msra.mxu0 %v1203
      %1562 = vmatprep.subr.mxu0 0.0
      %1563 = vmatpush2.msra.mxu0 %v1198
      %1564 = vmatprep.subr.mxu0 0.0
      %1565 = vmatpush2.msra.mxu0 %v1193
      %1566 = vmatprep.subr.mxu0 0.0
      %1567 = vmatpush2.msra.mxu0 %v1188
      %1568 = vmatprep.subr.mxu0 0.0
      %1569 = vmatpush2.msra.mxu0 %v1183
      %1570 = vmatprep.subr.mxu0 0.0
      %1571 = vmatpush2.msra.mxu0 %v1178
      %1572 = vmatprep.subr.mxu0 0.0
      %1573 = vmatpush2.msra.mxu0 %v1173
      %1574 = vmatprep.subr.mxu0 0.0
      %1575 = vmatpush2.msra.mxu0 %v1168
      %1576 = vmatprep.subr.mxu0 0.0
      %1577 = vmatpush2.msra.mxu0 %v1163
      %1578 = vmatprep.subr.mxu0 0.0
      %1579 = vmatpush2.msra.mxu0 %v1158
      %1580 = vmatprep.subr.mxu0 0.0
      %1581 = vmatpush2.msra.mxu0 %v1153
      %1582 = vmatprep.subr.mxu0 0.0
      %1583 = vmatpush2.msra.mxu0 %v1148
      %1584 = vmatprep.subr.mxu0 0.0
      %1585 = vmatpush2.msra.mxu0 %v1143
      %1586 = vmatprep.mubr.f32.mxu0 1.0
      %1587 = vmatmul.mubr.f32.gmra.mxu0 1.0
      %v1588 = vpop.f32.mrf.mxu0
      %v1589 = vadd.f32 %v1519, %v1588
      %v1590 = vpop.f32.mrf.mxu0
      %1591 = vdwg.mxu0
      %1592 = vmatprep.subr.mxu0 0.0
      %1593 = vmatpush1.msra.mxu0 %v1298
      %1594 = vmatprep.subr.mxu0 0.0
      %1595 = vmatpush1.msra.mxu0 %v1293
      %1596 = vmatprep.subr.mxu0 0.0
      %1597 = vmatpush1.msra.mxu0 %v1288
      %1598 = vmatprep.subr.mxu0 0.0
      %1599 = vmatpush1.msra.mxu0 %v1283
      %1600 = vmatprep.subr.mxu0 0.0
      %1601 = vmatpush1.msra.mxu0 %v1278
      %1602 = vmatprep.subr.mxu0 0.0
      %1603 = vmatpush1.msra.mxu0 %v1273
      %1604 = vmatprep.subr.mxu0 0.0
      %1605 = vmatpush1.msra.mxu0 %v1268
      %1606 = vmatprep.subr.mxu0 0.0
      %1607 = vmatpush1.msra.mxu0 %v1263
      %1608 = vmatprep.subr.mxu0 0.0
      %1609 = vmatpush1.msra.mxu0 %v1258
      %1610 = vmatprep.subr.mxu0 0.0
      %1611 = vmatpush1.msra.mxu0 %v1253
      %1612 = vmatprep.subr.mxu0 0.0
      %1613 = vmatpush1.msra.mxu0 %v1248
      %1614 = vmatprep.subr.mxu0 0.0
      %1615 = vmatpush1.msra.mxu0 %v1243
      %1616 = vmatprep.subr.mxu0 0.0
      %1617 = vmatpush1.msra.mxu0 %v1238
      %1618 = vmatprep.subr.mxu0 0.0
      %1619 = vmatpush1.msra.mxu0 %v1233
      %1620 = vmatprep.subr.mxu0 0.0
      %1621 = vmatpush1.msra.mxu0 %v1228
      %1622 = vmatprep.subr.mxu0 0.0
      %1623 = vmatpush1.msra.mxu0 %v1223
      %1624 = vmatprep.subr.mxu0 0.0
      %1625 = vmatpush2.msra.mxu0 %v1378
      %1626 = vmatprep.subr.mxu0 0.0
      %1627 = vmatpush2.msra.mxu0 %v1373
      %1628 = vmatprep.subr.mxu0 0.0
      %1629 = vmatpush2.msra.mxu0 %v1368
      %1630 = vmatprep.subr.mxu0 0.0
      %1631 = vmatpush2.msra.mxu0 %v1363
      %1632 = vmatprep.subr.mxu0 0.0
      %1633 = vmatpush2.msra.mxu0 %v1358
      %1634 = vmatprep.subr.mxu0 0.0
      %1635 = vmatpush2.msra.mxu0 %v1353
      %1636 = vmatprep.subr.mxu0 0.0
      %1637 = vmatpush2.msra.mxu0 %v1348
      %1638 = vmatprep.subr.mxu0 0.0
      %1639 = vmatpush2.msra.mxu0 %v1343
      %1640 = vmatprep.subr.mxu0 0.0
      %1641 = vmatpush2.msra.mxu0 %v1338
      %1642 = vmatprep.subr.mxu0 0.0
      %1643 = vmatpush2.msra.mxu0 %v1333
      %1644 = vmatprep.subr.mxu0 0.0
      %1645 = vmatpush2.msra.mxu0 %v1328
      %1646 = vmatprep.subr.mxu0 0.0
      %1647 = vmatpush2.msra.mxu0 %v1323
      %1648 = vmatprep.subr.mxu0 0.0
      %1649 = vmatpush2.msra.mxu0 %v1318
      %1650 = vmatprep.subr.mxu0 0.0
      %1651 = vmatpush2.msra.mxu0 %v1313
      %1652 = vmatprep.subr.mxu0 0.0
      %1653 = vmatpush2.msra.mxu0 %v1308
      %1654 = vmatprep.subr.mxu0 0.0
      %1655 = vmatpush2.msra.mxu0 %v1303
      %1656 = vmatprep.mubr.f32.mxu0 1.0
      %1657 = vmatmul.mubr.f32.gmra.mxu0 1.0
      %v1658 = vpop.f32.mrf.mxu0
      %v1659 = vadd.f32 %v1589, %v1658
      %v1660 = vpop.f32.mrf.mxu0
      %1661 = vdwg.mxu0
      %v1662 = vadd.f32 %v1381, %v1659
      %1663 = vst [vmem:[%s2] sm:$0x1] %v1662
      %v1664 = vld [vmem:[%s3] sm:$0x1]
      %v1665 = vmul.f32 %v743, %v743
      %v1666 = vmul.f32 %v748, %v748
      %v1667 = vmul.f32 %v753, %v753
      %v1668 = vmul.f32 %v758, %v758
      %v1669 = vmul.f32 %v763, %v763
      %v1670 = vmul.f32 %v768, %v768
      %v1671 = vmul.f32 %v773, %v773
      %v1672 = vmul.f32 %v778, %v778
      %v1673 = vmul.f32 %v783, %v783
      %v1674 = vmul.f32 %v788, %v788
      %v1675 = vmul.f32 %v793, %v793
      %v1676 = vmul.f32 %v798, %v798
      %v1677 = vmul.f32 %v803, %v803
      %v1678 = vmul.f32 %v808, %v808
      %v1679 = vmul.f32 %v813, %v813
      %v1680 = vmul.f32 %v818, %v818
      %v1681 = vmul.f32 %v823, %v823
      %v1682 = vmul.f32 %v828, %v828
      %v1683 = vmul.f32 %v833, %v833
      %v1684 = vmul.f32 %v838, %v838
      %v1685 = vmul.f32 %v843, %v843
      %v1686 = vmul.f32 %v848, %v848
      %v1687 = vmul.f32 %v853, %v853
      %v1688 = vmul.f32 %v858, %v858
      %v1689 = vmul.f32 %v863, %v863
      %v1690 = vmul.f32 %v868, %v868
      %v1691 = vmul.f32 %v873, %v873
      %v1692 = vmul.f32 %v878, %v878
      %v1693 = vmul.f32 %v883, %v883
      %v1694 = vmul.f32 %v888, %v888
      %v1695 = vmul.f32 %v893, %v893
      %v1696 = vmul.f32 %v898, %v898
      %v1697 = vmul.f32 %v903, %v903
      %v1698 = vmul.f32 %v908, %v908
      %v1699 = vmul.f32 %v913, %v913
      %v1700 = vmul.f32 %v918, %v918
      %v1701 = vmul.f32 %v923, %v923
      %v1702 = vmul.f32 %v928, %v928
      %v1703 = vmul.f32 %v933, %v933
      %v1704 = vmul.f32 %v938, %v938
      %v1705 = vmul.f32 %v943, %v943
      %v1706 = vmul.f32 %v948, %v948
      %v1707 = vmul.f32 %v953, %v953
      %v1708 = vmul.f32 %v958, %v958
      %v1709 = vmul.f32 %v963, %v963
      %v1710 = vmul.f32 %v968, %v968
      %v1711 = vmul.f32 %v973, %v973
      %v1712 = vmul.f32 %v978, %v978
      %v1713 = vmul.f32 %v983, %v983
      %v1714 = vmul.f32 %v988, %v988
      %v1715 = vmul.f32 %v993, %v993
      %v1716 = vmul.f32 %v998, %v998
      %v1717 = vmul.f32 %v1003, %v1003
      %v1718 = vmul.f32 %v1008, %v1008
      %v1719 = vmul.f32 %v1013, %v1013
      %v1720 = vmul.f32 %v1018, %v1018
      %v1721 = vmul.f32 %v1023, %v1023
      %v1722 = vmul.f32 %v1028, %v1028
      %v1723 = vmul.f32 %v1033, %v1033
      %v1724 = vmul.f32 %v1038, %v1038
      %v1725 = vmul.f32 %v1043, %v1043
      %v1726 = vmul.f32 %v1048, %v1048
      %v1727 = vmul.f32 %v1053, %v1053
      %v1728 = vmul.f32 %v1058, %v1058
      %v1729 = vmul.f32 %v1063, %v1063
      %v1730 = vmul.f32 %v1068, %v1068
      %v1731 = vmul.f32 %v1073, %v1073
      %v1732 = vmul.f32 %v1078, %v1078
      %v1733 = vmul.f32 %v1083, %v1083
      %v1734 = vmul.f32 %v1088, %v1088
      %v1735 = vmul.f32 %v1093, %v1093
      %v1736 = vmul.f32 %v1098, %v1098
      %v1737 = vmul.f32 %v1103, %v1103
      %v1738 = vmul.f32 %v1108, %v1108
      %v1739 = vmul.f32 %v1113, %v1113
      %v1740 = vmul.f32 %v1118, %v1118
      %v1741 = vmul.f32 %v1123, %v1123
      %v1742 = vmul.f32 %v1128, %v1128
      %v1743 = vmul.f32 %v1133, %v1133
      %v1744 = vmul.f32 %v1138, %v1138
      %v1745 = vmul.f32 %v1143, %v1143
      %v1746 = vmul.f32 %v1148, %v1148
      %v1747 = vmul.f32 %v1153, %v1153
      %v1748 = vmul.f32 %v1158, %v1158
      %v1749 = vmul.f32 %v1163, %v1163
      %v1750 = vmul.f32 %v1168, %v1168
      %v1751 = vmul.f32 %v1173, %v1173
      %v1752 = vmul.f32 %v1178, %v1178
      %v1753 = vmul.f32 %v1183, %v1183
      %v1754 = vmul.f32 %v1188, %v1188
      %v1755 = vmul.f32 %v1193, %v1193
      %v1756 = vmul.f32 %v1198, %v1198
      %v1757 = vmul.f32 %v1203, %v1203
      %v1758 = vmul.f32 %v1208, %v1208
      %v1759 = vmul.f32 %v1213, %v1213
      %v1760 = vmul.f32 %v1218, %v1218
      %v1761 = vmul.f32 %v1223, %v1223
      %v1762 = vmul.f32 %v1228, %v1228
      %v1763 = vmul.f32 %v1233, %v1233
      %v1764 = vmul.f32 %v1238, %v1238
      %v1765 = vmul.f32 %v1243, %v1243
      %v1766 = vmul.f32 %v1248, %v1248
      %v1767 = vmul.f32 %v1253, %v1253
      %v1768 = vmul.f32 %v1258, %v1258
      %v1769 = vmul.f32 %v1263, %v1263
      %v1770 = vmul.f32 %v1268, %v1268
      %v1771 = vmul.f32 %v1273, %v1273
      %v1772 = vmul.f32 %v1278, %v1278
      %v1773 = vmul.f32 %v1283, %v1283
      %v1774 = vmul.f32 %v1288, %v1288
      %v1775 = vmul.f32 %v1293, %v1293
      %v1776 = vmul.f32 %v1298, %v1298
      %v1777 = vmul.f32 %v1303, %v1303
      %v1778 = vmul.f32 %v1308, %v1308
      %v1779 = vmul.f32 %v1313, %v1313
      %v1780 = vmul.f32 %v1318, %v1318
      %v1781 = vmul.f32 %v1323, %v1323
      %v1782 = vmul.f32 %v1328, %v1328
      %v1783 = vmul.f32 %v1333, %v1333
      %v1784 = vmul.f32 %v1338, %v1338
      %v1785 = vmul.f32 %v1343, %v1343
      %v1786 = vmul.f32 %v1348, %v1348
      %v1787 = vmul.f32 %v1353, %v1353
      %v1788 = vmul.f32 %v1358, %v1358
      %v1789 = vmul.f32 %v1363, %v1363
      %v1790 = vmul.f32 %v1368, %v1368
      %v1791 = vmul.f32 %v1373, %v1373
      %v1792 = vmul.f32 %v1378, %v1378
      %1793 = vmatprep.subr.mxu0 0.0
      %1794 = vmatpush1.msra.mxu0 %v1680
      %1795 = vmatprep.subr.mxu0 0.0
      %1796 = vmatpush1.msra.mxu0 %v1679
      %1797 = vmatprep.subr.mxu0 0.0
      %1798 = vmatpush1.msra.mxu0 %v1678
      %1799 = vmatprep.subr.mxu0 0.0
      %1800 = vmatpush1.msra.mxu0 %v1677
      %1801 = vmatprep.subr.mxu0 0.0
      %1802 = vmatpush1.msra.mxu0 %v1676
      %1803 = vmatprep.subr.mxu0 0.0
      %1804 = vmatpush1.msra.mxu0 %v1675
      %1805 = vmatprep.subr.mxu0 0.0
      %1806 = vmatpush1.msra.mxu0 %v1674
      %1807 = vmatprep.subr.mxu0 0.0
      %1808 = vmatpush1.msra.mxu0 %v1673
      %1809 = vmatprep.subr.mxu0 0.0
      %1810 = vmatpush1.msra.mxu0 %v1672
      %1811 = vmatprep.subr.mxu0 0.0
      %1812 = vmatpush1.msra.mxu0 %v1671
      %1813 = vmatprep.subr.mxu0 0.0
      %1814 = vmatpush1.msra.mxu0 %v1670
      %1815 = vmatprep.subr.mxu0 0.0
      %1816 = vmatpush1.msra.mxu0 %v1669
      %1817 = vmatprep.subr.mxu0 0.0
      %1818 = vmatpush1.msra.mxu0 %v1668
      %1819 = vmatprep.subr.mxu0 0.0
      %1820 = vmatpush1.msra.mxu0 %v1667
      %1821 = vmatprep.subr.mxu0 0.0
      %1822 = vmatpush1.msra.mxu0 %v1666
      %1823 = vmatprep.subr.mxu0 0.0
      %1824 = vmatpush1.msra.mxu0 %v1665
      %1825 = vmatprep.subr.mxu0 0.0
      %1826 = vmatpush2.msra.mxu0 %v1696
      %1827 = vmatprep.subr.mxu0 0.0
      %1828 = vmatpush2.msra.mxu0 %v1695
      %1829 = vmatprep.subr.mxu0 0.0
      %1830 = vmatpush2.msra.mxu0 %v1694
      %1831 = vmatprep.subr.mxu0 0.0
      %1832 = vmatpush2.msra.mxu0 %v1693
      %1833 = vmatprep.subr.mxu0 0.0
      %1834 = vmatpush2.msra.mxu0 %v1692
      %1835 = vmatprep.subr.mxu0 0.0
      %1836 = vmatpush2.msra.mxu0 %v1691
      %1837 = vmatprep.subr.mxu0 0.0
      %1838 = vmatpush2.msra.mxu0 %v1690
      %1839 = vmatprep.subr.mxu0 0.0
      %1840 = vmatpush2.msra.mxu0 %v1689
      %1841 = vmatprep.subr.mxu0 0.0
      %1842 = vmatpush2.msra.mxu0 %v1688
      %1843 = vmatprep.subr.mxu0 0.0
      %1844 = vmatpush2.msra.mxu0 %v1687
      %1845 = vmatprep.subr.mxu0 0.0
      %1846 = vmatpush2.msra.mxu0 %v1686
      %1847 = vmatprep.subr.mxu0 0.0
      %1848 = vmatpush2.msra.mxu0 %v1685
      %1849 = vmatprep.subr.mxu0 0.0
      %1850 = vmatpush2.msra.mxu0 %v1684
      %1851 = vmatprep.subr.mxu0 0.0
      %1852 = vmatpush2.msra.mxu0 %v1683
      %1853 = vmatprep.subr.mxu0 0.0
      %1854 = vmatpush2.msra.mxu0 %v1682
      %1855 = vmatprep.subr.mxu0 0.0
      %1856 = vmatpush2.msra.mxu0 %v1681
      %1857 = vmatprep.mubr.f32.mxu0 1.0
      %1858 = vmatmul.mubr.f32.gmra.mxu0 1.0
      %v1859 = vpop.f32.mrf.mxu0
      %v1860 = vadd.f32 0.0, %v1859
      %v1861 = vpop.f32.mrf.mxu0
      %1862 = vdwg.mxu0
      %1863 = vmatprep.subr.mxu0 0.0
      %1864 = vmatpush1.msra.mxu0 %v1712
      %1865 = vmatprep.subr.mxu0 0.0
      %1866 = vmatpush1.msra.mxu0 %v1711
      %1867 = vmatprep.subr.mxu0 0.0
      %1868 = vmatpush1.msra.mxu0 %v1710
      %1869 = vmatprep.subr.mxu0 0.0
      %1870 = vmatpush1.msra.mxu0 %v1709
      %1871 = vmatprep.subr.mxu0 0.0
      %1872 = vmatpush1.msra.mxu0 %v1708
      %1873 = vmatprep.subr.mxu0 0.0
      %1874 = vmatpush1.msra.mxu0 %v1707
      %1875 = vmatprep.subr.mxu0 0.0
      %1876 = vmatpush1.msra.mxu0 %v1706
      %1877 = vmatprep.subr.mxu0 0.0
      %1878 = vmatpush1.msra.mxu0 %v1705
      %1879 = vmatprep.subr.mxu0 0.0
      %1880 = vmatpush1.msra.mxu0 %v1704
      %1881 = vmatprep.subr.mxu0 0.0
      %1882 = vmatpush1.msra.mxu0 %v1703
      %1883 = vmatprep.subr.mxu0 0.0
      %1884 = vmatpush1.msra.mxu0 %v1702
      %1885 = vmatprep.subr.mxu0 0.0
      %1886 = vmatpush1.msra.mxu0 %v1701
      %1887 = vmatprep.subr.mxu0 0.0
      %1888 = vmatpush1.msra.mxu0 %v1700
      %1889 = vmatprep.subr.mxu0 0.0
      %1890 = vmatpush1.msra.mxu0 %v1699
      %1891 = vmatprep.subr.mxu0 0.0
      %1892 = vmatpush1.msra.mxu0 %v1698
      %1893 = vmatprep.subr.mxu0 0.0
      %1894 = vmatpush1.msra.mxu0 %v1697
      %1895 = vmatprep.subr.mxu0 0.0
      %1896 = vmatpush2.msra.mxu0 %v1728
      %1897 = vmatprep.subr.mxu0 0.0
      %1898 = vmatpush2.msra.mxu0 %v1727
      %1899 = vmatprep.subr.mxu0 0.0
      %1900 = vmatpush2.msra.mxu0 %v1726
      %1901 = vmatprep.subr.mxu0 0.0
      %1902 = vmatpush2.msra.mxu0 %v1725
      %1903 = vmatprep.subr.mxu0 0.0
      %1904 = vmatpush2.msra.mxu0 %v1724
      %1905 = vmatprep.subr.mxu0 0.0
      %1906 = vmatpush2.msra.mxu0 %v1723
      %1907 = vmatprep.subr.mxu0 0.0
      %1908 = vmatpush2.msra.mxu0 %v1722
      %1909 = vmatprep.subr.mxu0 0.0
      %1910 = vmatpush2.msra.mxu0 %v1721
      %1911 = vmatprep.subr.mxu0 0.0
      %1912 = vmatpush2.msra.mxu0 %v1720
      %1913 = vmatprep.subr.mxu0 0.0
      %1914 = vmatpush2.msra.mxu0 %v1719
      %1915 = vmatprep.subr.mxu0 0.0
      %1916 = vmatpush2.msra.mxu0 %v1718
      %1917 = vmatprep.subr.mxu0 0.0
      %1918 = vmatpush2.msra.mxu0 %v1717
      %1919 = vmatprep.subr.mxu0 0.0
      %1920 = vmatpush2.msra.mxu0 %v1716
      %1921 = vmatprep.subr.mxu0 0.0
      %1922 = vmatpush2.msra.mxu0 %v1715
      %1923 = vmatprep.subr.mxu0 0.0
      %1924 = vmatpush2.msra.mxu0 %v1714
      %1925 = vmatprep.subr.mxu0 0.0
      %1926 = vmatpush2.msra.mxu0 %v1713
      %1927 = vmatprep.mubr.f32.mxu0 1.0
      %1928 = vmatmul.mubr.f32.gmra.mxu0 1.0
      %v1929 = vpop.f32.mrf.mxu0
      %v1930 = vadd.f32 %v1860, %v1929
      %v1931 = vpop.f32.mrf.mxu0
      %1932 = vdwg.mxu0
      %1933 = vmatprep.subr.mxu0 0.0
      %1934 = vmatpush1.msra.mxu0 %v1744
      %1935 = vmatprep.subr.mxu0 0.0
      %1936 = vmatpush1.msra.mxu0 %v1743
      %1937 = vmatprep.subr.mxu0 0.0
      %1938 = vmatpush1.msra.mxu0 %v1742
      %1939 = vmatprep.subr.mxu0 0.0
      %1940 = vmatpush1.msra.mxu0 %v1741
      %1941 = vmatprep.subr.mxu0 0.0
      %1942 = vmatpush1.msra.mxu0 %v1740
      %1943 = vmatprep.subr.mxu0 0.0
      %1944 = vmatpush1.msra.mxu0 %v1739
      %1945 = vmatprep.subr.mxu0 0.0
      %1946 = vmatpush1.msra.mxu0 %v1738
      %1947 = vmatprep.subr.mxu0 0.0
      %1948 = vmatpush1.msra.mxu0 %v1737
      %1949 = vmatprep.subr.mxu0 0.0
      %1950 = vmatpush1.msra.mxu0 %v1736
      %1951 = vmatprep.subr.mxu0 0.0
      %1952 = vmatpush1.msra.mxu0 %v1735
      %1953 = vmatprep.subr.mxu0 0.0
      %1954 = vmatpush1.msra.mxu0 %v1734
      %1955 = vmatprep.subr.mxu0 0.0
      %1956 = vmatpush1.msra.mxu0 %v1733
      %1957 = vmatprep.subr.mxu0 0.0
      %1958 = vmatpush1.msra.mxu0 %v1732
      %1959 = vmatprep.subr.mxu0 0.0
      %1960 = vmatpush1.msra.mxu0 %v1731
      %1961 = vmatprep.subr.mxu0 0.0
      %1962 = vmatpush1.msra.mxu0 %v1730
      %1963 = vmatprep.subr.mxu0 0.0
      %1964 = vmatpush1.msra.mxu0 %v1729
      %1965 = vmatprep.subr.mxu0 0.0
      %1966 = vmatpush2.msra.mxu0 %v1760
      %1967 = vmatprep.subr.mxu0 0.0
      %1968 = vmatpush2.msra.mxu0 %v1759
      %1969 = vmatprep.subr.mxu0 0.0
      %1970 = vmatpush2.msra.mxu0 %v1758
      %1971 = vmatprep.subr.mxu0 0.0
      %1972 = vmatpush2.msra.mxu0 %v1757
      %1973 = vmatprep.subr.mxu0 0.0
      %1974 = vmatpush2.msra.mxu0 %v1756
      %1975 = vmatprep.subr.mxu0 0.0
      %1976 = vmatpush2.msra.mxu0 %v1755
      %1977 = vmatprep.subr.mxu0 0.0
      %1978 = vmatpush2.msra.mxu0 %v1754
      %1979 = vmatprep.subr.mxu0 0.0
      %1980 = vmatpush2.msra.mxu0 %v1753
      %1981 = vmatprep.subr.mxu0 0.0
      %1982 = vmatpush2.msra.mxu0 %v1752
      %1983 = vmatprep.subr.mxu0 0.0
      %1984 = vmatpush2.msra.mxu0 %v1751
      %1985 = vmatprep.subr.mxu0 0.0
      %1986 = vmatpush2.msra.mxu0 %v1750
      %1987 = vmatprep.subr.mxu0 0.0
      %1988 = vmatpush2.msra.mxu0 %v1749
      %1989 = vmatprep.subr.mxu0 0.0
      %1990 = vmatpush2.msra.mxu0 %v1748
      %1991 = vmatprep.subr.mxu0 0.0
      %1992 = vmatpush2.msra.mxu0 %v1747
      %1993 = vmatprep.subr.mxu0 0.0
      %1994 = vmatpush2.msra.mxu0 %v1746
      %1995 = vmatprep.subr.mxu0 0.0
      %1996 = vmatpush2.msra.mxu0 %v1745
      %1997 = vmatprep.mubr.f32.mxu0 1.0
      %1998 = vmatmul.mubr.f32.gmra.mxu0 1.0
      %v1999 = vpop.f32.mrf.mxu0
      %v2000 = vadd.f32 %v1930, %v1999
      %v2001 = vpop.f32.mrf.mxu0
      %2002 = vdwg.mxu0
      %2003 = vmatprep.subr.mxu0 0.0
      %2004 = vmatpush1.msra.mxu0 %v1776
      %2005 = vmatprep.subr.mxu0 0.0
      %2006 = vmatpush1.msra.mxu0 %v1775
      %2007 = vmatprep.subr.mxu0 0.0
      %2008 = vmatpush1.msra.mxu0 %v1774
      %2009 = vmatprep.subr.mxu0 0.0
      %2010 = vmatpush1.msra.mxu0 %v1773
      %2011 = vmatprep.subr.mxu0 0.0
      %2012 = vmatpush1.msra.mxu0 %v1772
      %2013 = vmatprep.subr.mxu0 0.0
      %2014 = vmatpush1.msra.mxu0 %v1771
      %2015 = vmatprep.subr.mxu0 0.0
      %2016 = vmatpush1.msra.mxu0 %v1770
      %2017 = vmatprep.subr.mxu0 0.0
      %2018 = vmatpush1.msra.mxu0 %v1769
      %2019 = vmatprep.subr.mxu0 0.0
      %2020 = vmatpush1.msra.mxu0 %v1768
      %2021 = vmatprep.subr.mxu0 0.0
      %2022 = vmatpush1.msra.mxu0 %v1767
      %2023 = vmatprep.subr.mxu0 0.0
      %2024 = vmatpush1.msra.mxu0 %v1766
      %2025 = vmatprep.subr.mxu0 0.0
      %2026 = vmatpush1.msra.mxu0 %v1765
      %2027 = vmatprep.subr.mxu0 0.0
      %2028 = vmatpush1.msra.mxu0 %v1764
      %2029 = vmatprep.subr.mxu0 0.0
      %2030 = vmatpush1.msra.mxu0 %v1763
      %2031 = vmatprep.subr.mxu0 0.0
      %2032 = vmatpush1.msra.mxu0 %v1762
      %2033 = vmatprep.subr.mxu0 0.0
      %2034 = vmatpush1.msra.mxu0 %v1761
      %2035 = vmatprep.subr.mxu0 0.0
      %2036 = vmatpush2.msra.mxu0 %v1792
      %2037 = vmatprep.subr.mxu0 0.0
      %2038 = vmatpush2.msra.mxu0 %v1791
      %2039 = vmatprep.subr.mxu0 0.0
      %2040 = vmatpush2.msra.mxu0 %v1790
      %2041 = vmatprep.subr.mxu0 0.0
      %2042 = vmatpush2.msra.mxu0 %v1789
      %2043 = vmatprep.subr.mxu0 0.0
      %2044 = vmatpush2.msra.mxu0 %v1788
      %2045 = vmatprep.subr.mxu0 0.0
      %2046 = vmatpush2.msra.mxu0 %v1787
      %2047 = vmatprep.subr.mxu0 0.0
      %2048 = vmatpush2.msra.mxu0 %v1786
      %2049 = vmatprep.subr.mxu0 0.0
      %2050 = vmatpush2.msra.mxu0 %v1785
      %2051 = vmatprep.subr.mxu0 0.0
      %2052 = vmatpush2.msra.mxu0 %v1784
      %2053 = vmatprep.subr.mxu0 0.0
      %2054 = vmatpush2.msra.mxu0 %v1783
      %2055 = vmatprep.subr.mxu0 0.0
      %2056 = vmatpush2.msra.mxu0 %v1782
      %2057 = vmatprep.subr.mxu0 0.0
      %2058 = vmatpush2.msra.mxu0 %v1781
      %2059 = vmatprep.subr.mxu0 0.0
      %2060 = vmatpush2.msra.mxu0 %v1780
      %2061 = vmatprep.subr.mxu0 0.0
      %2062 = vmatpush2.msra.mxu0 %v1779
      %2063 = vmatprep.subr.mxu0 0.0
      %2064 = vmatpush2.msra.mxu0 %v1778
      %2065 = vmatprep.subr.mxu0 0.0
      %2066 = vmatpush2.msra.mxu0 %v1777
      %2067 = vmatprep.mubr.f32.mxu0 1.0
      %2068 = vmatmul.mubr.f32.gmra.mxu0 1.0
      %v2069 = vpop.f32.mrf.mxu0
      %v2070 = vadd.f32 %v2000, %v2069
      %v2071 = vpop.f32.mrf.mxu0
      %2072 = vdwg.mxu0
      %v2073 = vadd.f32 %v1664, %v2070
      %2074 = vst [vmem:[%s3] sm:$0x1] %v2073
      // Predicated region
      $region33: #{decoder_module.2} parent=27 // pred_check
        %p2075 = pneg %p75
      $region34: #{decoder_module.2} parent=27 // pred_check_branch
        %2077 = sbr.rel (%p2075) target = $region36
      $region35: #{decoder_module.2} parent=27 // pred_region
        _
      $region36: #{decoder_module.2} parent=27 // pred_fallthru
        _
      // Predicated region
      $region37: #{decoder_module.2} parent=27 // pred_check
        %p2078 = pneg %p96
      $region38: #{decoder_module.2} parent=27 // pred_check_branch
        %2080 = sbr.rel (%p2078) target = $region40
      $region39: #{decoder_module.2} parent=27 // pred_region
        _
      $region40: #{decoder_module.2} parent=27 // pred_fallthru
        _
      // Predicated region
      $region41: #{decoder_module.2} parent=27 // pred_check
        %p2081 = pneg %p75
      $region42: #{decoder_module.2} parent=27 // pred_check_branch
        %2083 = sbr.rel (%p2081) target = $region44
      $region43: #{decoder_module.2} parent=27 // pred_region
        _
      $region44: #{decoder_module.2} parent=27 // pred_fallthru
        _
      // Predicated region
      $region45: #{decoder_module.2} parent=27 // pred_check
        %p2084 = pneg %p96
      $region46: #{decoder_module.2} parent=27 // pred_check_branch
        %2086 = sbr.rel (%p2084) target = $region48
      $region47: #{decoder_module.2} parent=27 // pred_region
        _
      $region48: #{decoder_module.2} parent=27 // pred_fallthru
        _
    $region28: #{decoder_module.2} parent=5 // pred_fallthru
      _
    %p2087 = scmp.le.s32.totalorder 2, %s10
    // Predicated region
    $region49: #{decoder_module.2} parent=5 // pred_check
      %p2088 = pneg %p2087
    $region50: #{decoder_module.2} parent=5 // pred_check_branch
      %2090 = sbr.rel (%p2088) target = $region52
    $region51: #{decoder_module.2} parent=5 // pred_region
      %s2091 = ssub.s32 %s10, 2
    $region52: #{decoder_module.2} parent=5 // pred_fallthru
      _
  $region6: #{decoder_module.2} parent=0 // loop_footer
    %s14 = sadd.s32 1, %s10
  $region7: #{decoder_module.2} parent=0 // loop_footer_branch
    %9 = sbr.rel target = $region3
  $region8: #{decoder_module.2} parent=0 // loop_exit
    _

// kernel: decoder_module.3
$region0: #{decoder_module.3}
  #allocation0 [shape = 'u32[]', space=smem, size = 0x4, offset = 0x4, fixed_abs, tag = 'smem constant byte address 0x4 - core index']
  #allocation1 [shape = 'u32[144,128]{1,0:T(1,128)}', space=vmem, size = 0x12000, scoped, tag = 'internal scratch']
  %s0 = inlined_call_operand.vmem [shape: f32[2048,8], index: 0, kind: input, shape index: {}]
  %s1 = inlined_call_operand.vmem [shape: f32[8,128], index: 1, kind: input, shape index: {}]
  %s2 = inlined_call_operand.vmem [shape: f32[1,128], index: 2, kind: input, shape index: {}]
  %s3 = inlined_call_operand.vmem [shape: f32[1,128], index: 3, kind: input, shape index: {}]
  %s4 = inlined_call_operand.vmem [shape: f32[2048,128], index: 4, kind: output, shape index: {}]
  %s5 = sld [smem:[#allocation0]]
  $region49: #{decoder_module.3} parent=0
    _
  %s7 = ssub.s32 1, %s5
  %s8 = scalar_select 0, %s7, %s5
  loop: start=0, step=1, limit=4
  $region2: #{decoder_module.3} parent=0 // loop_pre_header
    _
  $region3: #{decoder_module.3} parent=0 // loop_header
    %s10 = sphi 0, %s14
    %p11 = scmp.ge.s32.totalorder %s10, 4
    %s20 = sphi 0, %s22
    %s23 = sphi 0, %s20
    %s24 = sphi 0, %s23
    %s40 = sphi 0, %s24
    %s44 = sphi 0, %s44
    %s46 = sphi 0, %s44
    %s47 = sphi 0, %s46
    %s61 = sphi 0, %s47
    %s65 = sphi 0, %s65
    %s67 = sphi 0, %s65
    %s68 = sphi 0, %s67
    %s82 = sphi 0, %s68
    %s86 = sphi 0, %s86
    %s88 = sphi 0, %s86
    %s89 = sphi 0, %s88
    %s103 = sphi 0, %s89
    %s109 = sphi 0, %s111
    %s112 = sphi 0, %s109
    %s113 = sphi 0, %s112
    %s129 = sphi 0, %s113
  $region4: #{decoder_module.3} parent=0 // loop_header_branch
    %13 = sbr.rel (%p11) target = $region8
  $region5: #{decoder_module.3} parent=0 // loop_body
    %s15 = ssub.s32 %s10, 1
    %s16 = ssub.s32 %s10, 2
    %s17 = sadd.s32 %s10, 1
    %s18 = ssub.s32 %s10, %s17
    %p19 = scmp.eq.s32.totalorder %s18, 0
    %s21 = sadd.s32 %s20, 1
    %s22 = scalar_select %p19, %s20, %s21
    %p25 = pneg %p19
    %p26 = scmp.eq.s32.totalorder %s10, 1
    %p27 = por %p25, %p26
    %p28 = scmp.ne.s32.totalorder %s20, %s23
    %p29 = scmp.eq.s32.totalorder %s10, 0
    %p30 = por %p28, %p29
    %p31 = scmp.ne.s32.totalorder %s20, %s23
    %p32 = scmp.eq.s32.totalorder %s15, 1
    %p33 = por %p31, %p32
    %p34 = scmp.ne.s32.totalorder %s23, %s24
    %p35 = scmp.eq.s32.totalorder %s15, 0
    %p36 = por %p34, %p35
    %p37 = scmp.ne.s32.totalorder %s23, %s24
    %p38 = scmp.eq.s32.totalorder %s16, 1
    %p39 = por %p37, %p38
    %p41 = scmp.ne.s32.totalorder %s24, %s40
    %p42 = scmp.eq.s32.totalorder %s16, 0
    %p43 = por %p41, %p42
    %s45 = sadd.s32 %s44, 1
    %p48 = scmp.eq.s32.totalorder %s10, 1
    %p49 = scmp.ne.s32.totalorder %s44, %s46
    %p50 = scmp.eq.s32.totalorder %s10, 0
    %p51 = por %p49, %p50
    %p52 = scmp.ne.s32.totalorder %s44, %s46
    %p53 = scmp.eq.s32.totalorder %s15, 1
    %p54 = por %p52, %p53
    %p55 = scmp.ne.s32.totalorder %s46, %s47
    %p56 = scmp.eq.s32.totalorder %s15, 0
    %p57 = por %p55, %p56
    %p58 = scmp.ne.s32.totalorder %s46, %s47
    %p59 = scmp.eq.s32.totalorder %s16, 1
    %p60 = por %p58, %p59
    %p62 = scmp.ne.s32.totalorder %s47, %s61
    %p63 = scmp.eq.s32.totalorder %s16, 0
    %p64 = por %p62, %p63
    %s66 = sadd.s32 %s65, 1
    %p69 = scmp.eq.s32.totalorder %s10, 1
    %p70 = scmp.ne.s32.totalorder %s65, %s67
    %p71 = scmp.eq.s32.totalorder %s10, 0
    %p72 = por %p70, %p71
    %p73 = scmp.ne.s32.totalorder %s65, %s67
    %p74 = scmp.eq.s32.totalorder %s15, 1
    %p75 = por %p73, %p74
    %p76 = scmp.ne.s32.totalorder %s67, %s68
    %p77 = scmp.eq.s32.totalorder %s15, 0
    %p78 = por %p76, %p77
    %p79 = scmp.ne.s32.totalorder %s67, %s68
    %p80 = scmp.eq.s32.totalorder %s16, 1
    %p81 = por %p79, %p80
    %p83 = scmp.ne.s32.totalorder %s68, %s82
    %p84 = scmp.eq.s32.totalorder %s16, 0
    %p85 = por %p83, %p84
    %s87 = sadd.s32 %s86, 1
    %p90 = scmp.eq.s32.totalorder %s10, 1
    %p91 = scmp.ne.s32.totalorder %s86, %s88
    %p92 = scmp.eq.s32.totalorder %s10, 0
    %p93 = por %p91, %p92
    %p94 = scmp.ne.s32.totalorder %s86, %s88
    %p95 = scmp.eq.s32.totalorder %s15, 1
    %p96 = por %p94, %p95
    %p97 = scmp.ne.s32.totalorder %s88, %s89
    %p98 = scmp.eq.s32.totalorder %s15, 0
    %p99 = por %p97, %p98
    %p100 = scmp.ne.s32.totalorder %s88, %s89
    %p101 = scmp.eq.s32.totalorder %s16, 1
    %p102 = por %p100, %p101
    %p104 = scmp.ne.s32.totalorder %s89, %s103
    %p105 = scmp.eq.s32.totalorder %s16, 0
    %p106 = por %p104, %p105
    %s107 = ssub.s32 %s10, %s17
    %p108 = scmp.eq.s32.totalorder %s107, 0
    %s110 = sadd.s32 %s109, 1
    %s111 = scalar_select %p108, %s109, %s110
    %p114 = pneg %p108
    %p115 = scmp.eq.s32.totalorder %s10, 1
    %p116 = por %p114, %p115
    %p117 = scmp.ne.s32.totalorder %s109, %s112
    %p118 = scmp.eq.s32.totalorder %s10, 0
    %p119 = por %p117, %p118
    %p120 = scmp.ne.s32.totalorder %s109, %s112
    %p121 = scmp.eq.s32.totalorder %s15, 1
    %p122 = por %p120, %p121
    %p123 = scmp.ne.s32.totalorder %s112, %s113
    %p124 = scmp.eq.s32.totalorder %s15, 0
    %p125 = por %p123, %p124
    %p126 = scmp.ne.s32.totalorder %s112, %s113
    %p127 = scmp.eq.s32.totalorder %s16, 1
    %p128 = por %p126, %p127
    %p130 = scmp.ne.s32.totalorder %s113, %s129
    %p131 = scmp.eq.s32.totalorder %s16, 0
    %p132 = por %p130, %p131
    %p133 = scmp.le.s32.totalorder 1, %s10
    %p134 = scmp.lt.s32.totalorder %s10, 3
    %p135 = pnand %p133, %p134
    %p136 = pneg %p135
    // Predicated region
    $region9: #{decoder_module.3} parent=5 // pred_check
      _
    $region10: #{decoder_module.3} parent=5 // pred_check_branch
      %138 = sbr.rel (%p135) target = $region12
    $region11: #{decoder_module.3} parent=5 // pred_region
      %s139 = ssub.s32 %s10, 1
      // Predicated region
      $region13: #{decoder_module.3} parent=11 // pred_check
        %p140 = pneg %p57
      $region14: #{decoder_module.3} parent=11 // pred_check_branch
        %142 = sbr.rel (%p140) target = $region16
      $region15: #{decoder_module.3} parent=11 // pred_region
        _
      $region16: #{decoder_module.3} parent=11 // pred_fallthru
        _
      // Predicated region
      $region17: #{decoder_module.3} parent=11 // pred_check
        %p143 = pneg %p78
      $region18: #{decoder_module.3} parent=11 // pred_check_branch
        %145 = sbr.rel (%p143) target = $region20
      $region19: #{decoder_module.3} parent=11 // pred_region
        _
      $region20: #{decoder_module.3} parent=11 // pred_fallthru
        _
      // Predicated region
      $region21: #{decoder_module.3} parent=11 // pred_check
        %p146 = pneg %p99
      $region22: #{decoder_module.3} parent=11 // pred_check_branch
        %148 = sbr.rel (%p146) target = $region24
      $region23: #{decoder_module.3} parent=11 // pred_region
        _
      $region24: #{decoder_module.3} parent=11 // pred_fallthru
        _
    $region12: #{decoder_module.3} parent=5 // pred_fallthru
      _
    %p149 = scmp.lt.s32.totalorder %s10, 2
    // Predicated region
    $region25: #{decoder_module.3} parent=5 // pred_check
      %p150 = pneg %p149
    $region26: #{decoder_module.3} parent=5 // pred_check_branch
      %152 = sbr.rel (%p150) target = $region28
    $region27: #{decoder_module.3} parent=5 // pred_region
      // Predicated region
      $region29: #{decoder_module.3} parent=27 // pred_check
        %p153 = pneg %p30
      $region30: #{decoder_module.3} parent=27 // pred_check_branch
        %155 = sbr.rel (%p153) target = $region32
      $region31: #{decoder_module.3} parent=27 // pred_region
        %s156 = smul.u32 128, %s10
        %p157 = scmp.lt.s32.totalorder %s156, 255
        %s158 = scalar_select %p157, %s156, 255
        %s159 = smul.addr %s158, 8
        %s160 = scalar_lea.vmem %s0, %s159
        %s161 = smul.u32 128, %s10
      $region32: #{decoder_module.3} parent=27 // pred_fallthru
        _
    $region28: #{decoder_module.3} parent=5 // pred_fallthru
      _
    %p162 = scmp.le.s32.totalorder 1, %s10
    %p163 = scmp.lt.s32.totalorder %s10, 3
    %p164 = pnand %p162, %p163
    %p165 = pneg %p164
    // Predicated region
    $region33: #{decoder_module.3} parent=5 // pred_check
      _
    $region34: #{decoder_module.3} parent=5 // pred_check_branch
      %167 = sbr.rel (%p164) target = $region36
    $region35: #{decoder_module.3} parent=5 // pred_region
      %s168 = ssub.s32 %s10, 1
      %s169 = smul.u32 128, %s15
      %p170 = scmp.lt.s32.totalorder %s169, 255
      %s171 = scalar_select %p170, %s169, 255
      %s172 = smul.addr %s171, 8
      %s173 = scalar_lea.vmem %s0, %s172
      %p174 = pneg %p36
      %p175 = pneg %p33
      %p176 = pneg %p57
      %p177 = pneg %p54
      %p178 = pneg %p78
      %p179 = pneg %p75
      %p180 = pneg %p99
      %p181 = pneg %p96
      %p182 = pneg %p125
      %p183 = pneg %p122
      %s184 = smul.u32 128, %s15
      %p185 = scmp.lt.s32.totalorder %s184, 255
      %s186 = scalar_select %p185, %s184, 255
      %s187 = smul.addr %s186, 8
      %s188 = scalar_lea.vmem %s4, %s187
      %s189 = smul.u32 128, %s15
      %p190 = scmp.lt.s32.totalorder %s189, 255
      %s191 = scalar_select %p190, %s189, 255
      %s192 = smul.addr %s191, 8
      %s193 = scalar_lea.vmem %s0, %s192
      %s194 = smul.u32 128, %s15
      %s195 = smul.u32 128, %s15
      %p196 = scmp.lt.s32.totalorder %s195, 255
      %s197 = scalar_select %p196, %s195, 255
      %s198 = smul.addr %s197, 8
      %s199 = scalar_lea.vmem %s4, %s198
      %s200 = smul.u32 128, %s15
      %v201 = vld [vmem:[%s193] sm:$0xff]
      %v202 = vld [vmem:[%s193 + $0x8] sm:$0xff]
      %v203 = vld [vmem:[%s193 + $0x10] sm:$0xff]
      %v204 = vld [vmem:[%s193 + $0x18] sm:$0xff]
      %v205 = vld [vmem:[%s193 + $0x20] sm:$0xff]
      %v206 = vld [vmem:[%s193 + $0x28] sm:$0xff]
      %v207 = vld [vmem:[%s193 + $0x30] sm:$0xff]
      %v208 = vld [vmem:[%s193 + $0x38] sm:$0xff]
      %v209 = vld [vmem:[%s193 + $0x40] sm:$0xff]
      %v210 = vld [vmem:[%s193 + $0x48] sm:$0xff]
      %v211 = vld [vmem:[%s193 + $0x50] sm:$0xff]
      %v212 = vld [vmem:[%s193 + $0x58] sm:$0xff]
      %v213 = vld [vmem:[%s193 + $0x60] sm:$0xff]
      %v214 = vld [vmem:[%s193 + $0x68] sm:$0xff]
      %v215 = vld [vmem:[%s193 + $0x70] sm:$0xff]
      %v216 = vld [vmem:[%s193 + $0x78] sm:$0xff]
      %v217 = vld [vmem:[%s193 + $0x80] sm:$0xff]
      %v218 = vld [vmem:[%s193 + $0x88] sm:$0xff]
      %v219 = vld [vmem:[%s193 + $0x90] sm:$0xff]
      %v220 = vld [vmem:[%s193 + $0x98] sm:$0xff]
      %v221 = vld [vmem:[%s193 + $0xa0] sm:$0xff]
      %v222 = vld [vmem:[%s193 + $0xa8] sm:$0xff]
      %v223 = vld [vmem:[%s193 + $0xb0] sm:$0xff]
      %v224 = vld [vmem:[%s193 + $0xb8] sm:$0xff]
      %v225 = vld [vmem:[%s193 + $0xc0] sm:$0xff]
      %v226 = vld [vmem:[%s193 + $0xc8] sm:$0xff]
      %v227 = vld [vmem:[%s193 + $0xd0] sm:$0xff]
      %v228 = vld [vmem:[%s193 + $0xd8] sm:$0xff]
      %v229 = vld [vmem:[%s193 + $0xe0] sm:$0xff]
      %v230 = vld [vmem:[%s193 + $0xe8] sm:$0xff]
      %v231 = vld [vmem:[%s193 + $0xf0] sm:$0xff]
      %v232 = vld [vmem:[%s193 + $0xf8] sm:$0xff]
      %v233 = vld [vmem:[%s193 + $0x100] sm:$0xff]
      %v234 = vld [vmem:[%s193 + $0x108] sm:$0xff]
      %v235 = vld [vmem:[%s193 + $0x110] sm:$0xff]
      %v236 = vld [vmem:[%s193 + $0x118] sm:$0xff]
      %v237 = vld [vmem:[%s193 + $0x120] sm:$0xff]
      %v238 = vld [vmem:[%s193 + $0x128] sm:$0xff]
      %v239 = vld [vmem:[%s193 + $0x130] sm:$0xff]
      %v240 = vld [vmem:[%s193 + $0x138] sm:$0xff]
      %v241 = vld [vmem:[%s193 + $0x140] sm:$0xff]
      %v242 = vld [vmem:[%s193 + $0x148] sm:$0xff]
      %v243 = vld [vmem:[%s193 + $0x150] sm:$0xff]
      %v244 = vld [vmem:[%s193 + $0x158] sm:$0xff]
      %v245 = vld [vmem:[%s193 + $0x160] sm:$0xff]
      %v246 = vld [vmem:[%s193 + $0x168] sm:$0xff]
      %v247 = vld [vmem:[%s193 + $0x170] sm:$0xff]
      %v248 = vld [vmem:[%s193 + $0x178] sm:$0xff]
      %v249 = vld [vmem:[%s193 + $0x180] sm:$0xff]
      %v250 = vld [vmem:[%s193 + $0x188] sm:$0xff]
      %v251 = vld [vmem:[%s193 + $0x190] sm:$0xff]
      %v252 = vld [vmem:[%s193 + $0x198] sm:$0xff]
      %v253 = vld [vmem:[%s193 + $0x1a0] sm:$0xff]
      %v254 = vld [vmem:[%s193 + $0x1a8] sm:$0xff]
      %v255 = vld [vmem:[%s193 + $0x1b0] sm:$0xff]
      %v256 = vld [vmem:[%s193 + $0x1b8] sm:$0xff]
      %v257 = vld [vmem:[%s193 + $0x1c0] sm:$0xff]
      %v258 = vld [vmem:[%s193 + $0x1c8] sm:$0xff]
      %v259 = vld [vmem:[%s193 + $0x1d0] sm:$0xff]
      %v260 = vld [vmem:[%s193 + $0x1d8] sm:$0xff]
      %v261 = vld [vmem:[%s193 + $0x1e0] sm:$0xff]
      %v262 = vld [vmem:[%s193 + $0x1e8] sm:$0xff]
      %v263 = vld [vmem:[%s193 + $0x1f0] sm:$0xff]
      %v264 = vld [vmem:[%s193 + $0x1f8] sm:$0xff]
      %v265 = vld [vmem:[%s193 + $0x200] sm:$0xff]
      %v266 = vld [vmem:[%s193 + $0x208] sm:$0xff]
      %v267 = vld [vmem:[%s193 + $0x210] sm:$0xff]
      %v268 = vld [vmem:[%s193 + $0x218] sm:$0xff]
      %v269 = vld [vmem:[%s193 + $0x220] sm:$0xff]
      %v270 = vld [vmem:[%s193 + $0x228] sm:$0xff]
      %v271 = vld [vmem:[%s193 + $0x230] sm:$0xff]
      %v272 = vld [vmem:[%s193 + $0x238] sm:$0xff]
      %v273 = vld [vmem:[%s193 + $0x240] sm:$0xff]
      %v274 = vld [vmem:[%s193 + $0x248] sm:$0xff]
      %v275 = vld [vmem:[%s193 + $0x250] sm:$0xff]
      %v276 = vld [vmem:[%s193 + $0x258] sm:$0xff]
      %v277 = vld [vmem:[%s193 + $0x260] sm:$0xff]
      %v278 = vld [vmem:[%s193 + $0x268] sm:$0xff]
      %v279 = vld [vmem:[%s193 + $0x270] sm:$0xff]
      %v280 = vld [vmem:[%s193 + $0x278] sm:$0xff]
      %v281 = vld [vmem:[%s193 + $0x280] sm:$0xff]
      %v282 = vld [vmem:[%s193 + $0x288] sm:$0xff]
      %v283 = vld [vmem:[%s193 + $0x290] sm:$0xff]
      %v284 = vld [vmem:[%s193 + $0x298] sm:$0xff]
      %v285 = vld [vmem:[%s193 + $0x2a0] sm:$0xff]
      %v286 = vld [vmem:[%s193 + $0x2a8] sm:$0xff]
      %v287 = vld [vmem:[%s193 + $0x2b0] sm:$0xff]
      %v288 = vld [vmem:[%s193 + $0x2b8] sm:$0xff]
      %v289 = vld [vmem:[%s193 + $0x2c0] sm:$0xff]
      %v290 = vld [vmem:[%s193 + $0x2c8] sm:$0xff]
      %v291 = vld [vmem:[%s193 + $0x2d0] sm:$0xff]
      %v292 = vld [vmem:[%s193 + $0x2d8] sm:$0xff]
      %v293 = vld [vmem:[%s193 + $0x2e0] sm:$0xff]
      %v294 = vld [vmem:[%s193 + $0x2e8] sm:$0xff]
      %v295 = vld [vmem:[%s193 + $0x2f0] sm:$0xff]
      %v296 = vld [vmem:[%s193 + $0x2f8] sm:$0xff]
      %v297 = vld [vmem:[%s193 + $0x300] sm:$0xff]
      %v298 = vld [vmem:[%s193 + $0x308] sm:$0xff]
      %v299 = vld [vmem:[%s193 + $0x310] sm:$0xff]
      %v300 = vld [vmem:[%s193 + $0x318] sm:$0xff]
      %v301 = vld [vmem:[%s193 + $0x320] sm:$0xff]
      %v302 = vld [vmem:[%s193 + $0x328] sm:$0xff]
      %v303 = vld [vmem:[%s193 + $0x330] sm:$0xff]
      %v304 = vld [vmem:[%s193 + $0x338] sm:$0xff]
      %v305 = vld [vmem:[%s193 + $0x340] sm:$0xff]
      %v306 = vld [vmem:[%s193 + $0x348] sm:$0xff]
      %v307 = vld [vmem:[%s193 + $0x350] sm:$0xff]
      %v308 = vld [vmem:[%s193 + $0x358] sm:$0xff]
      %v309 = vld [vmem:[%s193 + $0x360] sm:$0xff]
      %v310 = vld [vmem:[%s193 + $0x368] sm:$0xff]
      %v311 = vld [vmem:[%s193 + $0x370] sm:$0xff]
      %v312 = vld [vmem:[%s193 + $0x378] sm:$0xff]
      %v313 = vld [vmem:[%s193 + $0x380] sm:$0xff]
      %v314 = vld [vmem:[%s193 + $0x388] sm:$0xff]
      %v315 = vld [vmem:[%s193 + $0x390] sm:$0xff]
      %v316 = vld [vmem:[%s193 + $0x398] sm:$0xff]
      %v317 = vld [vmem:[%s193 + $0x3a0] sm:$0xff]
      %v318 = vld [vmem:[%s193 + $0x3a8] sm:$0xff]
      %v319 = vld [vmem:[%s193 + $0x3b0] sm:$0xff]
      %v320 = vld [vmem:[%s193 + $0x3b8] sm:$0xff]
      %v321 = vld [vmem:[%s193 + $0x3c0] sm:$0xff]
      %v322 = vld [vmem:[%s193 + $0x3c8] sm:$0xff]
      %v323 = vld [vmem:[%s193 + $0x3d0] sm:$0xff]
      %v324 = vld [vmem:[%s193 + $0x3d8] sm:$0xff]
      %v325 = vld [vmem:[%s193 + $0x3e0] sm:$0xff]
      %v326 = vld [vmem:[%s193 + $0x3e8] sm:$0xff]
      %v327 = vld [vmem:[%s193 + $0x3f0] sm:$0xff]
      %v328 = vld [vmem:[%s193 + $0x3f8] sm:$0xff]
      %v329 = vld [vmem:[%s1] sm:$0xff]
      %vm330 = vcmask 64512
      %v332 = vsel %vm330, %v201, 0
      %v335 = vsel %vm330, %v202, 0
      %v338 = vsel %vm330, %v203, 0
      %v341 = vsel %vm330, %v204, 0
      %v344 = vsel %vm330, %v205, 0
      %v347 = vsel %vm330, %v206, 0
      %v350 = vsel %vm330, %v207, 0
      %v353 = vsel %vm330, %v208, 0
      %v356 = vsel %vm330, %v209, 0
      %v359 = vsel %vm330, %v210, 0
      %v362 = vsel %vm330, %v211, 0
      %v365 = vsel %vm330, %v212, 0
      %v368 = vsel %vm330, %v213, 0
      %v371 = vsel %vm330, %v214, 0
      %v374 = vsel %vm330, %v215, 0
      %v377 = vsel %vm330, %v216, 0
      %v380 = vsel %vm330, %v217, 0
      %v383 = vsel %vm330, %v218, 0
      %v386 = vsel %vm330, %v219, 0
      %v389 = vsel %vm330, %v220, 0
      %v392 = vsel %vm330, %v221, 0
      %v395 = vsel %vm330, %v222, 0
      %v398 = vsel %vm330, %v223, 0
      %v401 = vsel %vm330, %v224, 0
      %v404 = vsel %vm330, %v225, 0
      %v407 = vsel %vm330, %v226, 0
      %v410 = vsel %vm330, %v227, 0
      %v413 = vsel %vm330, %v228, 0
      %v416 = vsel %vm330, %v229, 0
      %v419 = vsel %vm330, %v230, 0
      %v422 = vsel %vm330, %v231, 0
      %v425 = vsel %vm330, %v232, 0
      %v428 = vsel %vm330, %v233, 0
      %v431 = vsel %vm330, %v234, 0
      %v434 = vsel %vm330, %v235, 0
      %v437 = vsel %vm330, %v236, 0
      %v440 = vsel %vm330, %v237, 0
      %v443 = vsel %vm330, %v238, 0
      %v446 = vsel %vm330, %v239, 0
      %v449 = vsel %vm330, %v240, 0
      %v452 = vsel %vm330, %v241, 0
      %v455 = vsel %vm330, %v242, 0
      %v458 = vsel %vm330, %v243, 0
      %v461 = vsel %vm330, %v244, 0
      %v464 = vsel %vm330, %v245, 0
      %v467 = vsel %vm330, %v246, 0
      %v470 = vsel %vm330, %v247, 0
      %v473 = vsel %vm330, %v248, 0
      %v476 = vsel %vm330, %v249, 0
      %v479 = vsel %vm330, %v250, 0
      %v482 = vsel %vm330, %v251, 0
      %v485 = vsel %vm330, %v252, 0
      %v488 = vsel %vm330, %v253, 0
      %v491 = vsel %vm330, %v254, 0
      %v494 = vsel %vm330, %v255, 0
      %v497 = vsel %vm330, %v256, 0
      %v500 = vsel %vm330, %v257, 0
      %v503 = vsel %vm330, %v258, 0
      %v506 = vsel %vm330, %v259, 0
      %v509 = vsel %vm330, %v260, 0
      %v512 = vsel %vm330, %v261, 0
      %v515 = vsel %vm330, %v262, 0
      %v518 = vsel %vm330, %v263, 0
      %v521 = vsel %vm330, %v264, 0
      %v524 = vsel %vm330, %v265, 0
      %v527 = vsel %vm330, %v266, 0
      %v530 = vsel %vm330, %v267, 0
      %v533 = vsel %vm330, %v268, 0
      %v536 = vsel %vm330, %v269, 0
      %v539 = vsel %vm330, %v270, 0
      %v542 = vsel %vm330, %v271, 0
      %v545 = vsel %vm330, %v272, 0
      %v548 = vsel %vm330, %v273, 0
      %v551 = vsel %vm330, %v274, 0
      %v554 = vsel %vm330, %v275, 0
      %v557 = vsel %vm330, %v276, 0
      %v560 = vsel %vm330, %v277, 0
      %v563 = vsel %vm330, %v278, 0
      %v566 = vsel %vm330, %v279, 0
      %v569 = vsel %vm330, %v280, 0
      %v572 = vsel %vm330, %v281, 0
      %v575 = vsel %vm330, %v282, 0
      %v578 = vsel %vm330, %v283, 0
      %v581 = vsel %vm330, %v284, 0
      %v584 = vsel %vm330, %v285, 0
      %v587 = vsel %vm330, %v286, 0
      %v590 = vsel %vm330, %v287, 0
      %v593 = vsel %vm330, %v288, 0
      %v596 = vsel %vm330, %v289, 0
      %v599 = vsel %vm330, %v290, 0
      %v602 = vsel %vm330, %v291, 0
      %v605 = vsel %vm330, %v292, 0
      %v608 = vsel %vm330, %v293, 0
      %v611 = vsel %vm330, %v294, 0
      %v614 = vsel %vm330, %v295, 0
      %v617 = vsel %vm330, %v296, 0
      %v620 = vsel %vm330, %v297, 0
      %v623 = vsel %vm330, %v298, 0
      %v626 = vsel %vm330, %v299, 0
      %v629 = vsel %vm330, %v300, 0
      %v632 = vsel %vm330, %v301, 0
      %v635 = vsel %vm330, %v302, 0
      %v638 = vsel %vm330, %v303, 0
      %v641 = vsel %vm330, %v304, 0
      %v644 = vsel %vm330, %v305, 0
      %v647 = vsel %vm330, %v306, 0
      %v650 = vsel %vm330, %v307, 0
      %v653 = vsel %vm330, %v308, 0
      %v656 = vsel %vm330, %v309, 0
      %v659 = vsel %vm330, %v310, 0
      %v662 = vsel %vm330, %v311, 0
      %v665 = vsel %vm330, %v312, 0
      %v668 = vsel %vm330, %v313, 0
      %v671 = vsel %vm330, %v314, 0
      %v674 = vsel %vm330, %v315, 0
      %v677 = vsel %vm330, %v316, 0
      %v680 = vsel %vm330, %v317, 0
      %v683 = vsel %vm330, %v318, 0
      %v686 = vsel %vm330, %v319, 0
      %v689 = vsel %vm330, %v320, 0
      %v692 = vsel %vm330, %v321, 0
      %v695 = vsel %vm330, %v322, 0
      %v698 = vsel %vm330, %v323, 0
      %v701 = vsel %vm330, %v324, 0
      %v704 = vsel %vm330, %v325, 0
      %v707 = vsel %vm330, %v326, 0
      %v710 = vsel %vm330, %v327, 0
      %v713 = vsel %vm330, %v328, 0
      %715 = vmatprep.subr.mxu0 0.0
      %716 = vmatpush1.msra.mxu0 0.0
      %717 = vmatprep.subr.mxu0 0.0
      %718 = vmatpush1.msra.mxu0 0.0
      %719 = vmatprep.subr.mxu0 0.0
      %720 = vmatpush1.msra.mxu0 0.0
      %721 = vmatprep.subr.mxu0 0.0
      %722 = vmatpush1.msra.mxu0 0.0
      %723 = vmatprep.subr.mxu0 0.0
      %724 = vmatpush1.msra.mxu0 0.0
      %725 = vmatprep.subr.mxu0 0.0
      %726 = vmatpush1.msra.mxu0 0.0
      %727 = vmatprep.subr.mxu0 0.0
      %728 = vmatpush1.msra.mxu0 0.0
      %729 = vmatprep.subr.mxu0 0.0
      %730 = vmatpush1.msra.mxu0 0.0
      %731 = vmatprep.subr.mxu0 0.0
      %732 = vmatpush1.msra.mxu0 0.0
      %733 = vmatprep.subr.mxu0 0.0
      %734 = vmatpush1.msra.mxu0 0.0
      %735 = vmatprep.subr.mxu0 0.0
      %736 = vmatpush1.msra.mxu0 0.0
      %737 = vmatprep.subr.mxu0 0.0
      %738 = vmatpush1.msra.mxu0 0.0
      %739 = vmatprep.subr.mxu0 0.0
      %740 = vmatpush1.msra.mxu0 0.0
      %741 = vmatprep.subr.mxu0 0.0
      %742 = vmatpush1.msra.mxu0 0.0
      %743 = vmatprep.subr.mxu0 0.0
      %744 = vmatpush1.msra.mxu0 0.0
      %745 = vmatprep.subr.mxu0 0.0
      %746 = vmatpush1.msra.mxu0 %v329
      %747 = vmatprep.subr.mxu0 0.0
      %748 = vmatpush2.msra.mxu0 0.0
      %749 = vmatprep.subr.mxu0 0.0
      %750 = vmatpush2.msra.mxu0 0.0
      %751 = vmatprep.subr.mxu0 0.0
      %752 = vmatpush2.msra.mxu0 0.0
      %753 = vmatprep.subr.mxu0 0.0
      %754 = vmatpush2.msra.mxu0 0.0
      %755 = vmatprep.subr.mxu0 0.0
      %756 = vmatpush2.msra.mxu0 0.0
      %757 = vmatprep.subr.mxu0 0.0
      %758 = vmatpush2.msra.mxu0 0.0
      %759 = vmatprep.subr.mxu0 0.0
      %760 = vmatpush2.msra.mxu0 0.0
      %761 = vmatprep.subr.mxu0 0.0
      %762 = vmatpush2.msra.mxu0 0.0
      %763 = vmatprep.subr.mxu0 0.0
      %764 = vmatpush2.msra.mxu0 0.0
      %765 = vmatprep.subr.mxu0 0.0
      %766 = vmatpush2.msra.mxu0 0.0
      %767 = vmatprep.subr.mxu0 0.0
      %768 = vmatpush2.msra.mxu0 0.0
      %769 = vmatprep.subr.mxu0 0.0
      %770 = vmatpush2.msra.mxu0 0.0
      %771 = vmatprep.subr.mxu0 0.0
      %772 = vmatpush2.msra.mxu0 0.0
      %773 = vmatprep.subr.mxu0 0.0
      %774 = vmatpush2.msra.mxu0 0.0
      %775 = vmatprep.subr.mxu0 0.0
      %776 = vmatpush2.msra.mxu0 0.0
      %777 = vmatprep.subr.mxu0 0.0
      %778 = vmatpush2.msra.mxu0 0.0
      %779 = vmatprep.mubr.f32.mxu0 0.0
      %780 = vmatmul.mubr.f32.gmra.mxu0 %v332
      %v781 = vpop.f32.mrf.mxu0
      %v782 = vadd.f32 0.0, %v781
      %v783 = vpop.f32.mrf.mxu0
      %784 = vmatprep.mubr.f32.mxu0 0.0
      %785 = vmatmul.mubr.f32.gmra.mxu0 %v335
      %v786 = vpop.f32.mrf.mxu0
      %v787 = vadd.f32 0.0, %v786
      %v788 = vpop.f32.mrf.mxu0
      %789 = vmatprep.mubr.f32.mxu0 0.0
      %790 = vmatmul.mubr.f32.gmra.mxu0 %v338
      %v791 = vpop.f32.mrf.mxu0
      %v792 = vadd.f32 0.0, %v791
      %v793 = vpop.f32.mrf.mxu0
      %794 = vmatprep.mubr.f32.mxu0 0.0
      %795 = vmatmul.mubr.f32.gmra.mxu0 %v341
      %v796 = vpop.f32.mrf.mxu0
      %v797 = vadd.f32 0.0, %v796
      %v798 = vpop.f32.mrf.mxu0
      %799 = vmatprep.mubr.f32.mxu0 0.0
      %800 = vmatmul.mubr.f32.gmra.mxu0 %v344
      %v801 = vpop.f32.mrf.mxu0
      %v802 = vadd.f32 0.0, %v801
      %v803 = vpop.f32.mrf.mxu0
      %804 = vmatprep.mubr.f32.mxu0 0.0
      %805 = vmatmul.mubr.f32.gmra.mxu0 %v347
      %v806 = vpop.f32.mrf.mxu0
      %v807 = vadd.f32 0.0, %v806
      %v808 = vpop.f32.mrf.mxu0
      %809 = vmatprep.mubr.f32.mxu0 0.0
      %810 = vmatmul.mubr.f32.gmra.mxu0 %v350
      %v811 = vpop.f32.mrf.mxu0
      %v812 = vadd.f32 0.0, %v811
      %v813 = vpop.f32.mrf.mxu0
      %814 = vmatprep.mubr.f32.mxu0 0.0
      %815 = vmatmul.mubr.f32.gmra.mxu0 %v353
      %v816 = vpop.f32.mrf.mxu0
      %v817 = vadd.f32 0.0, %v816
      %v818 = vpop.f32.mrf.mxu0
      %819 = vmatprep.mubr.f32.mxu0 0.0
      %820 = vmatmul.mubr.f32.gmra.mxu0 %v356
      %v821 = vpop.f32.mrf.mxu0
      %v822 = vadd.f32 0.0, %v821
      %v823 = vpop.f32.mrf.mxu0
      %824 = vmatprep.mubr.f32.mxu0 0.0
      %825 = vmatmul.mubr.f32.gmra.mxu0 %v359
      %v826 = vpop.f32.mrf.mxu0
      %v827 = vadd.f32 0.0, %v826
      %v828 = vpop.f32.mrf.mxu0
      %829 = vmatprep.mubr.f32.mxu0 0.0
      %830 = vmatmul.mubr.f32.gmra.mxu0 %v362
      %v831 = vpop.f32.mrf.mxu0
      %v832 = vadd.f32 0.0, %v831
      %v833 = vpop.f32.mrf.mxu0
      %834 = vmatprep.mubr.f32.mxu0 0.0
      %835 = vmatmul.mubr.f32.gmra.mxu0 %v365
      %v836 = vpop.f32.mrf.mxu0
      %v837 = vadd.f32 0.0, %v836
      %v838 = vpop.f32.mrf.mxu0
      %839 = vmatprep.mubr.f32.mxu0 0.0
      %840 = vmatmul.mubr.f32.gmra.mxu0 %v368
      %v841 = vpop.f32.mrf.mxu0
      %v842 = vadd.f32 0.0, %v841
      %v843 = vpop.f32.mrf.mxu0
      %844 = vmatprep.mubr.f32.mxu0 0.0
      %845 = vmatmul.mubr.f32.gmra.mxu0 %v371
      %v846 = vpop.f32.mrf.mxu0
      %v847 = vadd.f32 0.0, %v846
      %v848 = vpop.f32.mrf.mxu0
      %849 = vmatprep.mubr.f32.mxu0 0.0
      %850 = vmatmul.mubr.f32.gmra.mxu0 %v374
      %v851 = vpop.f32.mrf.mxu0
      %v852 = vadd.f32 0.0, %v851
      %v853 = vpop.f32.mrf.mxu0
      %854 = vmatprep.mubr.f32.mxu0 0.0
      %855 = vmatmul.mubr.f32.gmra.mxu0 %v377
      %v856 = vpop.f32.mrf.mxu0
      %v857 = vadd.f32 0.0, %v856
      %v858 = vpop.f32.mrf.mxu0
      %859 = vmatprep.mubr.f32.mxu0 0.0
      %860 = vmatmul.mubr.f32.gmra.mxu0 %v380
      %v861 = vpop.f32.mrf.mxu0
      %v862 = vadd.f32 0.0, %v861
      %v863 = vpop.f32.mrf.mxu0
      %864 = vmatprep.mubr.f32.mxu0 0.0
      %865 = vmatmul.mubr.f32.gmra.mxu0 %v383
      %v866 = vpop.f32.mrf.mxu0
      %v867 = vadd.f32 0.0, %v866
      %v868 = vpop.f32.mrf.mxu0
      %869 = vmatprep.mubr.f32.mxu0 0.0
      %870 = vmatmul.mubr.f32.gmra.mxu0 %v386
      %v871 = vpop.f32.mrf.mxu0
      %v872 = vadd.f32 0.0, %v871
      %v873 = vpop.f32.mrf.mxu0
      %874 = vmatprep.mubr.f32.mxu0 0.0
      %875 = vmatmul.mubr.f32.gmra.mxu0 %v389
      %v876 = vpop.f32.mrf.mxu0
      %v877 = vadd.f32 0.0, %v876
      %v878 = vpop.f32.mrf.mxu0
      %879 = vmatprep.mubr.f32.mxu0 0.0
      %880 = vmatmul.mubr.f32.gmra.mxu0 %v392
      %v881 = vpop.f32.mrf.mxu0
      %v882 = vadd.f32 0.0, %v881
      %v883 = vpop.f32.mrf.mxu0
      %884 = vmatprep.mubr.f32.mxu0 0.0
      %885 = vmatmul.mubr.f32.gmra.mxu0 %v395
      %v886 = vpop.f32.mrf.mxu0
      %v887 = vadd.f32 0.0, %v886
      %v888 = vpop.f32.mrf.mxu0
      %889 = vmatprep.mubr.f32.mxu0 0.0
      %890 = vmatmul.mubr.f32.gmra.mxu0 %v398
      %v891 = vpop.f32.mrf.mxu0
      %v892 = vadd.f32 0.0, %v891
      %v893 = vpop.f32.mrf.mxu0
      %894 = vmatprep.mubr.f32.mxu0 0.0
      %895 = vmatmul.mubr.f32.gmra.mxu0 %v401
      %v896 = vpop.f32.mrf.mxu0
      %v897 = vadd.f32 0.0, %v896
      %v898 = vpop.f32.mrf.mxu0
      %899 = vmatprep.mubr.f32.mxu0 0.0
      %900 = vmatmul.mubr.f32.gmra.mxu0 %v404
      %v901 = vpop.f32.mrf.mxu0
      %v902 = vadd.f32 0.0, %v901
      %v903 = vpop.f32.mrf.mxu0
      %904 = vmatprep.mubr.f32.mxu0 0.0
      %905 = vmatmul.mubr.f32.gmra.mxu0 %v407
      %v906 = vpop.f32.mrf.mxu0
      %v907 = vadd.f32 0.0, %v906
      %v908 = vpop.f32.mrf.mxu0
      %909 = vmatprep.mubr.f32.mxu0 0.0
      %910 = vmatmul.mubr.f32.gmra.mxu0 %v410
      %v911 = vpop.f32.mrf.mxu0
      %v912 = vadd.f32 0.0, %v911
      %v913 = vpop.f32.mrf.mxu0
      %914 = vmatprep.mubr.f32.mxu0 0.0
      %915 = vmatmul.mubr.f32.gmra.mxu0 %v413
      %v916 = vpop.f32.mrf.mxu0
      %v917 = vadd.f32 0.0, %v916
      %v918 = vpop.f32.mrf.mxu0
      %919 = vmatprep.mubr.f32.mxu0 0.0
      %920 = vmatmul.mubr.f32.gmra.mxu0 %v416
      %v921 = vpop.f32.mrf.mxu0
      %v922 = vadd.f32 0.0, %v921
      %v923 = vpop.f32.mrf.mxu0
      %924 = vmatprep.mubr.f32.mxu0 0.0
      %925 = vmatmul.mubr.f32.gmra.mxu0 %v419
      %v926 = vpop.f32.mrf.mxu0
      %v927 = vadd.f32 0.0, %v926
      %v928 = vpop.f32.mrf.mxu0
      %929 = vmatprep.mubr.f32.mxu0 0.0
      %930 = vmatmul.mubr.f32.gmra.mxu0 %v422
      %v931 = vpop.f32.mrf.mxu0
      %v932 = vadd.f32 0.0, %v931
      %v933 = vpop.f32.mrf.mxu0
      %934 = vmatprep.mubr.f32.mxu0 0.0
      %935 = vmatmul.mubr.f32.gmra.mxu0 %v425
      %v936 = vpop.f32.mrf.mxu0
      %v937 = vadd.f32 0.0, %v936
      %v938 = vpop.f32.mrf.mxu0
      %939 = vmatprep.mubr.f32.mxu0 0.0
      %940 = vmatmul.mubr.f32.gmra.mxu0 %v428
      %v941 = vpop.f32.mrf.mxu0
      %v942 = vadd.f32 0.0, %v941
      %v943 = vpop.f32.mrf.mxu0
      %944 = vmatprep.mubr.f32.mxu0 0.0
      %945 = vmatmul.mubr.f32.gmra.mxu0 %v431
      %v946 = vpop.f32.mrf.mxu0
      %v947 = vadd.f32 0.0, %v946
      %v948 = vpop.f32.mrf.mxu0
      %949 = vmatprep.mubr.f32.mxu0 0.0
      %950 = vmatmul.mubr.f32.gmra.mxu0 %v434
      %v951 = vpop.f32.mrf.mxu0
      %v952 = vadd.f32 0.0, %v951
      %v953 = vpop.f32.mrf.mxu0
      %954 = vmatprep.mubr.f32.mxu0 0.0
      %955 = vmatmul.mubr.f32.gmra.mxu0 %v437
      %v956 = vpop.f32.mrf.mxu0
      %v957 = vadd.f32 0.0, %v956
      %v958 = vpop.f32.mrf.mxu0
      %959 = vmatprep.mubr.f32.mxu0 0.0
      %960 = vmatmul.mubr.f32.gmra.mxu0 %v440
      %v961 = vpop.f32.mrf.mxu0
      %v962 = vadd.f32 0.0, %v961
      %v963 = vpop.f32.mrf.mxu0
      %964 = vmatprep.mubr.f32.mxu0 0.0
      %965 = vmatmul.mubr.f32.gmra.mxu0 %v443
      %v966 = vpop.f32.mrf.mxu0
      %v967 = vadd.f32 0.0, %v966
      %v968 = vpop.f32.mrf.mxu0
      %969 = vmatprep.mubr.f32.mxu0 0.0
      %970 = vmatmul.mubr.f32.gmra.mxu0 %v446
      %v971 = vpop.f32.mrf.mxu0
      %v972 = vadd.f32 0.0, %v971
      %v973 = vpop.f32.mrf.mxu0
      %974 = vmatprep.mubr.f32.mxu0 0.0
      %975 = vmatmul.mubr.f32.gmra.mxu0 %v449
      %v976 = vpop.f32.mrf.mxu0
      %v977 = vadd.f32 0.0, %v976
      %v978 = vpop.f32.mrf.mxu0
      %979 = vmatprep.mubr.f32.mxu0 0.0
      %980 = vmatmul.mubr.f32.gmra.mxu0 %v452
      %v981 = vpop.f32.mrf.mxu0
      %v982 = vadd.f32 0.0, %v981
      %v983 = vpop.f32.mrf.mxu0
      %984 = vmatprep.mubr.f32.mxu0 0.0
      %985 = vmatmul.mubr.f32.gmra.mxu0 %v455
      %v986 = vpop.f32.mrf.mxu0
      %v987 = vadd.f32 0.0, %v986
      %v988 = vpop.f32.mrf.mxu0
      %989 = vmatprep.mubr.f32.mxu0 0.0
      %990 = vmatmul.mubr.f32.gmra.mxu0 %v458
      %v991 = vpop.f32.mrf.mxu0
      %v992 = vadd.f32 0.0, %v991
      %v993 = vpop.f32.mrf.mxu0
      %994 = vmatprep.mubr.f32.mxu0 0.0
      %995 = vmatmul.mubr.f32.gmra.mxu0 %v461
      %v996 = vpop.f32.mrf.mxu0
      %v997 = vadd.f32 0.0, %v996
      %v998 = vpop.f32.mrf.mxu0
      %999 = vmatprep.mubr.f32.mxu0 0.0
      %1000 = vmatmul.mubr.f32.gmra.mxu0 %v464
      %v1001 = vpop.f32.mrf.mxu0
      %v1002 = vadd.f32 0.0, %v1001
      %v1003 = vpop.f32.mrf.mxu0
      %1004 = vmatprep.mubr.f32.mxu0 0.0
      %1005 = vmatmul.mubr.f32.gmra.mxu0 %v467
      %v1006 = vpop.f32.mrf.mxu0
      %v1007 = vadd.f32 0.0, %v1006
      %v1008 = vpop.f32.mrf.mxu0
      %1009 = vmatprep.mubr.f32.mxu0 0.0
      %1010 = vmatmul.mubr.f32.gmra.mxu0 %v470
      %v1011 = vpop.f32.mrf.mxu0
      %v1012 = vadd.f32 0.0, %v1011
      %v1013 = vpop.f32.mrf.mxu0
      %1014 = vmatprep.mubr.f32.mxu0 0.0
      %1015 = vmatmul.mubr.f32.gmra.mxu0 %v473
      %v1016 = vpop.f32.mrf.mxu0
      %v1017 = vadd.f32 0.0, %v1016
      %v1018 = vpop.f32.mrf.mxu0
      %1019 = vmatprep.mubr.f32.mxu0 0.0
      %1020 = vmatmul.mubr.f32.gmra.mxu0 %v476
      %v1021 = vpop.f32.mrf.mxu0
      %v1022 = vadd.f32 0.0, %v1021
      %v1023 = vpop.f32.mrf.mxu0
      %1024 = vmatprep.mubr.f32.mxu0 0.0
      %1025 = vmatmul.mubr.f32.gmra.mxu0 %v479
      %v1026 = vpop.f32.mrf.mxu0
      %v1027 = vadd.f32 0.0, %v1026
      %v1028 = vpop.f32.mrf.mxu0
      %1029 = vmatprep.mubr.f32.mxu0 0.0
      %1030 = vmatmul.mubr.f32.gmra.mxu0 %v482
      %v1031 = vpop.f32.mrf.mxu0
      %v1032 = vadd.f32 0.0, %v1031
      %v1033 = vpop.f32.mrf.mxu0
      %1034 = vmatprep.mubr.f32.mxu0 0.0
      %1035 = vmatmul.mubr.f32.gmra.mxu0 %v485
      %v1036 = vpop.f32.mrf.mxu0
      %v1037 = vadd.f32 0.0, %v1036
      %v1038 = vpop.f32.mrf.mxu0
      %1039 = vmatprep.mubr.f32.mxu0 0.0
      %1040 = vmatmul.mubr.f32.gmra.mxu0 %v488
      %v1041 = vpop.f32.mrf.mxu0
      %v1042 = vadd.f32 0.0, %v1041
      %v1043 = vpop.f32.mrf.mxu0
      %1044 = vmatprep.mubr.f32.mxu0 0.0
      %1045 = vmatmul.mubr.f32.gmra.mxu0 %v491
      %v1046 = vpop.f32.mrf.mxu0
      %v1047 = vadd.f32 0.0, %v1046
      %v1048 = vpop.f32.mrf.mxu0
      %1049 = vmatprep.mubr.f32.mxu0 0.0
      %1050 = vmatmul.mubr.f32.gmra.mxu0 %v494
      %v1051 = vpop.f32.mrf.mxu0
      %v1052 = vadd.f32 0.0, %v1051
      %v1053 = vpop.f32.mrf.mxu0
      %1054 = vmatprep.mubr.f32.mxu0 0.0
      %1055 = vmatmul.mubr.f32.gmra.mxu0 %v497
      %v1056 = vpop.f32.mrf.mxu0
      %v1057 = vadd.f32 0.0, %v1056
      %v1058 = vpop.f32.mrf.mxu0
      %1059 = vmatprep.mubr.f32.mxu0 0.0
      %1060 = vmatmul.mubr.f32.gmra.mxu0 %v500
      %v1061 = vpop.f32.mrf.mxu0
      %v1062 = vadd.f32 0.0, %v1061
      %v1063 = vpop.f32.mrf.mxu0
      %1064 = vmatprep.mubr.f32.mxu0 0.0
      %1065 = vmatmul.mubr.f32.gmra.mxu0 %v503
      %v1066 = vpop.f32.mrf.mxu0
      %v1067 = vadd.f32 0.0, %v1066
      %v1068 = vpop.f32.mrf.mxu0
      %1069 = vmatprep.mubr.f32.mxu0 0.0
      %1070 = vmatmul.mubr.f32.gmra.mxu0 %v506
      %v1071 = vpop.f32.mrf.mxu0
      %v1072 = vadd.f32 0.0, %v1071
      %v1073 = vpop.f32.mrf.mxu0
      %1074 = vmatprep.mubr.f32.mxu0 0.0
      %1075 = vmatmul.mubr.f32.gmra.mxu0 %v509
      %v1076 = vpop.f32.mrf.mxu0
      %v1077 = vadd.f32 0.0, %v1076
      %v1078 = vpop.f32.mrf.mxu0
      %1079 = vmatprep.mubr.f32.mxu0 0.0
      %1080 = vmatmul.mubr.f32.gmra.mxu0 %v512
      %v1081 = vpop.f32.mrf.mxu0
      %v1082 = vadd.f32 0.0, %v1081
      %v1083 = vpop.f32.mrf.mxu0
      %1084 = vmatprep.mubr.f32.mxu0 0.0
      %1085 = vmatmul.mubr.f32.gmra.mxu0 %v515
      %v1086 = vpop.f32.mrf.mxu0
      %v1087 = vadd.f32 0.0, %v1086
      %v1088 = vpop.f32.mrf.mxu0
      %1089 = vmatprep.mubr.f32.mxu0 0.0
      %1090 = vmatmul.mubr.f32.gmra.mxu0 %v518
      %v1091 = vpop.f32.mrf.mxu0
      %v1092 = vadd.f32 0.0, %v1091
      %v1093 = vpop.f32.mrf.mxu0
      %1094 = vmatprep.mubr.f32.mxu0 0.0
      %1095 = vmatmul.mubr.f32.gmra.mxu0 %v521
      %v1096 = vpop.f32.mrf.mxu0
      %v1097 = vadd.f32 0.0, %v1096
      %v1098 = vpop.f32.mrf.mxu0
      %1099 = vmatprep.mubr.f32.mxu0 0.0
      %1100 = vmatmul.mubr.f32.gmra.mxu0 %v524
      %v1101 = vpop.f32.mrf.mxu0
      %v1102 = vadd.f32 0.0, %v1101
      %v1103 = vpop.f32.mrf.mxu0
      %1104 = vmatprep.mubr.f32.mxu0 0.0
      %1105 = vmatmul.mubr.f32.gmra.mxu0 %v527
      %v1106 = vpop.f32.mrf.mxu0
      %v1107 = vadd.f32 0.0, %v1106
      %v1108 = vpop.f32.mrf.mxu0
      %1109 = vmatprep.mubr.f32.mxu0 0.0
      %1110 = vmatmul.mubr.f32.gmra.mxu0 %v530
      %v1111 = vpop.f32.mrf.mxu0
      %v1112 = vadd.f32 0.0, %v1111
      %v1113 = vpop.f32.mrf.mxu0
      %1114 = vmatprep.mubr.f32.mxu0 0.0
      %1115 = vmatmul.mubr.f32.gmra.mxu0 %v533
      %v1116 = vpop.f32.mrf.mxu0
      %v1117 = vadd.f32 0.0, %v1116
      %v1118 = vpop.f32.mrf.mxu0
      %1119 = vmatprep.mubr.f32.mxu0 0.0
      %1120 = vmatmul.mubr.f32.gmra.mxu0 %v536
      %v1121 = vpop.f32.mrf.mxu0
      %v1122 = vadd.f32 0.0, %v1121
      %v1123 = vpop.f32.mrf.mxu0
      %1124 = vmatprep.mubr.f32.mxu0 0.0
      %1125 = vmatmul.mubr.f32.gmra.mxu0 %v539
      %v1126 = vpop.f32.mrf.mxu0
      %v1127 = vadd.f32 0.0, %v1126
      %v1128 = vpop.f32.mrf.mxu0
      %1129 = vmatprep.mubr.f32.mxu0 0.0
      %1130 = vmatmul.mubr.f32.gmra.mxu0 %v542
      %v1131 = vpop.f32.mrf.mxu0
      %v1132 = vadd.f32 0.0, %v1131
      %v1133 = vpop.f32.mrf.mxu0
      %1134 = vmatprep.mubr.f32.mxu0 0.0
      %1135 = vmatmul.mubr.f32.gmra.mxu0 %v545
      %v1136 = vpop.f32.mrf.mxu0
      %v1137 = vadd.f32 0.0, %v1136
      %v1138 = vpop.f32.mrf.mxu0
      %1139 = vmatprep.mubr.f32.mxu0 0.0
      %1140 = vmatmul.mubr.f32.gmra.mxu0 %v548
      %v1141 = vpop.f32.mrf.mxu0
      %v1142 = vadd.f32 0.0, %v1141
      %v1143 = vpop.f32.mrf.mxu0
      %1144 = vmatprep.mubr.f32.mxu0 0.0
      %1145 = vmatmul.mubr.f32.gmra.mxu0 %v551
      %v1146 = vpop.f32.mrf.mxu0
      %v1147 = vadd.f32 0.0, %v1146
      %v1148 = vpop.f32.mrf.mxu0
      %1149 = vmatprep.mubr.f32.mxu0 0.0
      %1150 = vmatmul.mubr.f32.gmra.mxu0 %v554
      %v1151 = vpop.f32.mrf.mxu0
      %v1152 = vadd.f32 0.0, %v1151
      %v1153 = vpop.f32.mrf.mxu0
      %1154 = vmatprep.mubr.f32.mxu0 0.0
      %1155 = vmatmul.mubr.f32.gmra.mxu0 %v557
      %v1156 = vpop.f32.mrf.mxu0
      %v1157 = vadd.f32 0.0, %v1156
      %v1158 = vpop.f32.mrf.mxu0
      %1159 = vmatprep.mubr.f32.mxu0 0.0
      %1160 = vmatmul.mubr.f32.gmra.mxu0 %v560
      %v1161 = vpop.f32.mrf.mxu0
      %v1162 = vadd.f32 0.0, %v1161
      %v1163 = vpop.f32.mrf.mxu0
      %1164 = vmatprep.mubr.f32.mxu0 0.0
      %1165 = vmatmul.mubr.f32.gmra.mxu0 %v563
      %v1166 = vpop.f32.mrf.mxu0
      %v1167 = vadd.f32 0.0, %v1166
      %v1168 = vpop.f32.mrf.mxu0
      %1169 = vmatprep.mubr.f32.mxu0 0.0
      %1170 = vmatmul.mubr.f32.gmra.mxu0 %v566
      %v1171 = vpop.f32.mrf.mxu0
      %v1172 = vadd.f32 0.0, %v1171
      %v1173 = vpop.f32.mrf.mxu0
      %1174 = vmatprep.mubr.f32.mxu0 0.0
      %1175 = vmatmul.mubr.f32.gmra.mxu0 %v569
      %v1176 = vpop.f32.mrf.mxu0
      %v1177 = vadd.f32 0.0, %v1176
      %v1178 = vpop.f32.mrf.mxu0
      %1179 = vmatprep.mubr.f32.mxu0 0.0
      %1180 = vmatmul.mubr.f32.gmra.mxu0 %v572
      %v1181 = vpop.f32.mrf.mxu0
      %v1182 = vadd.f32 0.0, %v1181
      %v1183 = vpop.f32.mrf.mxu0
      %1184 = vmatprep.mubr.f32.mxu0 0.0
      %1185 = vmatmul.mubr.f32.gmra.mxu0 %v575
      %v1186 = vpop.f32.mrf.mxu0
      %v1187 = vadd.f32 0.0, %v1186
      %v1188 = vpop.f32.mrf.mxu0
      %1189 = vmatprep.mubr.f32.mxu0 0.0
      %1190 = vmatmul.mubr.f32.gmra.mxu0 %v578
      %v1191 = vpop.f32.mrf.mxu0
      %v1192 = vadd.f32 0.0, %v1191
      %v1193 = vpop.f32.mrf.mxu0
      %1194 = vmatprep.mubr.f32.mxu0 0.0
      %1195 = vmatmul.mubr.f32.gmra.mxu0 %v581
      %v1196 = vpop.f32.mrf.mxu0
      %v1197 = vadd.f32 0.0, %v1196
      %v1198 = vpop.f32.mrf.mxu0
      %1199 = vmatprep.mubr.f32.mxu0 0.0
      %1200 = vmatmul.mubr.f32.gmra.mxu0 %v584
      %v1201 = vpop.f32.mrf.mxu0
      %v1202 = vadd.f32 0.0, %v1201
      %v1203 = vpop.f32.mrf.mxu0
      %1204 = vmatprep.mubr.f32.mxu0 0.0
      %1205 = vmatmul.mubr.f32.gmra.mxu0 %v587
      %v1206 = vpop.f32.mrf.mxu0
      %v1207 = vadd.f32 0.0, %v1206
      %v1208 = vpop.f32.mrf.mxu0
      %1209 = vmatprep.mubr.f32.mxu0 0.0
      %1210 = vmatmul.mubr.f32.gmra.mxu0 %v590
      %v1211 = vpop.f32.mrf.mxu0
      %v1212 = vadd.f32 0.0, %v1211
      %v1213 = vpop.f32.mrf.mxu0
      %1214 = vmatprep.mubr.f32.mxu0 0.0
      %1215 = vmatmul.mubr.f32.gmra.mxu0 %v593
      %v1216 = vpop.f32.mrf.mxu0
      %v1217 = vadd.f32 0.0, %v1216
      %v1218 = vpop.f32.mrf.mxu0
      %1219 = vmatprep.mubr.f32.mxu0 0.0
      %1220 = vmatmul.mubr.f32.gmra.mxu0 %v596
      %v1221 = vpop.f32.mrf.mxu0
      %v1222 = vadd.f32 0.0, %v1221
      %v1223 = vpop.f32.mrf.mxu0
      %1224 = vmatprep.mubr.f32.mxu0 0.0
      %1225 = vmatmul.mubr.f32.gmra.mxu0 %v599
      %v1226 = vpop.f32.mrf.mxu0
      %v1227 = vadd.f32 0.0, %v1226
      %v1228 = vpop.f32.mrf.mxu0
      %1229 = vmatprep.mubr.f32.mxu0 0.0
      %1230 = vmatmul.mubr.f32.gmra.mxu0 %v602
      %v1231 = vpop.f32.mrf.mxu0
      %v1232 = vadd.f32 0.0, %v1231
      %v1233 = vpop.f32.mrf.mxu0
      %1234 = vmatprep.mubr.f32.mxu0 0.0
      %1235 = vmatmul.mubr.f32.gmra.mxu0 %v605
      %v1236 = vpop.f32.mrf.mxu0
      %v1237 = vadd.f32 0.0, %v1236
      %v1238 = vpop.f32.mrf.mxu0
      %1239 = vmatprep.mubr.f32.mxu0 0.0
      %1240 = vmatmul.mubr.f32.gmra.mxu0 %v608
      %v1241 = vpop.f32.mrf.mxu0
      %v1242 = vadd.f32 0.0, %v1241
      %v1243 = vpop.f32.mrf.mxu0
      %1244 = vmatprep.mubr.f32.mxu0 0.0
      %1245 = vmatmul.mubr.f32.gmra.mxu0 %v611
      %v1246 = vpop.f32.mrf.mxu0
      %v1247 = vadd.f32 0.0, %v1246
      %v1248 = vpop.f32.mrf.mxu0
      %1249 = vmatprep.mubr.f32.mxu0 0.0
      %1250 = vmatmul.mubr.f32.gmra.mxu0 %v614
      %v1251 = vpop.f32.mrf.mxu0
      %v1252 = vadd.f32 0.0, %v1251
      %v1253 = vpop.f32.mrf.mxu0
      %1254 = vmatprep.mubr.f32.mxu0 0.0
      %1255 = vmatmul.mubr.f32.gmra.mxu0 %v617
      %v1256 = vpop.f32.mrf.mxu0
      %v1257 = vadd.f32 0.0, %v1256
      %v1258 = vpop.f32.mrf.mxu0
      %1259 = vmatprep.mubr.f32.mxu0 0.0
      %1260 = vmatmul.mubr.f32.gmra.mxu0 %v620
      %v1261 = vpop.f32.mrf.mxu0
      %v1262 = vadd.f32 0.0, %v1261
      %v1263 = vpop.f32.mrf.mxu0
      %1264 = vmatprep.mubr.f32.mxu0 0.0
      %1265 = vmatmul.mubr.f32.gmra.mxu0 %v623
      %v1266 = vpop.f32.mrf.mxu0
      %v1267 = vadd.f32 0.0, %v1266
      %v1268 = vpop.f32.mrf.mxu0
      %1269 = vmatprep.mubr.f32.mxu0 0.0
      %1270 = vmatmul.mubr.f32.gmra.mxu0 %v626
      %v1271 = vpop.f32.mrf.mxu0
      %v1272 = vadd.f32 0.0, %v1271
      %v1273 = vpop.f32.mrf.mxu0
      %1274 = vmatprep.mubr.f32.mxu0 0.0
      %1275 = vmatmul.mubr.f32.gmra.mxu0 %v629
      %v1276 = vpop.f32.mrf.mxu0
      %v1277 = vadd.f32 0.0, %v1276
      %v1278 = vpop.f32.mrf.mxu0
      %1279 = vmatprep.mubr.f32.mxu0 0.0
      %1280 = vmatmul.mubr.f32.gmra.mxu0 %v632
      %v1281 = vpop.f32.mrf.mxu0
      %v1282 = vadd.f32 0.0, %v1281
      %v1283 = vpop.f32.mrf.mxu0
      %1284 = vmatprep.mubr.f32.mxu0 0.0
      %1285 = vmatmul.mubr.f32.gmra.mxu0 %v635
      %v1286 = vpop.f32.mrf.mxu0
      %v1287 = vadd.f32 0.0, %v1286
      %v1288 = vpop.f32.mrf.mxu0
      %1289 = vmatprep.mubr.f32.mxu0 0.0
      %1290 = vmatmul.mubr.f32.gmra.mxu0 %v638
      %v1291 = vpop.f32.mrf.mxu0
      %v1292 = vadd.f32 0.0, %v1291
      %v1293 = vpop.f32.mrf.mxu0
      %1294 = vmatprep.mubr.f32.mxu0 0.0
      %1295 = vmatmul.mubr.f32.gmra.mxu0 %v641
      %v1296 = vpop.f32.mrf.mxu0
      %v1297 = vadd.f32 0.0, %v1296
      %v1298 = vpop.f32.mrf.mxu0
      %1299 = vmatprep.mubr.f32.mxu0 0.0
      %1300 = vmatmul.mubr.f32.gmra.mxu0 %v644
      %v1301 = vpop.f32.mrf.mxu0
      %v1302 = vadd.f32 0.0, %v1301
      %v1303 = vpop.f32.mrf.mxu0
      %1304 = vmatprep.mubr.f32.mxu0 0.0
      %1305 = vmatmul.mubr.f32.gmra.mxu0 %v647
      %v1306 = vpop.f32.mrf.mxu0
      %v1307 = vadd.f32 0.0, %v1306
      %v1308 = vpop.f32.mrf.mxu0
      %1309 = vmatprep.mubr.f32.mxu0 0.0
      %1310 = vmatmul.mubr.f32.gmra.mxu0 %v650
      %v1311 = vpop.f32.mrf.mxu0
      %v1312 = vadd.f32 0.0, %v1311
      %v1313 = vpop.f32.mrf.mxu0
      %1314 = vmatprep.mubr.f32.mxu0 0.0
      %1315 = vmatmul.mubr.f32.gmra.mxu0 %v653
      %v1316 = vpop.f32.mrf.mxu0
      %v1317 = vadd.f32 0.0, %v1316
      %v1318 = vpop.f32.mrf.mxu0
      %1319 = vmatprep.mubr.f32.mxu0 0.0
      %1320 = vmatmul.mubr.f32.gmra.mxu0 %v656
      %v1321 = vpop.f32.mrf.mxu0
      %v1322 = vadd.f32 0.0, %v1321
      %v1323 = vpop.f32.mrf.mxu0
      %1324 = vmatprep.mubr.f32.mxu0 0.0
      %1325 = vmatmul.mubr.f32.gmra.mxu0 %v659
      %v1326 = vpop.f32.mrf.mxu0
      %v1327 = vadd.f32 0.0, %v1326
      %v1328 = vpop.f32.mrf.mxu0
      %1329 = vmatprep.mubr.f32.mxu0 0.0
      %1330 = vmatmul.mubr.f32.gmra.mxu0 %v662
      %v1331 = vpop.f32.mrf.mxu0
      %v1332 = vadd.f32 0.0, %v1331
      %v1333 = vpop.f32.mrf.mxu0
      %1334 = vmatprep.mubr.f32.mxu0 0.0
      %1335 = vmatmul.mubr.f32.gmra.mxu0 %v665
      %v1336 = vpop.f32.mrf.mxu0
      %v1337 = vadd.f32 0.0, %v1336
      %v1338 = vpop.f32.mrf.mxu0
      %1339 = vmatprep.mubr.f32.mxu0 0.0
      %1340 = vmatmul.mubr.f32.gmra.mxu0 %v668
      %v1341 = vpop.f32.mrf.mxu0
      %v1342 = vadd.f32 0.0, %v1341
      %v1343 = vpop.f32.mrf.mxu0
      %1344 = vmatprep.mubr.f32.mxu0 0.0
      %1345 = vmatmul.mubr.f32.gmra.mxu0 %v671
      %v1346 = vpop.f32.mrf.mxu0
      %v1347 = vadd.f32 0.0, %v1346
      %v1348 = vpop.f32.mrf.mxu0
      %1349 = vmatprep.mubr.f32.mxu0 0.0
      %1350 = vmatmul.mubr.f32.gmra.mxu0 %v674
      %v1351 = vpop.f32.mrf.mxu0
      %v1352 = vadd.f32 0.0, %v1351
      %v1353 = vpop.f32.mrf.mxu0
      %1354 = vmatprep.mubr.f32.mxu0 0.0
      %1355 = vmatmul.mubr.f32.gmra.mxu0 %v677
      %v1356 = vpop.f32.mrf.mxu0
      %v1357 = vadd.f32 0.0, %v1356
      %v1358 = vpop.f32.mrf.mxu0
      %1359 = vmatprep.mubr.f32.mxu0 0.0
      %1360 = vmatmul.mubr.f32.gmra.mxu0 %v680
      %v1361 = vpop.f32.mrf.mxu0
      %v1362 = vadd.f32 0.0, %v1361
      %v1363 = vpop.f32.mrf.mxu0
      %1364 = vmatprep.mubr.f32.mxu0 0.0
      %1365 = vmatmul.mubr.f32.gmra.mxu0 %v683
      %v1366 = vpop.f32.mrf.mxu0
      %v1367 = vadd.f32 0.0, %v1366
      %v1368 = vpop.f32.mrf.mxu0
      %1369 = vmatprep.mubr.f32.mxu0 0.0
      %1370 = vmatmul.mubr.f32.gmra.mxu0 %v686
      %v1371 = vpop.f32.mrf.mxu0
      %v1372 = vadd.f32 0.0, %v1371
      %v1373 = vpop.f32.mrf.mxu0
      %1374 = vmatprep.mubr.f32.mxu0 0.0
      %1375 = vmatmul.mubr.f32.gmra.mxu0 %v689
      %v1376 = vpop.f32.mrf.mxu0
      %v1377 = vadd.f32 0.0, %v1376
      %v1378 = vpop.f32.mrf.mxu0
      %1379 = vmatprep.mubr.f32.mxu0 0.0
      %1380 = vmatmul.mubr.f32.gmra.mxu0 %v692
      %v1381 = vpop.f32.mrf.mxu0
      %v1382 = vadd.f32 0.0, %v1381
      %v1383 = vpop.f32.mrf.mxu0
      %1384 = vmatprep.mubr.f32.mxu0 0.0
      %1385 = vmatmul.mubr.f32.gmra.mxu0 %v695
      %v1386 = vpop.f32.mrf.mxu0
      %v1387 = vadd.f32 0.0, %v1386
      %v1388 = vpop.f32.mrf.mxu0
      %1389 = vmatprep.mubr.f32.mxu0 0.0
      %1390 = vmatmul.mubr.f32.gmra.mxu0 %v698
      %v1391 = vpop.f32.mrf.mxu0
      %v1392 = vadd.f32 0.0, %v1391
      %v1393 = vpop.f32.mrf.mxu0
      %1394 = vmatprep.mubr.f32.mxu0 0.0
      %1395 = vmatmul.mubr.f32.gmra.mxu0 %v701
      %v1396 = vpop.f32.mrf.mxu0
      %v1397 = vadd.f32 0.0, %v1396
      %v1398 = vpop.f32.mrf.mxu0
      %1399 = vmatprep.mubr.f32.mxu0 0.0
      %1400 = vmatmul.mubr.f32.gmra.mxu0 %v704
      %v1401 = vpop.f32.mrf.mxu0
      %v1402 = vadd.f32 0.0, %v1401
      %v1403 = vpop.f32.mrf.mxu0
      %1404 = vmatprep.mubr.f32.mxu0 0.0
      %1405 = vmatmul.mubr.f32.gmra.mxu0 %v707
      %v1406 = vpop.f32.mrf.mxu0
      %v1407 = vadd.f32 0.0, %v1406
      %v1408 = vpop.f32.mrf.mxu0
      %1409 = vmatprep.mubr.f32.mxu0 0.0
      %1410 = vmatmul.mubr.f32.gmra.mxu0 %v710
      %v1411 = vpop.f32.mrf.mxu0
      %v1412 = vadd.f32 0.0, %v1411
      %v1413 = vpop.f32.mrf.mxu0
      %1414 = vmatprep.mubr.f32.mxu0 0.0
      %1415 = vmatmul.mubr.f32.gmra.mxu0 %v713
      %v1416 = vpop.f32.mrf.mxu0
      %v1417 = vadd.f32 0.0, %v1416
      %v1418 = vpop.f32.mrf.mxu0
      %1419 = vdwg.mxu0
      %v1420 = vld [vmem:[%s2] sm:$0x1]
      %v1422 = vlaneseq
      %v1423 = vshrl.u32 %v1422, 7
      %v1424 = vsub.s32 0, %v1423
      %v1425 = vrot.slane %v1420, %v1424
      %v1427 = vmul.f32 %v782, %v1425
      %v1428 = vmul.f32 %v787, %v1425
      %v1429 = vmul.f32 %v792, %v1425
      %v1430 = vmul.f32 %v797, %v1425
      %v1431 = vmul.f32 %v802, %v1425
      %v1432 = vmul.f32 %v807, %v1425
      %v1433 = vmul.f32 %v812, %v1425
      %v1434 = vmul.f32 %v817, %v1425
      %v1435 = vmul.f32 %v822, %v1425
      %v1436 = vmul.f32 %v827, %v1425
      %v1437 = vmul.f32 %v832, %v1425
      %v1438 = vmul.f32 %v837, %v1425
      %v1439 = vmul.f32 %v842, %v1425
      %v1440 = vmul.f32 %v847, %v1425
      %v1441 = vmul.f32 %v852, %v1425
      %v1442 = vmul.f32 %v857, %v1425
      %v1443 = vmul.f32 %v862, %v1425
      %v1444 = vmul.f32 %v867, %v1425
      %v1445 = vmul.f32 %v872, %v1425
      %v1446 = vmul.f32 %v877, %v1425
      %v1447 = vmul.f32 %v882, %v1425
      %v1448 = vmul.f32 %v887, %v1425
      %v1449 = vmul.f32 %v892, %v1425
      %v1450 = vmul.f32 %v897, %v1425
      %v1451 = vmul.f32 %v902, %v1425
      %v1452 = vmul.f32 %v907, %v1425
      %v1453 = vmul.f32 %v912, %v1425
      %v1454 = vmul.f32 %v917, %v1425
      %v1455 = vmul.f32 %v922, %v1425
      %v1456 = vmul.f32 %v927, %v1425
      %v1457 = vmul.f32 %v932, %v1425
      %v1458 = vmul.f32 %v937, %v1425
      %v1459 = vmul.f32 %v942, %v1425
      %v1460 = vmul.f32 %v947, %v1425
      %v1461 = vmul.f32 %v952, %v1425
      %v1462 = vmul.f32 %v957, %v1425
      %v1463 = vmul.f32 %v962, %v1425
      %v1464 = vmul.f32 %v967, %v1425
      %v1465 = vmul.f32 %v972, %v1425
      %v1466 = vmul.f32 %v977, %v1425
      %v1467 = vmul.f32 %v982, %v1425
      %v1468 = vmul.f32 %v987, %v1425
      %v1469 = vmul.f32 %v992, %v1425
      %v1470 = vmul.f32 %v997, %v1425
      %v1471 = vmul.f32 %v1002, %v1425
      %v1472 = vmul.f32 %v1007, %v1425
      %v1473 = vmul.f32 %v1012, %v1425
      %v1474 = vmul.f32 %v1017, %v1425
      %v1475 = vmul.f32 %v1022, %v1425
      %v1476 = vmul.f32 %v1027, %v1425
      %v1477 = vmul.f32 %v1032, %v1425
      %v1478 = vmul.f32 %v1037, %v1425
      %v1479 = vmul.f32 %v1042, %v1425
      %v1480 = vmul.f32 %v1047, %v1425
      %v1481 = vmul.f32 %v1052, %v1425
      %v1482 = vmul.f32 %v1057, %v1425
      %v1483 = vmul.f32 %v1062, %v1425
      %v1484 = vmul.f32 %v1067, %v1425
      %v1485 = vmul.f32 %v1072, %v1425
      %v1486 = vmul.f32 %v1077, %v1425
      %v1487 = vmul.f32 %v1082, %v1425
      %v1488 = vmul.f32 %v1087, %v1425
      %v1489 = vmul.f32 %v1092, %v1425
      %v1490 = vmul.f32 %v1097, %v1425
      %v1491 = vmul.f32 %v1102, %v1425
      %v1492 = vmul.f32 %v1107, %v1425
      %v1493 = vmul.f32 %v1112, %v1425
      %v1494 = vmul.f32 %v1117, %v1425
      %v1495 = vmul.f32 %v1122, %v1425
      %v1496 = vmul.f32 %v1127, %v1425
      %v1497 = vmul.f32 %v1132, %v1425
      %v1498 = vmul.f32 %v1137, %v1425
      %v1499 = vmul.f32 %v1142, %v1425
      %v1500 = vmul.f32 %v1147, %v1425
      %v1501 = vmul.f32 %v1152, %v1425
      %v1502 = vmul.f32 %v1157, %v1425
      %v1503 = vmul.f32 %v1162, %v1425
      %v1504 = vmul.f32 %v1167, %v1425
      %v1505 = vmul.f32 %v1172, %v1425
      %v1506 = vmul.f32 %v1177, %v1425
      %v1507 = vmul.f32 %v1182, %v1425
      %v1508 = vmul.f32 %v1187, %v1425
      %v1509 = vmul.f32 %v1192, %v1425
      %v1510 = vmul.f32 %v1197, %v1425
      %v1511 = vmul.f32 %v1202, %v1425
      %v1512 = vmul.f32 %v1207, %v1425
      %v1513 = vmul.f32 %v1212, %v1425
      %v1514 = vmul.f32 %v1217, %v1425
      %v1515 = vmul.f32 %v1222, %v1425
      %v1516 = vmul.f32 %v1227, %v1425
      %v1517 = vmul.f32 %v1232, %v1425
      %v1518 = vmul.f32 %v1237, %v1425
      %v1519 = vmul.f32 %v1242, %v1425
      %v1520 = vmul.f32 %v1247, %v1425
      %v1521 = vmul.f32 %v1252, %v1425
      %v1522 = vmul.f32 %v1257, %v1425
      %v1523 = vmul.f32 %v1262, %v1425
      %v1524 = vmul.f32 %v1267, %v1425
      %v1525 = vmul.f32 %v1272, %v1425
      %v1526 = vmul.f32 %v1277, %v1425
      %v1527 = vmul.f32 %v1282, %v1425
      %v1528 = vmul.f32 %v1287, %v1425
      %v1529 = vmul.f32 %v1292, %v1425
      %v1530 = vmul.f32 %v1297, %v1425
      %v1531 = vmul.f32 %v1302, %v1425
      %v1532 = vmul.f32 %v1307, %v1425
      %v1533 = vmul.f32 %v1312, %v1425
      %v1534 = vmul.f32 %v1317, %v1425
      %v1535 = vmul.f32 %v1322, %v1425
      %v1536 = vmul.f32 %v1327, %v1425
      %v1537 = vmul.f32 %v1332, %v1425
      %v1538 = vmul.f32 %v1337, %v1425
      %v1539 = vmul.f32 %v1342, %v1425
      %v1540 = vmul.f32 %v1347, %v1425
      %v1541 = vmul.f32 %v1352, %v1425
      %v1542 = vmul.f32 %v1357, %v1425
      %v1543 = vmul.f32 %v1362, %v1425
      %v1544 = vmul.f32 %v1367, %v1425
      %v1545 = vmul.f32 %v1372, %v1425
      %v1546 = vmul.f32 %v1377, %v1425
      %v1547 = vmul.f32 %v1382, %v1425
      %v1548 = vmul.f32 %v1387, %v1425
      %v1549 = vmul.f32 %v1392, %v1425
      %v1550 = vmul.f32 %v1397, %v1425
      %v1551 = vmul.f32 %v1402, %v1425
      %v1552 = vmul.f32 %v1407, %v1425
      %v1553 = vmul.f32 %v1412, %v1425
      %v1554 = vmul.f32 %v1417, %v1425
      %v1555 = vld [vmem:[%s3] sm:$0x1]
      %v1557 = vlaneseq
      %v1558 = vshrl.u32 %v1557, 7
      %v1559 = vsub.s32 0, %v1558
      %v1560 = vrot.slane %v1555, %v1559
      %v1562 = vadd.f32 %v1427, %v1560
      %v1563 = vadd.f32 %v1428, %v1560
      %v1564 = vadd.f32 %v1429, %v1560
      %v1565 = vadd.f32 %v1430, %v1560
      %v1566 = vadd.f32 %v1431, %v1560
      %v1567 = vadd.f32 %v1432, %v1560
      %v1568 = vadd.f32 %v1433, %v1560
      %v1569 = vadd.f32 %v1434, %v1560
      %v1570 = vadd.f32 %v1435, %v1560
      %v1571 = vadd.f32 %v1436, %v1560
      %v1572 = vadd.f32 %v1437, %v1560
      %v1573 = vadd.f32 %v1438, %v1560
      %v1574 = vadd.f32 %v1439, %v1560
      %v1575 = vadd.f32 %v1440, %v1560
      %v1576 = vadd.f32 %v1441, %v1560
      %v1577 = vadd.f32 %v1442, %v1560
      %v1578 = vadd.f32 %v1443, %v1560
      %v1579 = vadd.f32 %v1444, %v1560
      %v1580 = vadd.f32 %v1445, %v1560
      %v1581 = vadd.f32 %v1446, %v1560
      %v1582 = vadd.f32 %v1447, %v1560
      %v1583 = vadd.f32 %v1448, %v1560
      %v1584 = vadd.f32 %v1449, %v1560
      %v1585 = vadd.f32 %v1450, %v1560
      %v1586 = vadd.f32 %v1451, %v1560
      %v1587 = vadd.f32 %v1452, %v1560
      %v1588 = vadd.f32 %v1453, %v1560
      %v1589 = vadd.f32 %v1454, %v1560
      %v1590 = vadd.f32 %v1455, %v1560
      %v1591 = vadd.f32 %v1456, %v1560
      %v1592 = vadd.f32 %v1457, %v1560
      %v1593 = vadd.f32 %v1458, %v1560
      %v1594 = vadd.f32 %v1459, %v1560
      %v1595 = vadd.f32 %v1460, %v1560
      %v1596 = vadd.f32 %v1461, %v1560
      %v1597 = vadd.f32 %v1462, %v1560
      %v1598 = vadd.f32 %v1463, %v1560
      %v1599 = vadd.f32 %v1464, %v1560
      %v1600 = vadd.f32 %v1465, %v1560
      %v1601 = vadd.f32 %v1466, %v1560
      %v1602 = vadd.f32 %v1467, %v1560
      %v1603 = vadd.f32 %v1468, %v1560
      %v1604 = vadd.f32 %v1469, %v1560
      %v1605 = vadd.f32 %v1470, %v1560
      %v1606 = vadd.f32 %v1471, %v1560
      %v1607 = vadd.f32 %v1472, %v1560
      %v1608 = vadd.f32 %v1473, %v1560
      %v1609 = vadd.f32 %v1474, %v1560
      %v1610 = vadd.f32 %v1475, %v1560
      %v1611 = vadd.f32 %v1476, %v1560
      %v1612 = vadd.f32 %v1477, %v1560
      %v1613 = vadd.f32 %v1478, %v1560
      %v1614 = vadd.f32 %v1479, %v1560
      %v1615 = vadd.f32 %v1480, %v1560
      %v1616 = vadd.f32 %v1481, %v1560
      %v1617 = vadd.f32 %v1482, %v1560
      %v1618 = vadd.f32 %v1483, %v1560
      %v1619 = vadd.f32 %v1484, %v1560
      %v1620 = vadd.f32 %v1485, %v1560
      %v1621 = vadd.f32 %v1486, %v1560
      %v1622 = vadd.f32 %v1487, %v1560
      %v1623 = vadd.f32 %v1488, %v1560
      %v1624 = vadd.f32 %v1489, %v1560
      %v1625 = vadd.f32 %v1490, %v1560
      %v1626 = vadd.f32 %v1491, %v1560
      %v1627 = vadd.f32 %v1492, %v1560
      %v1628 = vadd.f32 %v1493, %v1560
      %v1629 = vadd.f32 %v1494, %v1560
      %v1630 = vadd.f32 %v1495, %v1560
      %v1631 = vadd.f32 %v1496, %v1560
      %v1632 = vadd.f32 %v1497, %v1560
      %v1633 = vadd.f32 %v1498, %v1560
      %v1634 = vadd.f32 %v1499, %v1560
      %v1635 = vadd.f32 %v1500, %v1560
      %v1636 = vadd.f32 %v1501, %v1560
      %v1637 = vadd.f32 %v1502, %v1560
      %v1638 = vadd.f32 %v1503, %v1560
      %v1639 = vadd.f32 %v1504, %v1560
      %v1640 = vadd.f32 %v1505, %v1560
      %v1641 = vadd.f32 %v1506, %v1560
      %v1642 = vadd.f32 %v1507, %v1560
      %v1643 = vadd.f32 %v1508, %v1560
      %v1644 = vadd.f32 %v1509, %v1560
      %v1645 = vadd.f32 %v1510, %v1560
      %v1646 = vadd.f32 %v1511, %v1560
      %v1647 = vadd.f32 %v1512, %v1560
      %v1648 = vadd.f32 %v1513, %v1560
      %v1649 = vadd.f32 %v1514, %v1560
      %v1650 = vadd.f32 %v1515, %v1560
      %v1651 = vadd.f32 %v1516, %v1560
      %v1652 = vadd.f32 %v1517, %v1560
      %v1653 = vadd.f32 %v1518, %v1560
      %v1654 = vadd.f32 %v1519, %v1560
      %v1655 = vadd.f32 %v1520, %v1560
      %v1656 = vadd.f32 %v1521, %v1560
      %v1657 = vadd.f32 %v1522, %v1560
      %v1658 = vadd.f32 %v1523, %v1560
      %v1659 = vadd.f32 %v1524, %v1560
      %v1660 = vadd.f32 %v1525, %v1560
      %v1661 = vadd.f32 %v1526, %v1560
      %v1662 = vadd.f32 %v1527, %v1560
      %v1663 = vadd.f32 %v1528, %v1560
      %v1664 = vadd.f32 %v1529, %v1560
      %v1665 = vadd.f32 %v1530, %v1560
      %v1666 = vadd.f32 %v1531, %v1560
      %v1667 = vadd.f32 %v1532, %v1560
      %v1668 = vadd.f32 %v1533, %v1560
      %v1669 = vadd.f32 %v1534, %v1560
      %v1670 = vadd.f32 %v1535, %v1560
      %v1671 = vadd.f32 %v1536, %v1560
      %v1672 = vadd.f32 %v1537, %v1560
      %v1673 = vadd.f32 %v1538, %v1560
      %v1674 = vadd.f32 %v1539, %v1560
      %v1675 = vadd.f32 %v1540, %v1560
      %v1676 = vadd.f32 %v1541, %v1560
      %v1677 = vadd.f32 %v1542, %v1560
      %v1678 = vadd.f32 %v1543, %v1560
      %v1679 = vadd.f32 %v1544, %v1560
      %v1680 = vadd.f32 %v1545, %v1560
      %v1681 = vadd.f32 %v1546, %v1560
      %v1682 = vadd.f32 %v1547, %v1560
      %v1683 = vadd.f32 %v1548, %v1560
      %v1684 = vadd.f32 %v1549, %v1560
      %v1685 = vadd.f32 %v1550, %v1560
      %v1686 = vadd.f32 %v1551, %v1560
      %v1687 = vadd.f32 %v1552, %v1560
      %v1688 = vadd.f32 %v1553, %v1560
      %v1689 = vadd.f32 %v1554, %v1560
      %v1690 = vmax.f32 %v1562, 0.0
      %v1691 = vmax.f32 %v1563, 0.0
      %v1692 = vmax.f32 %v1564, 0.0
      %v1693 = vmax.f32 %v1565, 0.0
      %v1694 = vmax.f32 %v1566, 0.0
      %v1695 = vmax.f32 %v1567, 0.0
      %v1696 = vmax.f32 %v1568, 0.0
      %v1697 = vmax.f32 %v1569, 0.0
      %v1698 = vmax.f32 %v1570, 0.0
      %v1699 = vmax.f32 %v1571, 0.0
      %v1700 = vmax.f32 %v1572, 0.0
      %v1701 = vmax.f32 %v1573, 0.0
      %v1702 = vmax.f32 %v1574, 0.0
      %v1703 = vmax.f32 %v1575, 0.0
      %v1704 = vmax.f32 %v1576, 0.0
      %v1705 = vmax.f32 %v1577, 0.0
      %v1706 = vmax.f32 %v1578, 0.0
      %v1707 = vmax.f32 %v1579, 0.0
      %v1708 = vmax.f32 %v1580, 0.0
      %v1709 = vmax.f32 %v1581, 0.0
      %v1710 = vmax.f32 %v1582, 0.0
      %v1711 = vmax.f32 %v1583, 0.0
      %v1712 = vmax.f32 %v1584, 0.0
      %v1713 = vmax.f32 %v1585, 0.0
      %v1714 = vmax.f32 %v1586, 0.0
      %v1715 = vmax.f32 %v1587, 0.0
      %v1716 = vmax.f32 %v1588, 0.0
      %v1717 = vmax.f32 %v1589, 0.0
      %v1718 = vmax.f32 %v1590, 0.0
      %v1719 = vmax.f32 %v1591, 0.0
      %v1720 = vmax.f32 %v1592, 0.0
      %v1721 = vmax.f32 %v1593, 0.0
      %v1722 = vmax.f32 %v1594, 0.0
      %v1723 = vmax.f32 %v1595, 0.0
      %v1724 = vmax.f32 %v1596, 0.0
      %v1725 = vmax.f32 %v1597, 0.0
      %v1726 = vmax.f32 %v1598, 0.0
      %v1727 = vmax.f32 %v1599, 0.0
      %v1728 = vmax.f32 %v1600, 0.0
      %v1729 = vmax.f32 %v1601, 0.0
      %v1730 = vmax.f32 %v1602, 0.0
      %v1731 = vmax.f32 %v1603, 0.0
      %v1732 = vmax.f32 %v1604, 0.0
      %v1733 = vmax.f32 %v1605, 0.0
      %v1734 = vmax.f32 %v1606, 0.0
      %v1735 = vmax.f32 %v1607, 0.0
      %v1736 = vmax.f32 %v1608, 0.0
      %v1737 = vmax.f32 %v1609, 0.0
      %v1738 = vmax.f32 %v1610, 0.0
      %v1739 = vmax.f32 %v1611, 0.0
      %v1740 = vmax.f32 %v1612, 0.0
      %v1741 = vmax.f32 %v1613, 0.0
      %v1742 = vmax.f32 %v1614, 0.0
      %v1743 = vmax.f32 %v1615, 0.0
      %v1744 = vmax.f32 %v1616, 0.0
      %v1745 = vmax.f32 %v1617, 0.0
      %v1746 = vmax.f32 %v1618, 0.0
      %v1747 = vmax.f32 %v1619, 0.0
      %v1748 = vmax.f32 %v1620, 0.0
      %v1749 = vmax.f32 %v1621, 0.0
      %v1750 = vmax.f32 %v1622, 0.0
      %v1751 = vmax.f32 %v1623, 0.0
      %v1752 = vmax.f32 %v1624, 0.0
      %v1753 = vmax.f32 %v1625, 0.0
      %v1754 = vmax.f32 %v1626, 0.0
      %v1755 = vmax.f32 %v1627, 0.0
      %v1756 = vmax.f32 %v1628, 0.0
      %v1757 = vmax.f32 %v1629, 0.0
      %v1758 = vmax.f32 %v1630, 0.0
      %v1759 = vmax.f32 %v1631, 0.0
      %v1760 = vmax.f32 %v1632, 0.0
      %v1761 = vmax.f32 %v1633, 0.0
      %v1762 = vmax.f32 %v1634, 0.0
      %v1763 = vmax.f32 %v1635, 0.0
      %v1764 = vmax.f32 %v1636, 0.0
      %v1765 = vmax.f32 %v1637, 0.0
      %v1766 = vmax.f32 %v1638, 0.0
      %v1767 = vmax.f32 %v1639, 0.0
      %v1768 = vmax.f32 %v1640, 0.0
      %v1769 = vmax.f32 %v1641, 0.0
      %v1770 = vmax.f32 %v1642, 0.0
      %v1771 = vmax.f32 %v1643, 0.0
      %v1772 = vmax.f32 %v1644, 0.0
      %v1773 = vmax.f32 %v1645, 0.0
      %v1774 = vmax.f32 %v1646, 0.0
      %v1775 = vmax.f32 %v1647, 0.0
      %v1776 = vmax.f32 %v1648, 0.0
      %v1777 = vmax.f32 %v1649, 0.0
      %v1778 = vmax.f32 %v1650, 0.0
      %v1779 = vmax.f32 %v1651, 0.0
      %v1780 = vmax.f32 %v1652, 0.0
      %v1781 = vmax.f32 %v1653, 0.0
      %v1782 = vmax.f32 %v1654, 0.0
      %v1783 = vmax.f32 %v1655, 0.0
      %v1784 = vmax.f32 %v1656, 0.0
      %v1785 = vmax.f32 %v1657, 0.0
      %v1786 = vmax.f32 %v1658, 0.0
      %v1787 = vmax.f32 %v1659, 0.0
      %v1788 = vmax.f32 %v1660, 0.0
      %v1789 = vmax.f32 %v1661, 0.0
      %v1790 = vmax.f32 %v1662, 0.0
      %v1791 = vmax.f32 %v1663, 0.0
      %v1792 = vmax.f32 %v1664, 0.0
      %v1793 = vmax.f32 %v1665, 0.0
      %v1794 = vmax.f32 %v1666, 0.0
      %v1795 = vmax.f32 %v1667, 0.0
      %v1796 = vmax.f32 %v1668, 0.0
      %v1797 = vmax.f32 %v1669, 0.0
      %v1798 = vmax.f32 %v1670, 0.0
      %v1799 = vmax.f32 %v1671, 0.0
      %v1800 = vmax.f32 %v1672, 0.0
      %v1801 = vmax.f32 %v1673, 0.0
      %v1802 = vmax.f32 %v1674, 0.0
      %v1803 = vmax.f32 %v1675, 0.0
      %v1804 = vmax.f32 %v1676, 0.0
      %v1805 = vmax.f32 %v1677, 0.0
      %v1806 = vmax.f32 %v1678, 0.0
      %v1807 = vmax.f32 %v1679, 0.0
      %v1808 = vmax.f32 %v1680, 0.0
      %v1809 = vmax.f32 %v1681, 0.0
      %v1810 = vmax.f32 %v1682, 0.0
      %v1811 = vmax.f32 %v1683, 0.0
      %v1812 = vmax.f32 %v1684, 0.0
      %v1813 = vmax.f32 %v1685, 0.0
      %v1814 = vmax.f32 %v1686, 0.0
      %v1815 = vmax.f32 %v1687, 0.0
      %v1816 = vmax.f32 %v1688, 0.0
      %v1817 = vmax.f32 %v1689, 0.0
      %1818 = vst [vmem:[%s199] sm:$0xff] %v1690
      %1819 = vst [vmem:[%s199 + $0x8] sm:$0xff] %v1691
      %1820 = vst [vmem:[%s199 + $0x10] sm:$0xff] %v1692
      %1821 = vst [vmem:[%s199 + $0x18] sm:$0xff] %v1693
      %1822 = vst [vmem:[%s199 + $0x20] sm:$0xff] %v1694
      %1823 = vst [vmem:[%s199 + $0x28] sm:$0xff] %v1695
      %1824 = vst [vmem:[%s199 + $0x30] sm:$0xff] %v1696
      %1825 = vst [vmem:[%s199 + $0x38] sm:$0xff] %v1697
      %1826 = vst [vmem:[%s199 + $0x40] sm:$0xff] %v1698
      %1827 = vst [vmem:[%s199 + $0x48] sm:$0xff] %v1699
      %1828 = vst [vmem:[%s199 + $0x50] sm:$0xff] %v1700
      %1829 = vst [vmem:[%s199 + $0x58] sm:$0xff] %v1701
      %1830 = vst [vmem:[%s199 + $0x60] sm:$0xff] %v1702
      %1831 = vst [vmem:[%s199 + $0x68] sm:$0xff] %v1703
      %1832 = vst [vmem:[%s199 + $0x70] sm:$0xff] %v1704
      %1833 = vst [vmem:[%s199 + $0x78] sm:$0xff] %v1705
      %1834 = vst [vmem:[%s199 + $0x80] sm:$0xff] %v1706
      %1835 = vst [vmem:[%s199 + $0x88] sm:$0xff] %v1707
      %1836 = vst [vmem:[%s199 + $0x90] sm:$0xff] %v1708
      %1837 = vst [vmem:[%s199 + $0x98] sm:$0xff] %v1709
      %1838 = vst [vmem:[%s199 + $0xa0] sm:$0xff] %v1710
      %1839 = vst [vmem:[%s199 + $0xa8] sm:$0xff] %v1711
      %1840 = vst [vmem:[%s199 + $0xb0] sm:$0xff] %v1712
      %1841 = vst [vmem:[%s199 + $0xb8] sm:$0xff] %v1713
      %1842 = vst [vmem:[%s199 + $0xc0] sm:$0xff] %v1714
      %1843 = vst [vmem:[%s199 + $0xc8] sm:$0xff] %v1715
      %1844 = vst [vmem:[%s199 + $0xd0] sm:$0xff] %v1716
      %1845 = vst [vmem:[%s199 + $0xd8] sm:$0xff] %v1717
      %1846 = vst [vmem:[%s199 + $0xe0] sm:$0xff] %v1718
      %1847 = vst [vmem:[%s199 + $0xe8] sm:$0xff] %v1719
      %1848 = vst [vmem:[%s199 + $0xf0] sm:$0xff] %v1720
      %1849 = vst [vmem:[%s199 + $0xf8] sm:$0xff] %v1721
      %1850 = vst [vmem:[%s199 + $0x100] sm:$0xff] %v1722
      %1851 = vst [vmem:[%s199 + $0x108] sm:$0xff] %v1723
      %1852 = vst [vmem:[%s199 + $0x110] sm:$0xff] %v1724
      %1853 = vst [vmem:[%s199 + $0x118] sm:$0xff] %v1725
      %1854 = vst [vmem:[%s199 + $0x120] sm:$0xff] %v1726
      %1855 = vst [vmem:[%s199 + $0x128] sm:$0xff] %v1727
      %1856 = vst [vmem:[%s199 + $0x130] sm:$0xff] %v1728
      %1857 = vst [vmem:[%s199 + $0x138] sm:$0xff] %v1729
      %1858 = vst [vmem:[%s199 + $0x140] sm:$0xff] %v1730
      %1859 = vst [vmem:[%s199 + $0x148] sm:$0xff] %v1731
      %1860 = vst [vmem:[%s199 + $0x150] sm:$0xff] %v1732
      %1861 = vst [vmem:[%s199 + $0x158] sm:$0xff] %v1733
      %1862 = vst [vmem:[%s199 + $0x160] sm:$0xff] %v1734
      %1863 = vst [vmem:[%s199 + $0x168] sm:$0xff] %v1735
      %1864 = vst [vmem:[%s199 + $0x170] sm:$0xff] %v1736
      %1865 = vst [vmem:[%s199 + $0x178] sm:$0xff] %v1737
      %1866 = vst [vmem:[%s199 + $0x180] sm:$0xff] %v1738
      %1867 = vst [vmem:[%s199 + $0x188] sm:$0xff] %v1739
      %1868 = vst [vmem:[%s199 + $0x190] sm:$0xff] %v1740
      %1869 = vst [vmem:[%s199 + $0x198] sm:$0xff] %v1741
      %1870 = vst [vmem:[%s199 + $0x1a0] sm:$0xff] %v1742
      %1871 = vst [vmem:[%s199 + $0x1a8] sm:$0xff] %v1743
      %1872 = vst [vmem:[%s199 + $0x1b0] sm:$0xff] %v1744
      %1873 = vst [vmem:[%s199 + $0x1b8] sm:$0xff] %v1745
      %1874 = vst [vmem:[%s199 + $0x1c0] sm:$0xff] %v1746
      %1875 = vst [vmem:[%s199 + $0x1c8] sm:$0xff] %v1747
      %1876 = vst [vmem:[%s199 + $0x1d0] sm:$0xff] %v1748
      %1877 = vst [vmem:[%s199 + $0x1d8] sm:$0xff] %v1749
      %1878 = vst [vmem:[%s199 + $0x1e0] sm:$0xff] %v1750
      %1879 = vst [vmem:[%s199 + $0x1e8] sm:$0xff] %v1751
      %1880 = vst [vmem:[%s199 + $0x1f0] sm:$0xff] %v1752
      %1881 = vst [vmem:[%s199 + $0x1f8] sm:$0xff] %v1753
      %1882 = vst [vmem:[%s199 + $0x200] sm:$0xff] %v1754
      %1883 = vst [vmem:[%s199 + $0x208] sm:$0xff] %v1755
      %1884 = vst [vmem:[%s199 + $0x210] sm:$0xff] %v1756
      %1885 = vst [vmem:[%s199 + $0x218] sm:$0xff] %v1757
      %1886 = vst [vmem:[%s199 + $0x220] sm:$0xff] %v1758
      %1887 = vst [vmem:[%s199 + $0x228] sm:$0xff] %v1759
      %1888 = vst [vmem:[%s199 + $0x230] sm:$0xff] %v1760
      %1889 = vst [vmem:[%s199 + $0x238] sm:$0xff] %v1761
      %1890 = vst [vmem:[%s199 + $0x240] sm:$0xff] %v1762
      %1891 = vst [vmem:[%s199 + $0x248] sm:$0xff] %v1763
      %1892 = vst [vmem:[%s199 + $0x250] sm:$0xff] %v1764
      %1893 = vst [vmem:[%s199 + $0x258] sm:$0xff] %v1765
      %1894 = vst [vmem:[%s199 + $0x260] sm:$0xff] %v1766
      %1895 = vst [vmem:[%s199 + $0x268] sm:$0xff] %v1767
      %1896 = vst [vmem:[%s199 + $0x270] sm:$0xff] %v1768
      %1897 = vst [vmem:[%s199 + $0x278] sm:$0xff] %v1769
      %1898 = vst [vmem:[%s199 + $0x280] sm:$0xff] %v1770
      %1899 = vst [vmem:[%s199 + $0x288] sm:$0xff] %v1771
      %1900 = vst [vmem:[%s199 + $0x290] sm:$0xff] %v1772
      %1901 = vst [vmem:[%s199 + $0x298] sm:$0xff] %v1773
      %1902 = vst [vmem:[%s199 + $0x2a0] sm:$0xff] %v1774
      %1903 = vst [vmem:[%s199 + $0x2a8] sm:$0xff] %v1775
      %1904 = vst [vmem:[%s199 + $0x2b0] sm:$0xff] %v1776
      %1905 = vst [vmem:[%s199 + $0x2b8] sm:$0xff] %v1777
      %1906 = vst [vmem:[%s199 + $0x2c0] sm:$0xff] %v1778
      %1907 = vst [vmem:[%s199 + $0x2c8] sm:$0xff] %v1779
      %1908 = vst [vmem:[%s199 + $0x2d0] sm:$0xff] %v1780
      %1909 = vst [vmem:[%s199 + $0x2d8] sm:$0xff] %v1781
      %1910 = vst [vmem:[%s199 + $0x2e0] sm:$0xff] %v1782
      %1911 = vst [vmem:[%s199 + $0x2e8] sm:$0xff] %v1783
      %1912 = vst [vmem:[%s199 + $0x2f0] sm:$0xff] %v1784
      %1913 = vst [vmem:[%s199 + $0x2f8] sm:$0xff] %v1785
      %1914 = vst [vmem:[%s199 + $0x300] sm:$0xff] %v1786
      %1915 = vst [vmem:[%s199 + $0x308] sm:$0xff] %v1787
      %1916 = vst [vmem:[%s199 + $0x310] sm:$0xff] %v1788
      %1917 = vst [vmem:[%s199 + $0x318] sm:$0xff] %v1789
      %1918 = vst [vmem:[%s199 + $0x320] sm:$0xff] %v1790
      %1919 = vst [vmem:[%s199 + $0x328] sm:$0xff] %v1791
      %1920 = vst [vmem:[%s199 + $0x330] sm:$0xff] %v1792
      %1921 = vst [vmem:[%s199 + $0x338] sm:$0xff] %v1793
      %1922 = vst [vmem:[%s199 + $0x340] sm:$0xff] %v1794
      %1923 = vst [vmem:[%s199 + $0x348] sm:$0xff] %v1795
      %1924 = vst [vmem:[%s199 + $0x350] sm:$0xff] %v1796
      %1925 = vst [vmem:[%s199 + $0x358] sm:$0xff] %v1797
      %1926 = vst [vmem:[%s199 + $0x360] sm:$0xff] %v1798
      %1927 = vst [vmem:[%s199 + $0x368] sm:$0xff] %v1799
      %1928 = vst [vmem:[%s199 + $0x370] sm:$0xff] %v1800
      %1929 = vst [vmem:[%s199 + $0x378] sm:$0xff] %v1801
      %1930 = vst [vmem:[%s199 + $0x380] sm:$0xff] %v1802
      %1931 = vst [vmem:[%s199 + $0x388] sm:$0xff] %v1803
      %1932 = vst [vmem:[%s199 + $0x390] sm:$0xff] %v1804
      %1933 = vst [vmem:[%s199 + $0x398] sm:$0xff] %v1805
      %1934 = vst [vmem:[%s199 + $0x3a0] sm:$0xff] %v1806
      %1935 = vst [vmem:[%s199 + $0x3a8] sm:$0xff] %v1807
      %1936 = vst [vmem:[%s199 + $0x3b0] sm:$0xff] %v1808
      %1937 = vst [vmem:[%s199 + $0x3b8] sm:$0xff] %v1809
      %1938 = vst [vmem:[%s199 + $0x3c0] sm:$0xff] %v1810
      %1939 = vst [vmem:[%s199 + $0x3c8] sm:$0xff] %v1811
      %1940 = vst [vmem:[%s199 + $0x3d0] sm:$0xff] %v1812
      %1941 = vst [vmem:[%s199 + $0x3d8] sm:$0xff] %v1813
      %1942 = vst [vmem:[%s199 + $0x3e0] sm:$0xff] %v1814
      %1943 = vst [vmem:[%s199 + $0x3e8] sm:$0xff] %v1815
      %1944 = vst [vmem:[%s199 + $0x3f0] sm:$0xff] %v1816
      %1945 = vst [vmem:[%s199 + $0x3f8] sm:$0xff] %v1817
      %s1946 = smul.u32 128, %s15
      %p1947 = scmp.lt.s32.totalorder %s1946, 255
      %s1948 = scalar_select %p1947, %s1946, 255
      %s1949 = smul.addr %s1948, 8
      %s1950 = scalar_lea.vmem %s4, %s1949
      // Predicated region
      $region37: #{decoder_module.3} parent=35 // pred_check
        %p1951 = pneg %p122
      $region38: #{decoder_module.3} parent=35 // pred_check_branch
        %1953 = sbr.rel (%p1951) target = $region40
      $region39: #{decoder_module.3} parent=35 // pred_region
        %s1954 = smul.u32 128, %s15
      $region40: #{decoder_module.3} parent=35 // pred_fallthru
        _
    $region36: #{decoder_module.3} parent=5 // pred_fallthru
      _
    %p1955 = scmp.le.s32.totalorder 2, %s10
    // Predicated region
    $region41: #{decoder_module.3} parent=5 // pred_check
      %p1956 = pneg %p1955
    $region42: #{decoder_module.3} parent=5 // pred_check_branch
      %1958 = sbr.rel (%p1956) target = $region44
    $region43: #{decoder_module.3} parent=5 // pred_region
      %s1959 = ssub.s32 %s10, 2
      // Predicated region
      $region45: #{decoder_module.3} parent=43 // pred_check
        %p1960 = pneg %p128
      $region46: #{decoder_module.3} parent=43 // pred_check_branch
        %1962 = sbr.rel (%p1960) target = $region48
      $region47: #{decoder_module.3} parent=43 // pred_region
        %s1963 = smul.u32 128, %s16
        %p1964 = scmp.lt.s32.totalorder %s1963, 255
        %s1965 = scalar_select %p1964, %s1963, 255
        %s1966 = smul.addr %s1965, 8
        %s1967 = scalar_lea.vmem %s4, %s1966
      $region48: #{decoder_module.3} parent=43 // pred_fallthru
        _
    $region44: #{decoder_module.3} parent=5 // pred_fallthru
      _
  $region6: #{decoder_module.3} parent=0 // loop_footer
    %s14 = sadd.s32 1, %s10
  $region7: #{decoder_module.3} parent=0 // loop_footer_branch
    %9 = sbr.rel target = $region3
  $region8: #{decoder_module.3} parent=0 // loop_exit
    _

</llo_original>
